<compile_context>
chip_gen: v7x
topology: tpu7x:2x2x1
jax: 0.10.0
libtpu: 0.0.40
codegen_flags: <defaults>
</compile_context>

<pallas_src>
import jax
import jax.numpy as jnp
from jax.experimental import pallas as pl
from jax.experimental.pallas import tpu as pltpu


def _round_up(x, m):
    return ((x + m - 1) // m) * m


def _vmem_limit_bytes(tn, tv, H, Ve, emit_logits):
    """Scoped-VMEM request derived from actual buffer sizes (+ headroom)."""
    b = 0
    b += 2 * tn * 8 * 4            # side (f32, double-buffered)
    b += 2 * Ve * H * 2            # embedding table (bf16)
    b += 2 * H * H * 2             # W1 (bf16)
    b += 2 * H * 4                 # b1 (f32)
    b += 2 * H * tv * 2            # W2 vocab tile (bf16)
    b += 2 * tv * 4                # b2 vocab tile (f32)
    b += 2 * 128 * 4               # stats output tile
    if emit_logits:
        b += 2 * tn * tv * 2       # logits output tile (bf16)
    b += tn * H * 2 + tn * 128 * 4  # scratch (hidden cache + state, lane-padded)
    # headroom: f32 logits tile, iota/exp temporaries, compiler-internal scratch
    b += 6 * tn * tv * 4 + (8 << 20)
    return int(max(32 << 20, min(b, 48 << 20)))   # <= 48 MiB: v7x-safe


# -----------------------------------------------------------------------------
# Fused kernel: one-hot embedding gather -> @W1 -> GELU (cached per row tile)
# -> @W2 vocab tile -> (optional) bf16 logits tile, plus online masked
# cross-entropy / accuracy / count statistics.
# -----------------------------------------------------------------------------
def _make_fused_kernel(emit_logits):
    def kernel(side_ref, emb_ref, w1_ref, b1_ref, w2_ref, b2_ref, *refs):
        if emit_logits:
            logits_ref, stats_ref, h_ref, st_ref = refs
        else:
            stats_ref, h_ref, st_ref = refs
            logits_ref = None

        j = pl.program_id(1)
        nj = pl.num_programs(1)
        tn = h_ref.shape[0]
        tv = w2_ref.shape[1]

        side = side_ref[...]                       # (tn, 8) f32, packed per-token values
        tgt_i = side[:, 0:1].astype(jnp.int32)     # target id (exact for V < 2^24)

        # --- once per row tile: embedding gather + first matmul + GELU + init ---
        @pl.when(j == 0)
        def _():
            src_i = side[:, 4:5].astype(jnp.int32)
            imask = side[:, 3:4]                   # non-pad mask
            ve = emb_ref.shape[0]
            vlane = jax.lax.broadcasted_iota(jnp.int32, (tn, ve), 1)
            onehot = (vlane == src_i).astype(emb_ref.dtype)      # exact 0/1 bf16
            x = jnp.dot(onehot, emb_ref[...],
                        preferred_element_type=jnp.float32)       # exact emb rows
            x = (x * imask).astype(w1_ref.dtype)                  # bf16 activations
            h = jnp.dot(x, w1_ref[...], preferred_element_type=jnp.float32)
            h = jax.nn.gelu(h + b1_ref[...])
            h_ref[...] = h.astype(h_ref.dtype)     # cache hidden (bf16) for all vocab tiles
            cidx = jax.lax.broadcasted_iota(jnp.int32, st_ref.shape, 1)
            # state columns: 0 = running max, 1 = sum-exp, 2 = target logit, 3 = argmax
            st_ref[...] = jnp.where(cidx == 0, -jnp.inf, 0.0).astype(jnp.float32)

        # --- second matmul: one (tn, tv) logits tile ---
        logits = (jnp.dot(h_ref[...], w2_ref[...],
                          preferred_element_type=jnp.float32) + b2_ref[...])
        if emit_logits:
            logits_ref[...] = logits.astype(logits_ref.dtype)    # bf16 HBM write

        # --- online logsumexp / target-logit / argmax across vocab tiles ---
        lane = jax.lax.broadcasted_iota(jnp.int32, (tn, tv), 1) + j * tv
        tile_max = jnp.max(logits, axis=-1, keepdims=True)                 # (tn, 1)
        big = jnp.int32(2 ** 30)
        tile_arg = jnp.min(jnp.where(logits == tile_max, lane, big),
                           axis=-1, keepdims=True).astype(jnp.float32)     # first-index argmax
        st_ref[:, 2:3] += jnp.sum(jnp.where(lane == tgt_i, logits, 0.0),
                                  axis=-1, keepdims=True)

        m_prev = st_ref[:, 0:1]
        m_new = jnp.maximum(m_prev, tile_max)
        st_ref[:, 1:2] = (st_ref[:, 1:2] * jnp.exp(m_prev - m_new)
                          + jnp.sum(jnp.exp(logits - m_new), axis=-1, keepdims=True))
        # strictly-greater keeps the first occurrence (matches argmax tie-breaking)
        st_ref[:, 3:4] = jnp.where(tile_max > m_prev, tile_arg, st_ref[:, 3:4])
        st_ref[:, 0:1] = m_new

        # --- finalize this row tile: single lane-dense stats write ---
        @pl.when(j == nj - 1)
        def _():
            mask = side[:, 1:2]                    # diffusion mask
            w_rw = side[:, 2:3]                    # OA-ARDM reweight D/t per sequence
            imask = side[:, 3:4]                   # non-pad mask
            ce = st_ref[:, 0:1] + jnp.log(st_ref[:, 1:2]) - st_ref[:, 2:3]  # (tn, 1)
            correct = (st_ref[:, 3:4] == side[:, 0:1]).astype(jnp.float32) * mask
            lidx = jax.lax.broadcasted_iota(jnp.int32, (tn, 128), 1)
            per_row = (jnp.where(lidx == 0, w_rw * mask * ce, 0.0)
                       + jnp.where(lidx == 1, mask * ce, 0.0)
                       + jnp.where(lidx == 2, correct, 0.0)
                       + jnp.where(lidx == 3, mask, 0.0)
                       + jnp.where(lidx == 4, imask, 0.0))                  # (tn, 128)
            stats_ref[...] = jnp.sum(per_row, axis=0,
                                     keepdims=True).reshape(stats_ref.shape)

    return kernel


def fused_forward(side, emb, w1, b1, w2, b2, *, tn, tv, emit_logits):
    Np = side.shape[0]
    Ve, H = emb.shape
    Vp = w2.shape[1]
    assert Np % tn == 0 and Vp % tv == 0
    num_i, num_j = Np // tn, Vp // tv

    out_shape = [jax.ShapeDtypeStruct((num_i, 1, 128), jnp.float32)]   # per-row-tile stats
    out_specs = [pl.BlockSpec((1, 1, 128), lambda i, j: (i, 0, 0))]
    if emit_logits:
        out_shape.insert(0, jax.ShapeDtypeStruct((Np, Vp), jnp.bfloat16))
        out_specs.insert(0, pl.BlockSpec((tn, tv), lambda i, j: (i, j)))

    # TODO(synk): on v7x, single-buffer the constant-index emb/W1/b1 blocks
    # (pipeline_mode=pl.Buffered(1)) and triple-buffer the streamed W2/logits
    # (pl.Buffered(3)) if DMA is still exposed; kept at defaults for portability.
    grid_spec = pltpu.PrefetchScalarGridSpec(
        num_scalar_prefetch=0,
        grid=(num_i, num_j),
        in_specs=[
            pl.BlockSpec((tn, 8), lambda i, j: (i, 0)),     # packed per-token side data
            pl.BlockSpec((Ve, H), lambda i, j: (0, 0)),     # embedding table (bf16, resident)
            pl.BlockSpec((H, H), lambda i, j: (0, 0)),      # W1 (bf16, resident)
            pl.BlockSpec((1, H), lambda i, j: (0, 0)),      # b1 (f32)
            pl.BlockSpec((H, tv), lambda i, j: (0, j)),     # W2 vocab tile (bf16, streamed)
            pl.BlockSpec((1, tv), lambda i, j: (0, j)),     # b2 vocab tile (f32)
        ],
        out_specs=tuple(out_specs),
        scratch_shapes=[
            pltpu.VMEM((tn, H), jnp.bfloat16),   # cached hidden activations
            pltpu.VMEM((tn, 4), jnp.float32),    # [max, sum-exp, target-logit, argmax]
        ],
    )
    outs = pl.pallas_call(
        _make_fused_kernel(emit_logits),
        out_shape=tuple(out_shape),
        grid_spec=grid_spec,
        compiler_params=pltpu.CompilerParams(
            # TODO(synk): on v7x use pltpu.CORE_PARALLEL on the row axis so both
            # TensorCores share the row tiles; "parallel" kept for portability.
            dimension_semantics=("parallel", "arbitrary"),
            vmem_limit_bytes=_vmem_limit_bytes(tn, tv, H, Ve, emit_logits),
        ),
    )(side, emb, w1, b1, w2, b2)
    if not isinstance(outs, (tuple, list)):
        outs = (outs,)
    if emit_logits:
        logits_pad, stats = outs
    else:
        stats = outs[0]
        logits_pad = None
    return logits_pad, stats


# -----------------------------------------------------------------------------
# OrderAgnosticDiffusionModel.forward
# -----------------------------------------------------------------------------
def oadm_forward(params, src, tgt, mask, timestep, padding_id=0,
                 aux_loss_weight=1.0, tn=256, tv=512, return_logits=True):
    B, L = src.shape
    V_emb, H = params["emb"].shape
    V = params["w2"].shape[1]
    N = B * L

    imask_f = (src != padding_id).astype(jnp.float32)

    # OA-ARDM reweight: nonpad_tokens[b] / timestep[b] per sequence (zero-guarded).
    nonpad = imask_f.sum(axis=1)
    rwt = nonpad / jnp.maximum(timestep.astype(jnp.float32), 1.0)

    # Pack per-token side values (tgt, mask, reweight, non-pad mask, src id) into
    # one lane-dense (N, 8) f32 array -> a single DMA per row tile.
    side = jnp.stack(
        [tgt.reshape(N).astype(jnp.float32),
         mask.reshape(N).astype(jnp.float32),
         jnp.broadcast_to(rwt[:, None], (B, L)).reshape(N),
         imask_f.reshape(N),
         src.reshape(N).astype(jnp.float32)], axis=1)          # (N, 5)
    side = jnp.pad(side, ((0, 0), (0, 8 - side.shape[1])))     # (N, 8)

    # Tile sizing (perf review): tn is the W2-reuse knob; tv clamped to the
    # 128-aligned vocab so small vocabs don't over-pad.
    tv = min(tv, _round_up(V, 128))
    num_i = pl.cdiv(N, tn)
    Np = num_i * tn
    Vp = _round_up(V, tv)
    Ve = _round_up(V_emb, 8)

    if Np != N:
        side = jnp.pad(side, ((0, Np - N), (0, 0)))   # padded rows carry mask == 0

    emb = params["emb"].astype(jnp.bfloat16)
    if Ve != V_emb:
        emb = jnp.pad(emb, ((0, Ve - V_emb), (0, 0)))
    w1 = params["w1"].astype(jnp.bfloat16)
    b1 = params["b1"].astype(jnp.float32)
    w2 = params["w2"].astype(jnp.bfloat16)
    b2 = params["b2"].astype(jnp.float32)
    if Vp != V:
        # Padded vocab columns get a -1e30 bias so logsumexp/target/argmax ignore them.
        w2 = jnp.pad(w2, ((0, 0), (0, Vp - V)))
        b2 = jnp.pad(b2, ((0, 0), (0, Vp - V)), constant_values=-1e30)

    logits_pad, stats_part = fused_forward(
        side, emb, w1, b1, w2, b2, tn=tn, tv=tv, emit_logits=return_logits)

    stats = stats_part[:, 0, :].sum(axis=0)               # (128,) partial-sum reduce
    ce_sum, nll_sum, corr_sum = stats[0], stats[1], stats[2]
    n_tokens, n_processed = stats[3], stats[4]

    denom = jnp.maximum(n_tokens, 1.0)
    ce_loss = ce_sum / denom
    # TODO(synk): original PyTorch casts nll_loss to float64; JAX stays float32.
    nll_loss = nll_sum / denom
    accu = corr_sum / denom

    aux_loss = 0.0  # synthetic inner module (dict output) exposes no aux_loss
    logits = None
    if return_logits:
        logits = logits_pad[:N, :V].reshape(B, L, V)        # bf16; upcast if needed

    return {
        "logits": logits,
        "loss": ce_loss + aux_loss_weight * aux_loss,
        "other_metrics": {"nll_loss": nll_loss, "accuracy": accu},
        "n_tokens": n_tokens,
        "n_seqs": jnp.array(B, jnp.int32),
        "n_processed": n_processed,
    }


# -----------------------------------------------------------------------------
# Pure-JAX reference (mirrors the bf16 matmul-operand casts) for correctness.
# -----------------------------------------------------------------------------
def oadm_reference(params, src, tgt, mask, timestep, padding_id=0):
    B, L = src.shape
    H = params["emb"].shape[1]
    V = params["w2"].shape[1]
    input_mask = (src != padding_id)
    imask = input_mask.astype(jnp.float32)
    x = jnp.take(params["emb"].astype(jnp.bfloat16), src, axis=0).astype(jnp.float32)
    x = (x * imask[..., None]).reshape(B * L, H).astype(jnp.bfloat16)
    h = jnp.dot(x, params["w1"].astype(jnp.bfloat16),
                preferred_element_type=jnp.float32) + params["b1"]
    h = jax.nn.gelu(h)
    logits = (jnp.dot(h.astype(jnp.bfloat16), params["w2"].astype(jnp.bfloat16),
                      preferred_element_type=jnp.float32) + params["b2"])
    logits = logits.reshape(B, L, V)
    logp = jax.nn.log_softmax(logits, axis=-1)
    ce = -jnp.take_along_axis(logp, tgt[..., None], axis=-1)[..., 0]
    nonpad = imask.sum(axis=1)
    w = (nonpad / jnp.maximum(timestep.astype(jnp.float32), 1.0))[:, None]
    m = mask.astype(jnp.float32)
    n_tokens = m.sum()
    ce_loss = (w * m * ce).sum() / n_tokens
    nll_loss = (m * ce).sum() / n_tokens
    pred = jnp.argmax(logits, axis=-1)
    accu = ((pred == tgt).astype(jnp.float32) * m).sum() / n_tokens
    return logits, ce_loss, nll_loss, accu, n_tokens, imask.sum()


if __name__ == "__main__":
    B, L, H, V = 3, 50, 128, 256     # N = 150 -> padded to 256 rows (1 row tile at tn=256)
    padding_id = 0

    key = jax.random.PRNGKey(0)
    k_emb, k_w1, k_b1, k_w2, k_b2, k_src, k_tgt = jax.random.split(key, 7)

    params = {
        "emb": 0.5 * jax.random.normal(k_emb, (V, H), jnp.float32),
        "w1": jax.random.normal(k_w1, (H, H), jnp.float32) / jnp.sqrt(H),
        "b1": 0.1 * jax.random.normal(k_b1, (1, H), jnp.float32),
        "w2": jax.random.normal(k_w2, (H, V), jnp.float32) / jnp.sqrt(H),
        "b2": 0.1 * jax.random.normal(k_b2, (1, V), jnp.float32),
    }

    src = jax.random.randint(k_src, (B, L), 1, V, jnp.int32)
    src = src.at[0, -3:].set(padding_id)
    src = src.at[1, -5:].set(padding_id)
    src = src.at[2, -1:].set(padding_id)
    tgt = jax.random.randint(k_tgt, (B, L), 1, V, jnp.int32)

    mask = jnp.zeros((B, L), jnp.float32)
    mask = mask.at[0, 1:4].set(1.0).at[1, 0:2].set(1.0).at[2, 10:13].set(1.0)
    timestep = mask.sum(axis=1).astype(jnp.int32)      # t = #masked per sequence

    # Full forward (logits + loss/metrics).
    out = oadm_forward(params, src, tgt, mask, timestep,
                       padding_id=padding_id, aux_loss_weight=1.0,
                       tn=256, tv=512, return_logits=True)
    jax.block_until_ready(out["loss"])

    (ref_logits, ref_loss, ref_nll, ref_acc,
     ref_ntok, ref_nproc) = oadm_reference(params, src, tgt, mask, timestep, padding_id)

    assert jnp.allclose(out["logits"].astype(jnp.float32), ref_logits,
                        atol=5e-3, rtol=1e-2)          # bf16 logits vs f32 reference
    assert jnp.allclose(out["loss"], ref_loss, atol=1e-3, rtol=1e-3)
    assert jnp.allclose(out["other_metrics"]["nll_loss"], ref_nll, atol=1e-3, rtol=1e-3)
    assert jnp.allclose(out["other_metrics"]["accuracy"], ref_acc, atol=1e-5)
    assert jnp.allclose(out["n_tokens"], ref_ntok)
    assert jnp.allclose(out["n_processed"], ref_nproc)

    # Loss-only forward (bf16 logits HBM write elided) must match the full run.
    out_nolog = oadm_forward(params, src, tgt, mask, timestep,
                             padding_id=padding_id, aux_loss_weight=1.0,
                             tn=256, tv=512, return_logits=False)
    jax.block_until_ready(out_nolog["loss"])
    assert out_nolog["logits"] is None
    assert jnp.allclose(out_nolog["loss"], out["loss"], atol=1e-6, rtol=1e-6)
    assert jnp.allclose(out_nolog["other_metrics"]["accuracy"],
                        out["other_metrics"]["accuracy"], atol=1e-6)
    assert jnp.allclose(out_nolog["n_tokens"], out["n_tokens"])

    print("KERNEL_OK")
</pallas_src>

<mosaic_0001>
module attributes {stable_mosaic.version = 11 : i64} {
  func.func @kernel(%arg0: i32, %arg1: i32, %arg2: memref<256x8xf32, #tpu.memory_space<vmem>>, %arg3: memref<256x128xbf16, #tpu.memory_space<vmem>>, %arg4: memref<128x128xbf16, #tpu.memory_space<vmem>>, %arg5: memref<1x128xf32, #tpu.memory_space<vmem>>, %arg6: memref<128x256xbf16, #tpu.memory_space<vmem>>, %arg7: memref<1x256xf32, #tpu.memory_space<vmem>>, %arg8: memref<256x256xbf16, #tpu.memory_space<vmem>>, %arg9: memref<1x1x128xf32, #tpu.memory_space<vmem>>, %arg10: memref<256x128xbf16, #tpu.memory_space<vmem>>, %arg11: memref<256x4xf32, #tpu.memory_space<vmem>>) attributes {dimension_semantics = [#tpu.dimension_semantics<parallel>, #tpu.dimension_semantics<arbitrary>], iteration_bounds = array<i64: 1, 1>, scalar_prefetch = 0 : i64, scratch_operands = 2 : i64, tpu.core_type = #tpu.core_type<tc>, window_params = [{transform_indices = @transform_0, window_bounds = array<i64: 256, 8>}, {pipeline_mode = #tpu.pipeline_mode<synchronous>, transform_indices = @transform_1, window_bounds = array<i64: 256, 128>}, {pipeline_mode = #tpu.pipeline_mode<synchronous>, transform_indices = @transform_2, window_bounds = array<i64: 128, 128>}, {pipeline_mode = #tpu.pipeline_mode<synchronous>, transform_indices = @transform_3, window_bounds = array<i64: 1, 128>}, {transform_indices = @transform_4, window_bounds = array<i64: 128, 256>}, {transform_indices = @transform_5, window_bounds = array<i64: 1, 256>}, {transform_indices = @transform_6, window_bounds = array<i64: 256, 256>}, {transform_indices = @transform_7, window_bounds = array<i64: 1, 1, 128>}]} {
    %c0 = arith.constant 0 : index
    %c0_0 = arith.constant 0 : index
    %0 = vector.load %arg2[%c0, %c0_0] : memref<256x8xf32, #tpu.memory_space<vmem>>, vector<256x8xf32>
    %1 = vector.extract_strided_slice %0 {offsets = [0, 0], sizes = [256, 1], strides = [1, 1]} : vector<256x8xf32> to vector<256x1xf32>
    %2 = arith.fptosi %1 : vector<256x1xf32> to vector<256x1xi32>
    %c0_i32 = arith.constant 0 : i32
    %3 = arith.cmpi eq, %arg1, %c0_i32 : i32
    %4 = arith.extui %3 : i1 to i32
    %c0_i32_1 = arith.constant 0 : i32
    %5 = arith.cmpi ne, %4, %c0_i32_1 : i32
    scf.if %5 {
      %57 = vector.extract_strided_slice %0 {offsets = [0, 4], sizes = [256, 1], strides = [1, 1]} : vector<256x8xf32> to vector<256x1xf32>
      %58 = arith.fptosi %57 : vector<256x1xf32> to vector<256x1xi32>
      %59 = vector.extract_strided_slice %0 {offsets = [0, 3], sizes = [256, 1], strides = [1, 1]} : vector<256x8xf32> to vector<256x1xf32>
      %60 = tpu.iota {dimensions = array<i32: 1>} : vector<256x256xi32>
      %61 = vector.broadcast %58 : vector<256x1xi32> to vector<256x256xi32>
      %62 = arith.cmpi eq, %60, %61 : vector<256x256xi32>
      %63 = arith.extui %62 : vector<256x256xi1> to vector<256x256xi32>
      %64 = arith.sitofp %63 : vector<256x256xi32> to vector<256x256xf32>
      %65 = arith.truncf %64 : vector<256x256xf32> to vector<256x256xbf16>
      %c0_30 = arith.constant 0 : index
      %c0_31 = arith.constant 0 : index
      %66 = vector.load %arg3[%c0_30, %c0_31] : memref<256x128xbf16, #tpu.memory_space<vmem>>, vector<256x128xbf16>
      %cst_32 = arith.constant dense<0.000000e+00> : vector<256x128xf32>
      %67 = tpu.matmul %65, %66, %cst_32 {dimension_numbers = #tpu.dot_dimension_numbers<[1], [0], [0], [1], [0, 0, 1, 1], [], []>} : vector<256x256xbf16>, vector<256x128xbf16>, vector<256x128xf32> -> vector<256x128xf32>
      %68 = vector.broadcast %59 : vector<256x1xf32> to vector<256x128xf32>
      %69 = arith.mulf %67, %68 : vector<256x128xf32>
      %70 = arith.truncf %69 : vector<256x128xf32> to vector<256x128xbf16>
      %c0_33 = arith.constant 0 : index
      %c0_34 = arith.constant 0 : index
      %71 = vector.load %arg4[%c0_33, %c0_34] : memref<128x128xbf16, #tpu.memory_space<vmem>>, vector<128x128xbf16>
      %cst_35 = arith.constant dense<0.000000e+00> : vector<256x128xf32>
      %72 = tpu.matmul %70, %71, %cst_35 {dimension_numbers = #tpu.dot_dimension_numbers<[1], [0], [0], [1], [0, 0, 1, 1], [], []>} : vector<256x128xbf16>, vector<128x128xbf16>, vector<256x128xf32> -> vector<256x128xf32>
      %c0_36 = arith.constant 0 : index
      %c0_37 = arith.constant 0 : index
      %73 = vector.load %arg5[%c0_36, %c0_37] : memref<1x128xf32, #tpu.memory_space<vmem>>, vector<1x128xf32>
      %74 = vector.broadcast %73 : vector<1x128xf32> to vector<256x128xf32>
      %75 = arith.addf %72, %74 : vector<256x128xf32>
      %76 = arith.mulf %75, %75 : vector<256x128xf32>
      %77 = arith.mulf %75, %76 : vector<256x128xf32>
      %cst_38 = arith.constant 4.471500e-02 : f32
      %78 = vector.broadcast %cst_38 : f32 to vector<256x128xf32>
      %79 = arith.mulf %78, %77 : vector<256x128xf32>
      %80 = arith.addf %75, %79 : vector<256x128xf32>
      %cst_39 = arith.constant 0.797884583 : f32
      %81 = vector.broadcast %cst_39 : f32 to vector<256x128xf32>
      %82 = arith.mulf %81, %80 : vector<256x128xf32>
      %83 = math.tanh %82 : vector<256x128xf32>
      %cst_40 = arith.constant 1.000000e+00 : f32
      %84 = vector.broadcast %cst_40 : f32 to vector<256x128xf32>
      %85 = arith.addf %84, %83 : vector<256x128xf32>
      %cst_41 = arith.constant 5.000000e-01 : f32
      %86 = vector.broadcast %cst_41 : f32 to vector<256x128xf32>
      %87 = arith.mulf %86, %85 : vector<256x128xf32>
      %88 = arith.mulf %75, %87 : vector<256x128xf32>
      %89 = arith.truncf %88 : vector<256x128xf32> to vector<256x128xbf16>
      %c0_42 = arith.constant 0 : index
      %c0_43 = arith.constant 0 : index
      %90 = vector.load %arg10[%c0_42, %c0_43] : memref<256x128xbf16, #tpu.memory_space<vmem>>, vector<256x128xbf16>
      tpu.vector_store %arg10[%c0_42, %c0_43], %89 {strides = array<i32>} : memref<256x128xbf16, #tpu.memory_space<vmem>>, vector<256x128xbf16>,
      %91 = tpu.iota {dimensions = array<i32: 1>} : vector<256x4xi32>
      %c0_i32_44 = arith.constant 0 : i32
      %92 = vector.broadcast %c0_i32_44 : i32 to vector<256x4xi32>
      %93 = arith.cmpi eq, %91, %92 : vector<256x4xi32>
      %cst_45 = arith.constant 0xFF800000 : f32
      %cst_46 = arith.constant 0.000000e+00 : f32
      %94 = vector.broadcast %cst_45 : f32 to vector<256x4xf32>
      %95 = vector.broadcast %cst_46 : f32 to vector<256x4xf32>
      %96 = arith.select %93, %94, %95 : vector<256x4xi1>, vector<256x4xf32>
      %c0_47 = arith.constant 0 : index
      %c0_48 = arith.constant 0 : index
      %97 = vector.load %arg11[%c0_47, %c0_48] : memref<256x4xf32, #tpu.memory_space<vmem>>, vector<256x4xf32>
      tpu.vector_store %arg11[%c0_47, %c0_48], %96 {strides = array<i32>} : memref<256x4xf32, #tpu.memory_space<vmem>>, vector<256x4xf32>,
    } else {
    }
    %c0_2 = arith.constant 0 : index
    %c0_3 = arith.constant 0 : index
    %6 = vector.load %arg10[%c0_2, %c0_3] : memref<256x128xbf16, #tpu.memory_space<vmem>>, vector<256x128xbf16>
    %c0_4 = arith.constant 0 : index
    %c0_5 = arith.constant 0 : index
    %7 = vector.load %arg6[%c0_4, %c0_5] : memref<128x256xbf16, #tpu.memory_space<vmem>>, vector<128x256xbf16>
    %cst = arith.constant dense<0.000000e+00> : vector<256x256xf32>
    %8 = tpu.matmul %6, %7, %cst {dimension_numbers = #tpu.dot_dimension_numbers<[1], [0], [0], [1], [0, 0, 1, 1], [], []>} : vector<256x128xbf16>, vector<128x256xbf16>, vector<256x256xf32> -> vector<256x256xf32>
    %c0_6 = arith.constant 0 : index
    %c0_7 = arith.constant 0 : index
    %9 = vector.load %arg7[%c0_6, %c0_7] : memref<1x256xf32, #tpu.memory_space<vmem>>, vector<1x256xf32>
    %10 = vector.broadcast %9 : vector<1x256xf32> to vector<256x256xf32>
    %11 = arith.addf %8, %10 : vector<256x256xf32>
    %12 = arith.truncf %11 : vector<256x256xf32> to vector<256x256xbf16>
    %c0_8 = arith.constant 0 : index
    %c0_9 = arith.constant 0 : index
    %13 = vector.load %arg8[%c0_8, %c0_9] : memref<256x256xbf16, #tpu.memory_space<vmem>>, vector<256x256xbf16>
    tpu.vector_store %arg8[%c0_8, %c0_9], %12 {strides = array<i32>} : memref<256x256xbf16, #tpu.memory_space<vmem>>, vector<256x256xbf16>,
    %14 = tpu.iota {dimensions = array<i32: 1>} : vector<256x256xi32>
    %c256_i32 = arith.constant 256 : i32
    %15 = arith.muli %arg1, %c256_i32 : i32
    %16 = vector.broadcast %15 : i32 to vector<256x256xi32>
    %17 = arith.addi %14, %16 : vector<256x256xi32>
    %cst_10 = arith.constant dense<0xFF800000> : vector<256xf32>
    %18 = vector.multi_reduction <maximumf>, %11, %cst_10 [1] : vector<256x256xf32> to vector<256xf32>
    %19 = vector.shape_cast %18 : vector<256xf32> to vector<256x1xf32>
    %20 = vector.broadcast %19 : vector<256x1xf32> to vector<256x256xf32>
    %21 = arith.cmpf oeq, %11, %20 : vector<256x256xf32>
    %c1073741824_i32 = arith.constant 1073741824 : i32
    %22 = vector.broadcast %c1073741824_i32 : i32 to vector<256x256xi32>
    %23 = arith.select %21, %17, %22 : vector<256x256xi1>, vector<256x256xi32>
    %cst_11 = arith.constant dense<2147483647> : vector<256xi32>
    %24 = vector.multi_reduction <minsi>, %23, %cst_11 [1] : vector<256x256xi32> to vector<256xi32>
    %25 = vector.shape_cast %24 : vector<256xi32> to vector<256x1xi32>
    %26 = arith.sitofp %25 : vector<256x1xi32> to vector<256x1xf32>
    %c0_12 = arith.constant 0 : index
    %c2 = arith.constant 2 : index
    %27 = vector.load %arg11[%c0_12, %c2] : memref<256x4xf32, #tpu.memory_space<vmem>>, vector<256x1xf32>
    %28 = vector.broadcast %2 : vector<256x1xi32> to vector<256x256xi32>
    %29 = arith.cmpi eq, %17, %28 : vector<256x256xi32>
    %cst_13 = arith.constant 0.000000e+00 : f32
    %30 = vector.broadcast %cst_13 : f32 to vector<256x256xf32>
    %31 = arith.select %29, %11, %30 : vector<256x256xi1>, vector<256x256xf32>
    %cst_14 = arith.constant dense<0.000000e+00> : vector<256xf32>
    %32 = vector.multi_reduction <add>, %31, %cst_14 [1] : vector<256x256xf32> to vector<256xf32>
    %33 = vector.shape_cast %32 : vector<256xf32> to vector<256x1xf32>
    %34 = arith.addf %27, %33 : vector<256x1xf32>
    %c0_15 = arith.constant 0 : index
    %c2_16 = arith.constant 2 : index
    %35 = vector.load %arg11[%c0_15, %c2_16] : memref<256x4xf32, #tpu.memory_space<vmem>>, vector<256x1xf32>
    tpu.vector_store %arg11[%c0_15, %c2_16], %34 {strides = array<i32>} : memref<256x4xf32, #tpu.memory_space<vmem>>, vector<256x1xf32>,
    %c0_17 = arith.constant 0 : index
    %c0_18 = arith.constant 0 : index
    %36 = vector.load %arg11[%c0_17, %c0_18] : memref<256x4xf32, #tpu.memory_space<vmem>>, vector<256x1xf32>
    %37 = arith.maximumf %36, %19 : vector<256x1xf32>
    %c0_19 = arith.constant 0 : index
    %c1 = arith.constant 1 : index
    %38 = vector.load %arg11[%c0_19, %c1] : memref<256x4xf32, #tpu.memory_space<vmem>>, vector<256x1xf32>
    %39 = arith.subf %36, %37 : vector<256x1xf32>
    %40 = math.exp %39 : vector<256x1xf32>
    %41 = arith.mulf %38, %40 : vector<256x1xf32>
    %42 = vector.broadcast %37 : vector<256x1xf32> to vector<256x256xf32>
    %43 = arith.subf %11, %42 : vector<256x256xf32>
    %44 = math.exp %43 : vector<256x256xf32>
    %cst_20 = arith.constant dense<0.000000e+00> : vector<256xf32>
    %45 = vector.multi_reduction <add>, %44, %cst_20 [1] : vector<256x256xf32> to vector<256xf32>
    %46 = vector.shape_cast %45 : vector<256xf32> to vector<256x1xf32>
    %47 = arith.addf %41, %46 : vector<256x1xf32>
    %c0_21 = arith.constant 0 : index
    %c1_22 = arith.constant 1 : index
    %48 = vector.load %arg11[%c0_21, %c1_22] : memref<256x4xf32, #tpu.memory_space<vmem>>, vector<256x1xf32>
    tpu.vector_store %arg11[%c0_21, %c1_22], %47 {strides = array<i32>} : memref<256x4xf32, #tpu.memory_space<vmem>>, vector<256x1xf32>,
    %49 = arith.cmpf ogt, %19, %36 : vector<256x1xf32>
    %c0_23 = arith.constant 0 : index
    %c3 = arith.constant 3 : index
    %50 = vector.load %arg11[%c0_23, %c3] : memref<256x4xf32, #tpu.memory_space<vmem>>, vector<256x1xf32>
    %51 = arith.select %49, %26, %50 : vector<256x1xi1>, vector<256x1xf32>
    %c0_24 = arith.constant 0 : index
    %c3_25 = arith.constant 3 : index
    %52 = vector.load %arg11[%c0_24, %c3_25] : memref<256x4xf32, #tpu.memory_space<vmem>>, vector<256x1xf32>
    tpu.vector_store %arg11[%c0_24, %c3_25], %51 {strides = array<i32>} : memref<256x4xf32, #tpu.memory_space<vmem>>, vector<256x1xf32>,
    %c0_26 = arith.constant 0 : index
    %c0_27 = arith.constant 0 : index
    %53 = vector.load %arg11[%c0_26, %c0_27] : memref<256x4xf32, #tpu.memory_space<vmem>>, vector<256x1xf32>
    tpu.vector_store %arg11[%c0_26, %c0_27], %37 {strides = array<i32>} : memref<256x4xf32, #tpu.memory_space<vmem>>, vector<256x1xf32>,
    %c0_i32_28 = arith.constant 0 : i32
    %54 = arith.cmpi eq, %arg1, %c0_i32_28 : i32
    %55 = arith.extui %54 : i1 to i32
    %c0_i32_29 = arith.constant 0 : i32
    %56 = arith.cmpi ne, %55, %c0_i32_29 : i32
    scf.if %56 {
      %57 = vector.extract_strided_slice %0 {offsets = [0, 1], sizes = [256, 1], strides = [1, 1]} : vector<256x8xf32> to vector<256x1xf32>
      %58 = vector.extract_strided_slice %0 {offsets = [0, 2], sizes = [256, 1], strides = [1, 1]} : vector<256x8xf32> to vector<256x1xf32>
      %59 = vector.extract_strided_slice %0 {offsets = [0, 3], sizes = [256, 1], strides = [1, 1]} : vector<256x8xf32> to vector<256x1xf32>
      %c0_30 = arith.constant 0 : index
      %c0_31 = arith.constant 0 : index
      %60 = vector.load %arg11[%c0_30, %c0_31] : memref<256x4xf32, #tpu.memory_space<vmem>>, vector<256x1xf32>
      %c0_32 = arith.constant 0 : index
      %c1_33 = arith.constant 1 : index
      %61 = vector.load %arg11[%c0_32, %c1_33] : memref<256x4xf32, #tpu.memory_space<vmem>>, vector<256x1xf32>
      %62 = math.log %61 : vector<256x1xf32>
      %63 = arith.addf %60, %62 : vector<256x1xf32>
      %c0_34 = arith.constant 0 : index
      %c2_35 = arith.constant 2 : index
      %64 = vector.load %arg11[%c0_34, %c2_35] : memref<256x4xf32, #tpu.memory_space<vmem>>, vector<256x1xf32>
      %65 = arith.subf %63, %64 : vector<256x1xf32>
      %c0_36 = arith.constant 0 : index
      %c3_37 = arith.constant 3 : index
      %66 = vector.load %arg11[%c0_36, %c3_37] : memref<256x4xf32, #tpu.memory_space<vmem>>, vector<256x1xf32>
      %67 = vector.extract_strided_slice %0 {offsets = [0, 0], sizes = [256, 1], strides = [1, 1]} : vector<256x8xf32> to vector<256x1xf32>
      %68 = arith.cmpf oeq, %66, %67 : vector<256x1xf32>
      %69 = arith.extui %68 : vector<256x1xi1> to vector<256x1xi32>
      %70 = arith.sitofp %69 : vector<256x1xi32> to vector<256x1xf32>
      %71 = arith.mulf %70, %57 : vector<256x1xf32>
      %72 = tpu.iota {dimensions = array<i32: 1>} : vector<256x128xi32>
      %c0_i32_38 = arith.constant 0 : i32
      %73 = vector.broadcast %c0_i32_38 : i32 to vector<256x128xi32>
      %74 = arith.cmpi eq, %72, %73 : vector<256x128xi32>
      %75 = arith.mulf %58, %57 : vector<256x1xf32>
      %76 = arith.mulf %75, %65 : vector<256x1xf32>
      %cst_39 = arith.constant 0.000000e+00 : f32
      %77 = vector.shape_cast %76 : vector<256x1xf32> to vector<256x1xf32>
      %78 = vector.broadcast %77 : vector<256x1xf32> to vector<256x128xf32>
      %79 = vector.broadcast %cst_39 : f32 to vector<256x128xf32>
      %80 = arith.select %74, %78, %79 : vector<256x128xi1>, vector<256x128xf32>
      %c1_i32 = arith.constant 1 : i32
      %81 = vector.broadcast %c1_i32 : i32 to vector<256x128xi32>
      %82 = arith.cmpi eq, %72, %81 : vector<256x128xi32>
      %83 = arith.mulf %57, %65 : vector<256x1xf32>
      %cst_40 = arith.constant 0.000000e+00 : f32
      %84 = vector.shape_cast %83 : vector<256x1xf32> to vector<256x1xf32>
      %85 = vector.broadcast %84 : vector<256x1xf32> to vector<256x128xf32>
      %86 = vector.broadcast %cst_40 : f32 to vector<256x128xf32>
      %87 = arith.select %82, %85, %86 : vector<256x128xi1>, vector<256x128xf32>
      %88 = arith.addf %80, %87 : vector<256x128xf32>
      %c2_i32 = arith.constant 2 : i32
      %89 = vector.broadcast %c2_i32 : i32 to vector<256x128xi32>
      %90 = arith.cmpi eq, %72, %89 : vector<256x128xi32>
      %cst_41 = arith.constant 0.000000e+00 : f32
      %91 = vector.shape_cast %71 : vector<256x1xf32> to vector<256x1xf32>
      %92 = vector.broadcast %91 : vector<256x1xf32> to vector<256x128xf32>
      %93 = vector.broadcast %cst_41 : f32 to vector<256x128xf32>
      %94 = arith.select %90, %92, %93 : vector<256x128xi1>, vector<256x128xf32>
      %95 = arith.addf %88, %94 : vector<256x128xf32>
      %c3_i32 = arith.constant 3 : i32
      %96 = vector.broadcast %c3_i32 : i32 to vector<256x128xi32>
      %97 = arith.cmpi eq, %72, %96 : vector<256x128xi32>
      %cst_42 = arith.constant 0.000000e+00 : f32
      %98 = vector.shape_cast %57 : vector<256x1xf32> to vector<256x1xf32>
      %99 = vector.broadcast %98 : vector<256x1xf32> to vector<256x128xf32>
      %100 = vector.broadcast %cst_42 : f32 to vector<256x128xf32>
      %101 = arith.select %97, %99, %100 : vector<256x128xi1>, vector<256x128xf32>
      %102 = arith.addf %95, %101 : vector<256x128xf32>
      %c4_i32 = arith.constant 4 : i32
      %103 = vector.broadcast %c4_i32 : i32 to vector<256x128xi32>
      %104 = arith.cmpi eq, %72, %103 : vector<256x128xi32>
      %cst_43 = arith.constant 0.000000e+00 : f32
      %105 = vector.shape_cast %59 : vector<256x1xf32> to vector<256x1xf32>
      %106 = vector.broadcast %105 : vector<256x1xf32> to vector<256x128xf32>
      %107 = vector.broadcast %cst_43 : f32 to vector<256x128xf32>
      %108 = arith.select %104, %106, %107 : vector<256x128xi1>, vector<256x128xf32>
      %109 = arith.addf %102, %108 : vector<256x128xf32>
      %cst_44 = arith.constant dense<0.000000e+00> : vector<128xf32>
      %110 = vector.multi_reduction <add>, %109, %cst_44 [0] : vector<256x128xf32> to vector<128xf32>
      %111 = vector.shape_cast %110 : vector<128xf32> to vector<1x128xf32>
      %112 = vector.shape_cast %111 : vector<1x128xf32> to vector<1x1x128xf32>
      %c0_45 = arith.constant 0 : index
      %c0_46 = arith.constant 0 : index
      %c0_47 = arith.constant 0 : index
      %113 = vector.load %arg9[%c0_45, %c0_46, %c0_47] : memref<1x1x128xf32, #tpu.memory_space<vmem>>, vector<1x1x128xf32>
      tpu.vector_store %arg9[%c0_45, %c0_46, %c0_47], %112 {strides = array<i32>} : memref<1x1x128xf32, #tpu.memory_space<vmem>>, vector<1x1x128xf32>,
    } else {
    }
    return
  }
  func.func @transform_0(%arg0: i32, %arg1: i32) -> (i32, i32) {
    %c0_i32 = arith.constant 0 : i32
    %c0_i32_0 = arith.constant 0 : i32
    return %arg0, %c0_i32 : i32, i32
  }
  func.func @transform_1(%arg0: i32, %arg1: i32) -> (i32, i32) {
    %c0_i32 = arith.constant 0 : i32
    %c0_i32_0 = arith.constant 0 : i32
    %c0_i32_1 = arith.constant 0 : i32
    return %c0_i32, %c0_i32_0 : i32, i32
  }
  func.func @transform_2(%arg0: i32, %arg1: i32) -> (i32, i32) {
    %c0_i32 = arith.constant 0 : i32
    %c0_i32_0 = arith.constant 0 : i32
    %c0_i32_1 = arith.constant 0 : i32
    return %c0_i32, %c0_i32_0 : i32, i32
  }
  func.func @transform_3(%arg0: i32, %arg1: i32) -> (i32, i32) {
    %c0_i32 = arith.constant 0 : i32
    %c0_i32_0 = arith.constant 0 : i32
    %c0_i32_1 = arith.constant 0 : i32
    return %c0_i32, %c0_i32_0 : i32, i32
  }
  func.func @transform_4(%arg0: i32, %arg1: i32) -> (i32, i32) {
    %c0_i32 = arith.constant 0 : i32
    %c0_i32_0 = arith.constant 0 : i32
    return %c0_i32, %arg1 : i32, i32
  }
  func.func @transform_5(%arg0: i32, %arg1: i32) -> (i32, i32) {
    %c0_i32 = arith.constant 0 : i32
    %c0_i32_0 = arith.constant 0 : i32
    return %c0_i32, %arg1 : i32, i32
  }
  func.func @transform_6(%arg0: i32, %arg1: i32) -> (i32, i32) {
    %c0_i32 = arith.constant 0 : i32
    return %arg0, %arg1 : i32, i32
  }
  func.func @transform_7(%arg0: i32, %arg1: i32) -> (i32, i32, i32) {
    %c0_i32 = arith.constant 0 : i32
    %c0_i32_0 = arith.constant 0 : i32
    %c0_i32_1 = arith.constant 0 : i32
    return %arg0, %c0_i32, %c0_i32_0 : i32, i32, i32
  }
}

</mosaic_0001>

<llo_original>
// kernel: tpu_custom_call.1
$region0: #{tpu_custom_call.1}
  #allocation0 [shape = 'u32[]', space=smem, size = 0x4, offset = 0x4, fixed_abs, tag = 'smem constant byte address 0x4 - core index']
  #allocation1 [shape = 'u32[144,128]{1,0:T(1,128)}', space=vmem, size = 0x12000, scoped, tag = 'internal scratch']
  #allocation2 [shape = 'bf16[256,128]{1,0:T(16,128)(2,1)}', space=vmem, size = 0x10000, scoped, tag = 'scratch operand']
  #allocation3 [shape = 'f32[256,4]{1,0:T(8,128)}', space=vmem, size = 0x20000, scoped, tag = 'scratch operand']
  %s0 = inlined_call_operand.vmem [shape: f32[256,8], index: 0, kind: input, shape index: {}]
  %s1 = inlined_call_operand.vmem [shape: bf16[256,128], index: 1, kind: input, shape index: {}]
  %s2 = inlined_call_operand.hbm [shape: bf16[128,128], index: 2, kind: input, shape index: {}]
  %s3 = inlined_call_operand.vmem [shape: f32[1,128], index: 3, kind: input, shape index: {}]
  %s4 = inlined_call_operand.vmem [shape: bf16[128,256], index: 4, kind: input, shape index: {}]
  %s5 = inlined_call_operand.vmem [shape: f32[1,256], index: 5, kind: input, shape index: {}]
  %s6 = inlined_call_operand.hbm [shape: bf16[256,256], index: 6, kind: output, shape index: {0}]
  %s7 = inlined_call_operand.hbm [shape: f32[1,1,128], index: 7, kind: output, shape index: {1}]
  %8 = xla_tuple %s6, %s7
  %s9 = sld [smem:[#allocation0]]
  $region54: #{tpu_custom_call.1} parent=0
    _
  %s11 = ssub.s32 1, %s9
  %s12 = scalar_select 0, %s11, %s9
  $region1: #{tpu_custom_call.1} parent=0
    #allocation4 [shape = 'u8[32768]{0}', space=vmem, size = 0x8000, scoped, tag = 'input window, operand 2, single buffered']
    #allocation5 [shape = 's32[1]{0}', space=sflag, size = 0x4, scoped, tag = 'scoped memory for tpu_custom_call.1']
    #allocation6 [shape = 's32[1]{0}', space=sflag, size = 0x4, scoped, tag = 'scoped memory for tpu_custom_call.1']
    #allocation7 [shape = 'u8[131072]{0}', space=vmem, size = 0x20000, scoped, tag = 'output window, operand 0, single buffered']
    #allocation8 [shape = 'u8[512]{0}', space=vmem, size = 0x400, scoped, tag = 'output window, operand 1, single buffered']
    #allocation9 [shape = 's32[1]{0}', space=sflag, size = 0x4, scoped, tag = 'scoped memory for tpu_custom_call.1']
    %13 = vsyncpa [#allocation5], 0
    %14 = vsyncpa [#allocation6], 0
    %15 = vsyncpa [#allocation9], 0
    // Predicated region
    $region2: #{tpu_custom_call.1} parent=1 // pred_check
      _
    $region3: #{tpu_custom_call.1} parent=1 // pred_check_branch
      %17 = sbr.rel (0) target = $region5
    $region4: #{tpu_custom_call.1} parent=1 // pred_region
      _
    $region5: #{tpu_custom_call.1} parent=1 // pred_fallthru
      _
    // Predicated region
    $region6: #{tpu_custom_call.1} parent=1 // pred_check
      _
    $region7: #{tpu_custom_call.1} parent=1 // pred_check_branch
      %19 = sbr.rel (0) target = $region9
    $region8: #{tpu_custom_call.1} parent=1 // pred_region
      _
    $region9: #{tpu_custom_call.1} parent=1 // pred_fallthru
      _
    // Predicated region
    $region10: #{tpu_custom_call.1} parent=1 // pred_check
      _
    $region11: #{tpu_custom_call.1} parent=1 // pred_check_branch
      %21 = sbr.rel (0) target = $region13
    $region12: #{tpu_custom_call.1} parent=1 // pred_region
      %s23 = ssub.s32 1024, 1024
      %24 = vsyncadd [#allocation5], %s23
      %s25 = sshll.u32 [#allocation4], 4
      %s26 = int_to_ptr.vmem [resolvable:$true] %s25
      %31 = dma.hbm_to_vmem [thread:$0]  %s2, 1024, %s26, [#allocation5], 64, 64, 4
    $region13: #{tpu_custom_call.1} parent=1 // pred_fallthru
      _
    // Predicated region
    $region14: #{tpu_custom_call.1} parent=1 // pred_check
      _
    $region15: #{tpu_custom_call.1} parent=1 // pred_check_branch
      %33 = sbr.rel (0) target = $region17
    $region16: #{tpu_custom_call.1} parent=1 // pred_region
      _
    $region17: #{tpu_custom_call.1} parent=1 // pred_fallthru
      _
    // Predicated region
    $region18: #{tpu_custom_call.1} parent=1 // pred_check
      _
    $region19: #{tpu_custom_call.1} parent=1 // pred_check_branch
      %35 = sbr.rel (0) target = $region21
    $region20: #{tpu_custom_call.1} parent=1 // pred_region
      _
    $region21: #{tpu_custom_call.1} parent=1 // pred_fallthru
      _
    // Predicated region
    $region22: #{tpu_custom_call.1} parent=1 // pred_check
      _
    $region23: #{tpu_custom_call.1} parent=1 // pred_check_branch
      %37 = sbr.rel (0) target = $region25
    $region24: #{tpu_custom_call.1} parent=1 // pred_region
      _
    $region25: #{tpu_custom_call.1} parent=1 // pred_fallthru
      _
    // Predicated region
    $region26: #{tpu_custom_call.1} parent=1 // pred_check
      _
    $region27: #{tpu_custom_call.1} parent=1 // pred_check_branch
      %39 = sbr.rel (0) target = $region29
    $region28: #{tpu_custom_call.1} parent=1 // pred_region
      %40 = dma.done [#allocation5], 1024
    $region29: #{tpu_custom_call.1} parent=1 // pred_fallthru
      _
    %v42 = vld [vmem:[%s0] sm:$0xff]
    %v43 = vld [vmem:[%s0 + $0x8] sm:$0xff]
    %v44 = vld [vmem:[%s0 + $0x10] sm:$0xff]
    %v45 = vld [vmem:[%s0 + $0x18] sm:$0xff]
    %v46 = vld [vmem:[%s0 + $0x20] sm:$0xff]
    %v47 = vld [vmem:[%s0 + $0x28] sm:$0xff]
    %v48 = vld [vmem:[%s0 + $0x30] sm:$0xff]
    %v49 = vld [vmem:[%s0 + $0x38] sm:$0xff]
    %v50 = vld [vmem:[%s0 + $0x40] sm:$0xff]
    %v51 = vld [vmem:[%s0 + $0x48] sm:$0xff]
    %v52 = vld [vmem:[%s0 + $0x50] sm:$0xff]
    %v53 = vld [vmem:[%s0 + $0x58] sm:$0xff]
    %v54 = vld [vmem:[%s0 + $0x60] sm:$0xff]
    %v55 = vld [vmem:[%s0 + $0x68] sm:$0xff]
    %v56 = vld [vmem:[%s0 + $0x70] sm:$0xff]
    %v57 = vld [vmem:[%s0 + $0x78] sm:$0xff]
    %v58 = vld [vmem:[%s0 + $0x80] sm:$0xff]
    %v59 = vld [vmem:[%s0 + $0x88] sm:$0xff]
    %v60 = vld [vmem:[%s0 + $0x90] sm:$0xff]
    %v61 = vld [vmem:[%s0 + $0x98] sm:$0xff]
    %v62 = vld [vmem:[%s0 + $0xa0] sm:$0xff]
    %v63 = vld [vmem:[%s0 + $0xa8] sm:$0xff]
    %v64 = vld [vmem:[%s0 + $0xb0] sm:$0xff]
    %v65 = vld [vmem:[%s0 + $0xb8] sm:$0xff]
    %v66 = vld [vmem:[%s0 + $0xc0] sm:$0xff]
    %v67 = vld [vmem:[%s0 + $0xc8] sm:$0xff]
    %v68 = vld [vmem:[%s0 + $0xd0] sm:$0xff]
    %v69 = vld [vmem:[%s0 + $0xd8] sm:$0xff]
    %v70 = vld [vmem:[%s0 + $0xe0] sm:$0xff]
    %v71 = vld [vmem:[%s0 + $0xe8] sm:$0xff]
    %v72 = vld [vmem:[%s0 + $0xf0] sm:$0xff]
    %v73 = vld [vmem:[%s0 + $0xf8] sm:$0xff]
    %v74 = vcvt.f32.s32.to.zero.pseudo %v42
    %v75 = vcvt.f32.s32.to.zero.pseudo %v43
    %v76 = vcvt.f32.s32.to.zero.pseudo %v44
    %v77 = vcvt.f32.s32.to.zero.pseudo %v45
    %v78 = vcvt.f32.s32.to.zero.pseudo %v46
    %v79 = vcvt.f32.s32.to.zero.pseudo %v47
    %v80 = vcvt.f32.s32.to.zero.pseudo %v48
    %v81 = vcvt.f32.s32.to.zero.pseudo %v49
    %v82 = vcvt.f32.s32.to.zero.pseudo %v50
    %v83 = vcvt.f32.s32.to.zero.pseudo %v51
    %v84 = vcvt.f32.s32.to.zero.pseudo %v52
    %v85 = vcvt.f32.s32.to.zero.pseudo %v53
    %v86 = vcvt.f32.s32.to.zero.pseudo %v54
    %v87 = vcvt.f32.s32.to.zero.pseudo %v55
    %v88 = vcvt.f32.s32.to.zero.pseudo %v56
    %v89 = vcvt.f32.s32.to.zero.pseudo %v57
    %v90 = vcvt.f32.s32.to.zero.pseudo %v58
    %v91 = vcvt.f32.s32.to.zero.pseudo %v59
    %v92 = vcvt.f32.s32.to.zero.pseudo %v60
    %v93 = vcvt.f32.s32.to.zero.pseudo %v61
    %v94 = vcvt.f32.s32.to.zero.pseudo %v62
    %v95 = vcvt.f32.s32.to.zero.pseudo %v63
    %v96 = vcvt.f32.s32.to.zero.pseudo %v64
    %v97 = vcvt.f32.s32.to.zero.pseudo %v65
    %v98 = vcvt.f32.s32.to.zero.pseudo %v66
    %v99 = vcvt.f32.s32.to.zero.pseudo %v67
    %v100 = vcvt.f32.s32.to.zero.pseudo %v68
    %v101 = vcvt.f32.s32.to.zero.pseudo %v69
    %v102 = vcvt.f32.s32.to.zero.pseudo %v70
    %v103 = vcvt.f32.s32.to.zero.pseudo %v71
    %v104 = vcvt.f32.s32.to.zero.pseudo %v72
    %v105 = vcvt.f32.s32.to.zero.pseudo %v73
    %p106 = scmp.eq.s32.totalorder 0, 0
    // Predicated region
    $region30: #{tpu_custom_call.1} parent=1 // pred_check
      %p107 = pneg %p106
    $region31: #{tpu_custom_call.1} parent=1 // pred_check_branch
      %109 = sbr.rel (%p107) target = $region33
    $region32: #{tpu_custom_call.1} parent=1 // pred_region
      %v110 = vlaneseq
      %v111 = vand.u32 %v110, 127
      %v112 = vadd.s32 %v111, 128
      %113 = vset.pattern.permute.xlu0 4
      %114 = vperm.xlu0 %113, %v74
      %v115 = vpop.permute.xlu0 %114
      %116 = vset.pattern.permute.xlu0 4
      %117 = vperm.xlu0 %116, %v75
      %v118 = vpop.permute.xlu0 %117
      %119 = vset.pattern.permute.xlu0 4
      %120 = vperm.xlu0 %119, %v76
      %v121 = vpop.permute.xlu0 %120
      %122 = vset.pattern.permute.xlu0 4
      %123 = vperm.xlu0 %122, %v77
      %v124 = vpop.permute.xlu0 %123
      %125 = vset.pattern.permute.xlu0 4
      %126 = vperm.xlu0 %125, %v78
      %v127 = vpop.permute.xlu0 %126
      %128 = vset.pattern.permute.xlu0 4
      %129 = vperm.xlu0 %128, %v79
      %v130 = vpop.permute.xlu0 %129
      %131 = vset.pattern.permute.xlu0 4
      %132 = vperm.xlu0 %131, %v80
      %v133 = vpop.permute.xlu0 %132
      %134 = vset.pattern.permute.xlu0 4
      %135 = vperm.xlu0 %134, %v81
      %v136 = vpop.permute.xlu0 %135
      %137 = vset.pattern.permute.xlu0 4
      %138 = vperm.xlu0 %137, %v82
      %v139 = vpop.permute.xlu0 %138
      %140 = vset.pattern.permute.xlu0 4
      %141 = vperm.xlu0 %140, %v83
      %v142 = vpop.permute.xlu0 %141
      %143 = vset.pattern.permute.xlu0 4
      %144 = vperm.xlu0 %143, %v84
      %v145 = vpop.permute.xlu0 %144
      %146 = vset.pattern.permute.xlu0 4
      %147 = vperm.xlu0 %146, %v85
      %v148 = vpop.permute.xlu0 %147
      %149 = vset.pattern.permute.xlu0 4
      %150 = vperm.xlu0 %149, %v86
      %v151 = vpop.permute.xlu0 %150
      %152 = vset.pattern.permute.xlu0 4
      %153 = vperm.xlu0 %152, %v87
      %v154 = vpop.permute.xlu0 %153
      %155 = vset.pattern.permute.xlu0 4
      %156 = vperm.xlu0 %155, %v88
      %v157 = vpop.permute.xlu0 %156
      %158 = vset.pattern.permute.xlu0 4
      %159 = vperm.xlu0 %158, %v89
      %v160 = vpop.permute.xlu0 %159
      %161 = vset.pattern.permute.xlu0 4
      %162 = vperm.xlu0 %161, %v90
      %v163 = vpop.permute.xlu0 %162
      %164 = vset.pattern.permute.xlu0 4
      %165 = vperm.xlu0 %164, %v91
      %v166 = vpop.permute.xlu0 %165
      %167 = vset.pattern.permute.xlu0 4
      %168 = vperm.xlu0 %167, %v92
      %v169 = vpop.permute.xlu0 %168
      %170 = vset.pattern.permute.xlu0 4
      %171 = vperm.xlu0 %170, %v93
      %v172 = vpop.permute.xlu0 %171
      %173 = vset.pattern.permute.xlu0 4
      %174 = vperm.xlu0 %173, %v94
      %v175 = vpop.permute.xlu0 %174
      %176 = vset.pattern.permute.xlu0 4
      %177 = vperm.xlu0 %176, %v95
      %v178 = vpop.permute.xlu0 %177
      %179 = vset.pattern.permute.xlu0 4
      %180 = vperm.xlu0 %179, %v96
      %v181 = vpop.permute.xlu0 %180
      %182 = vset.pattern.permute.xlu0 4
      %183 = vperm.xlu0 %182, %v97
      %v184 = vpop.permute.xlu0 %183
      %185 = vset.pattern.permute.xlu0 4
      %186 = vperm.xlu0 %185, %v98
      %v187 = vpop.permute.xlu0 %186
      %188 = vset.pattern.permute.xlu0 4
      %189 = vperm.xlu0 %188, %v99
      %v190 = vpop.permute.xlu0 %189
      %191 = vset.pattern.permute.xlu0 4
      %192 = vperm.xlu0 %191, %v100
      %v193 = vpop.permute.xlu0 %192
      %194 = vset.pattern.permute.xlu0 4
      %195 = vperm.xlu0 %194, %v101
      %v196 = vpop.permute.xlu0 %195
      %197 = vset.pattern.permute.xlu0 4
      %198 = vperm.xlu0 %197, %v102
      %v199 = vpop.permute.xlu0 %198
      %200 = vset.pattern.permute.xlu0 4
      %201 = vperm.xlu0 %200, %v103
      %v202 = vpop.permute.xlu0 %201
      %203 = vset.pattern.permute.xlu0 4
      %204 = vperm.xlu0 %203, %v104
      %v205 = vpop.permute.xlu0 %204
      %206 = vset.pattern.permute.xlu0 4
      %207 = vperm.xlu0 %206, %v105
      %v208 = vpop.permute.xlu0 %207
      %vm209 = vcmp.eq.s32.totalorder %v111, %v115
      %vm210 = vcmp.eq.s32.totalorder %v112, %v115
      %vm211 = vcmp.eq.s32.totalorder %v111, %v118
      %vm212 = vcmp.eq.s32.totalorder %v112, %v118
      %vm213 = vcmp.eq.s32.totalorder %v111, %v121
      %vm214 = vcmp.eq.s32.totalorder %v112, %v121
      %vm215 = vcmp.eq.s32.totalorder %v111, %v124
      %vm216 = vcmp.eq.s32.totalorder %v112, %v124
      %vm217 = vcmp.eq.s32.totalorder %v111, %v127
      %vm218 = vcmp.eq.s32.totalorder %v112, %v127
      %vm219 = vcmp.eq.s32.totalorder %v111, %v130
      %vm220 = vcmp.eq.s32.totalorder %v112, %v130
      %vm221 = vcmp.eq.s32.totalorder %v111, %v133
      %vm222 = vcmp.eq.s32.totalorder %v112, %v133
      %vm223 = vcmp.eq.s32.totalorder %v111, %v136
      %vm224 = vcmp.eq.s32.totalorder %v112, %v136
      %vm225 = vcmp.eq.s32.totalorder %v111, %v139
      %vm226 = vcmp.eq.s32.totalorder %v112, %v139
      %vm227 = vcmp.eq.s32.totalorder %v111, %v142
      %vm228 = vcmp.eq.s32.totalorder %v112, %v142
      %vm229 = vcmp.eq.s32.totalorder %v111, %v145
      %vm230 = vcmp.eq.s32.totalorder %v112, %v145
      %vm231 = vcmp.eq.s32.totalorder %v111, %v148
      %vm232 = vcmp.eq.s32.totalorder %v112, %v148
      %vm233 = vcmp.eq.s32.totalorder %v111, %v151
      %vm234 = vcmp.eq.s32.totalorder %v112, %v151
      %vm235 = vcmp.eq.s32.totalorder %v111, %v154
      %vm236 = vcmp.eq.s32.totalorder %v112, %v154
      %vm237 = vcmp.eq.s32.totalorder %v111, %v157
      %vm238 = vcmp.eq.s32.totalorder %v112, %v157
      %vm239 = vcmp.eq.s32.totalorder %v111, %v160
      %vm240 = vcmp.eq.s32.totalorder %v112, %v160
      %vm241 = vcmp.eq.s32.totalorder %v111, %v163
      %vm242 = vcmp.eq.s32.totalorder %v112, %v163
      %vm243 = vcmp.eq.s32.totalorder %v111, %v166
      %vm244 = vcmp.eq.s32.totalorder %v112, %v166
      %vm245 = vcmp.eq.s32.totalorder %v111, %v169
      %vm246 = vcmp.eq.s32.totalorder %v112, %v169
      %vm247 = vcmp.eq.s32.totalorder %v111, %v172
      %vm248 = vcmp.eq.s32.totalorder %v112, %v172
      %vm249 = vcmp.eq.s32.totalorder %v111, %v175
      %vm250 = vcmp.eq.s32.totalorder %v112, %v175
      %vm251 = vcmp.eq.s32.totalorder %v111, %v178
      %vm252 = vcmp.eq.s32.totalorder %v112, %v178
      %vm253 = vcmp.eq.s32.totalorder %v111, %v181
      %vm254 = vcmp.eq.s32.totalorder %v112, %v181
      %vm255 = vcmp.eq.s32.totalorder %v111, %v184
      %vm256 = vcmp.eq.s32.totalorder %v112, %v184
      %vm257 = vcmp.eq.s32.totalorder %v111, %v187
      %vm258 = vcmp.eq.s32.totalorder %v112, %v187
      %vm259 = vcmp.eq.s32.totalorder %v111, %v190
      %vm260 = vcmp.eq.s32.totalorder %v112, %v190
      %vm261 = vcmp.eq.s32.totalorder %v111, %v193
      %vm262 = vcmp.eq.s32.totalorder %v112, %v193
      %vm263 = vcmp.eq.s32.totalorder %v111, %v196
      %vm264 = vcmp.eq.s32.totalorder %v112, %v196
      %vm265 = vcmp.eq.s32.totalorder %v111, %v199
      %vm266 = vcmp.eq.s32.totalorder %v112, %v199
      %vm267 = vcmp.eq.s32.totalorder %v111, %v202
      %vm268 = vcmp.eq.s32.totalorder %v112, %v202
      %vm269 = vcmp.eq.s32.totalorder %v111, %v205
      %vm270 = vcmp.eq.s32.totalorder %v112, %v205
      %vm271 = vcmp.eq.s32.totalorder %v111, %v208
      %vm272 = vcmp.eq.s32.totalorder %v112, %v208
      %v273 = vsel %vm209, 1, 0
      %v274 = vsel %vm210, 1, 0
      %v275 = vsel %vm211, 1, 0
      %v276 = vsel %vm212, 1, 0
      %v277 = vsel %vm213, 1, 0
      %v278 = vsel %vm214, 1, 0
      %v279 = vsel %vm215, 1, 0
      %v280 = vsel %vm216, 1, 0
      %v281 = vsel %vm217, 1, 0
      %v282 = vsel %vm218, 1, 0
      %v283 = vsel %vm219, 1, 0
      %v284 = vsel %vm220, 1, 0
      %v285 = vsel %vm221, 1, 0
      %v286 = vsel %vm222, 1, 0
      %v287 = vsel %vm223, 1, 0
      %v288 = vsel %vm224, 1, 0
      %v289 = vsel %vm225, 1, 0
      %v290 = vsel %vm226, 1, 0
      %v291 = vsel %vm227, 1, 0
      %v292 = vsel %vm228, 1, 0
      %v293 = vsel %vm229, 1, 0
      %v294 = vsel %vm230, 1, 0
      %v295 = vsel %vm231, 1, 0
      %v296 = vsel %vm232, 1, 0
      %v297 = vsel %vm233, 1, 0
      %v298 = vsel %vm234, 1, 0
      %v299 = vsel %vm235, 1, 0
      %v300 = vsel %vm236, 1, 0
      %v301 = vsel %vm237, 1, 0
      %v302 = vsel %vm238, 1, 0
      %v303 = vsel %vm239, 1, 0
      %v304 = vsel %vm240, 1, 0
      %v305 = vsel %vm241, 1, 0
      %v306 = vsel %vm242, 1, 0
      %v307 = vsel %vm243, 1, 0
      %v308 = vsel %vm244, 1, 0
      %v309 = vsel %vm245, 1, 0
      %v310 = vsel %vm246, 1, 0
      %v311 = vsel %vm247, 1, 0
      %v312 = vsel %vm248, 1, 0
      %v313 = vsel %vm249, 1, 0
      %v314 = vsel %vm250, 1, 0
      %v315 = vsel %vm251, 1, 0
      %v316 = vsel %vm252, 1, 0
      %v317 = vsel %vm253, 1, 0
      %v318 = vsel %vm254, 1, 0
      %v319 = vsel %vm255, 1, 0
      %v320 = vsel %vm256, 1, 0
      %v321 = vsel %vm257, 1, 0
      %v322 = vsel %vm258, 1, 0
      %v323 = vsel %vm259, 1, 0
      %v324 = vsel %vm260, 1, 0
      %v325 = vsel %vm261, 1, 0
      %v326 = vsel %vm262, 1, 0
      %v327 = vsel %vm263, 1, 0
      %v328 = vsel %vm264, 1, 0
      %v329 = vsel %vm265, 1, 0
      %v330 = vsel %vm266, 1, 0
      %v331 = vsel %vm267, 1, 0
      %v332 = vsel %vm268, 1, 0
      %v333 = vsel %vm269, 1, 0
      %v334 = vsel %vm270, 1, 0
      %v335 = vsel %vm271, 1, 0
      %v336 = vsel %vm272, 1, 0
      %v337 = vcvt.s32.f32 %v273
      %v338 = vcvt.s32.f32 %v274
      %v339 = vcvt.s32.f32 %v275
      %v340 = vcvt.s32.f32 %v276
      %v341 = vcvt.s32.f32 %v277
      %v342 = vcvt.s32.f32 %v278
      %v343 = vcvt.s32.f32 %v279
      %v344 = vcvt.s32.f32 %v280
      %v345 = vcvt.s32.f32 %v281
      %v346 = vcvt.s32.f32 %v282
      %v347 = vcvt.s32.f32 %v283
      %v348 = vcvt.s32.f32 %v284
      %v349 = vcvt.s32.f32 %v285
      %v350 = vcvt.s32.f32 %v286
      %v351 = vcvt.s32.f32 %v287
      %v352 = vcvt.s32.f32 %v288
      %v353 = vcvt.s32.f32 %v289
      %v354 = vcvt.s32.f32 %v290
      %v355 = vcvt.s32.f32 %v291
      %v356 = vcvt.s32.f32 %v292
      %v357 = vcvt.s32.f32 %v293
      %v358 = vcvt.s32.f32 %v294
      %v359 = vcvt.s32.f32 %v295
      %v360 = vcvt.s32.f32 %v296
      %v361 = vcvt.s32.f32 %v297
      %v362 = vcvt.s32.f32 %v298
      %v363 = vcvt.s32.f32 %v299
      %v364 = vcvt.s32.f32 %v300
      %v365 = vcvt.s32.f32 %v301
      %v366 = vcvt.s32.f32 %v302
      %v367 = vcvt.s32.f32 %v303
      %v368 = vcvt.s32.f32 %v304
      %v369 = vcvt.s32.f32 %v305
      %v370 = vcvt.s32.f32 %v306
      %v371 = vcvt.s32.f32 %v307
      %v372 = vcvt.s32.f32 %v308
      %v373 = vcvt.s32.f32 %v309
      %v374 = vcvt.s32.f32 %v310
      %v375 = vcvt.s32.f32 %v311
      %v376 = vcvt.s32.f32 %v312
      %v377 = vcvt.s32.f32 %v313
      %v378 = vcvt.s32.f32 %v314
      %v379 = vcvt.s32.f32 %v315
      %v380 = vcvt.s32.f32 %v316
      %v381 = vcvt.s32.f32 %v317
      %v382 = vcvt.s32.f32 %v318
      %v383 = vcvt.s32.f32 %v319
      %v384 = vcvt.s32.f32 %v320
      %v385 = vcvt.s32.f32 %v321
      %v386 = vcvt.s32.f32 %v322
      %v387 = vcvt.s32.f32 %v323
      %v388 = vcvt.s32.f32 %v324
      %v389 = vcvt.s32.f32 %v325
      %v390 = vcvt.s32.f32 %v326
      %v391 = vcvt.s32.f32 %v327
      %v392 = vcvt.s32.f32 %v328
      %v393 = vcvt.s32.f32 %v329
      %v394 = vcvt.s32.f32 %v330
      %v395 = vcvt.s32.f32 %v331
      %v396 = vcvt.s32.f32 %v332
      %v397 = vcvt.s32.f32 %v333
      %v398 = vcvt.s32.f32 %v334
      %v399 = vcvt.s32.f32 %v335
      %v400 = vcvt.s32.f32 %v336
      %v401 = vpack.c.bf16 %v339, %v337
      %v402 = vpack.c.bf16 %v340, %v338
      %v403 = vpack.c.bf16 %v343, %v341
      %v404 = vpack.c.bf16 %v344, %v342
      %v405 = vpack.c.bf16 %v347, %v345
      %v406 = vpack.c.bf16 %v348, %v346
      %v407 = vpack.c.bf16 %v351, %v349
      %v408 = vpack.c.bf16 %v352, %v350
      %v409 = vpack.c.bf16 %v355, %v353
      %v410 = vpack.c.bf16 %v356, %v354
      %v411 = vpack.c.bf16 %v359, %v357
      %v412 = vpack.c.bf16 %v360, %v358
      %v413 = vpack.c.bf16 %v363, %v361
      %v414 = vpack.c.bf16 %v364, %v362
      %v415 = vpack.c.bf16 %v367, %v365
      %v416 = vpack.c.bf16 %v368, %v366
      %v417 = vpack.c.bf16 %v371, %v369
      %v418 = vpack.c.bf16 %v372, %v370
      %v419 = vpack.c.bf16 %v375, %v373
      %v420 = vpack.c.bf16 %v376, %v374
      %v421 = vpack.c.bf16 %v379, %v377
      %v422 = vpack.c.bf16 %v380, %v378
      %v423 = vpack.c.bf16 %v383, %v381
      %v424 = vpack.c.bf16 %v384, %v382
      %v425 = vpack.c.bf16 %v387, %v385
      %v426 = vpack.c.bf16 %v388, %v386
      %v427 = vpack.c.bf16 %v391, %v389
      %v428 = vpack.c.bf16 %v392, %v390
      %v429 = vpack.c.bf16 %v395, %v393
      %v430 = vpack.c.bf16 %v396, %v394
      %v431 = vpack.c.bf16 %v399, %v397
      %v432 = vpack.c.bf16 %v400, %v398
      %v433 = vld [vmem:[%s1] sm:$0xf]
      %v434 = vld [vmem:[%s1 + $0x4] sm:$0xf]
      %v435 = vld [vmem:[%s1 + $0x8] sm:$0xf]
      %v436 = vld [vmem:[%s1 + $0xc] sm:$0xf]
      %v437 = vld [vmem:[%s1 + $0x10] sm:$0xf]
      %v438 = vld [vmem:[%s1 + $0x14] sm:$0xf]
      %v439 = vld [vmem:[%s1 + $0x18] sm:$0xf]
      %v440 = vld [vmem:[%s1 + $0x1c] sm:$0xf]
      %v441 = vld [vmem:[%s1 + $0x20] sm:$0xf]
      %v442 = vld [vmem:[%s1 + $0x24] sm:$0xf]
      %v443 = vld [vmem:[%s1 + $0x28] sm:$0xf]
      %v444 = vld [vmem:[%s1 + $0x2c] sm:$0xf]
      %v445 = vld [vmem:[%s1 + $0x30] sm:$0xf]
      %v446 = vld [vmem:[%s1 + $0x34] sm:$0xf]
      %v447 = vld [vmem:[%s1 + $0x38] sm:$0xf]
      %v448 = vld [vmem:[%s1 + $0x3c] sm:$0xf]
      %v449 = vld [vmem:[%s1 + $0x40] sm:$0xf]
      %v450 = vld [vmem:[%s1 + $0x44] sm:$0xf]
      %v451 = vld [vmem:[%s1 + $0x48] sm:$0xf]
      %v452 = vld [vmem:[%s1 + $0x4c] sm:$0xf]
      %v453 = vld [vmem:[%s1 + $0x50] sm:$0xf]
      %v454 = vld [vmem:[%s1 + $0x54] sm:$0xf]
      %v455 = vld [vmem:[%s1 + $0x58] sm:$0xf]
      %v456 = vld [vmem:[%s1 + $0x5c] sm:$0xf]
      %v457 = vld [vmem:[%s1 + $0x60] sm:$0xf]
      %v458 = vld [vmem:[%s1 + $0x64] sm:$0xf]
      %v459 = vld [vmem:[%s1 + $0x68] sm:$0xf]
      %v460 = vld [vmem:[%s1 + $0x6c] sm:$0xf]
      %v461 = vld [vmem:[%s1 + $0x70] sm:$0xf]
      %v462 = vld [vmem:[%s1 + $0x74] sm:$0xf]
      %v463 = vld [vmem:[%s1 + $0x78] sm:$0xf]
      %v464 = vld [vmem:[%s1 + $0x7c] sm:$0xf]
      %v497 = vunpack.c.l.b16 %v433
      %v498 = vunpack.c.l.b16 %v434
      %v499 = vunpack.c.l.b16 %v435
      %v500 = vunpack.c.l.b16 %v436
      %v501 = vunpack.c.l.b16 %v437
      %v502 = vunpack.c.l.b16 %v438
      %v503 = vunpack.c.l.b16 %v439
      %v504 = vunpack.c.l.b16 %v440
      %v505 = vunpack.c.l.b16 %v441
      %v506 = vunpack.c.l.b16 %v442
      %v507 = vunpack.c.l.b16 %v443
      %v508 = vunpack.c.l.b16 %v444
      %v509 = vunpack.c.l.b16 %v445
      %v510 = vunpack.c.l.b16 %v446
      %v511 = vunpack.c.l.b16 %v447
      %v512 = vunpack.c.l.b16 %v448
      %v513 = vunpack.c.l.b16 %v449
      %v514 = vunpack.c.l.b16 %v450
      %v515 = vunpack.c.l.b16 %v451
      %v516 = vunpack.c.l.b16 %v452
      %v517 = vunpack.c.l.b16 %v453
      %v518 = vunpack.c.l.b16 %v454
      %v519 = vunpack.c.l.b16 %v455
      %v520 = vunpack.c.l.b16 %v456
      %v521 = vunpack.c.l.b16 %v457
      %v522 = vunpack.c.l.b16 %v458
      %v523 = vunpack.c.l.b16 %v459
      %v524 = vunpack.c.l.b16 %v460
      %v525 = vunpack.c.l.b16 %v461
      %v526 = vunpack.c.l.b16 %v462
      %v527 = vunpack.c.l.b16 %v463
      %v528 = vunpack.c.l.b16 %v464
      %v529 = vpack.c.b16 %v498, %v497
      %v530 = vpack.c.b16 %v500, %v499
      %v531 = vpack.c.b16 %v502, %v501
      %v532 = vpack.c.b16 %v504, %v503
      %v533 = vpack.c.b16 %v506, %v505
      %v534 = vpack.c.b16 %v508, %v507
      %v535 = vpack.c.b16 %v510, %v509
      %v536 = vpack.c.b16 %v512, %v511
      %v537 = vpack.c.b16 %v514, %v513
      %v538 = vpack.c.b16 %v516, %v515
      %v539 = vpack.c.b16 %v518, %v517
      %v540 = vpack.c.b16 %v520, %v519
      %v541 = vpack.c.b16 %v522, %v521
      %v542 = vpack.c.b16 %v524, %v523
      %v543 = vpack.c.b16 %v526, %v525
      %v544 = vpack.c.b16 %v528, %v527
      %561 = vmatprep.subr.bf16.mxu0 0
      %562 = vmatpush1.bf16.msra.mxu0 %v529
      %563 = vmatprep.subr.bf16.mxu0 0
      %564 = vmatpush1.bf16.msra.mxu0 %v530
      %565 = vmatprep.subr.bf16.mxu0 0
      %566 = vmatpush1.bf16.msra.mxu0 %v531
      %567 = vmatprep.subr.bf16.mxu0 0
      %568 = vmatpush1.bf16.msra.mxu0 %v532
      %569 = vmatprep.subr.bf16.mxu0 0
      %570 = vmatpush1.bf16.msra.mxu0 %v533
      %571 = vmatprep.subr.bf16.mxu0 0
      %572 = vmatpush1.bf16.msra.mxu0 %v534
      %573 = vmatprep.subr.bf16.mxu0 0
      %574 = vmatpush1.bf16.msra.mxu0 %v535
      %575 = vmatprep.subr.bf16.mxu0 0
      %576 = vmatpush1.bf16.msra.mxu0 %v536
      %577 = vmatprep.subr.bf16.mxu0 0
      %578 = vmatpush1.bf16.msra.mxu0 %v537
      %579 = vmatprep.subr.bf16.mxu0 0
      %580 = vmatpush1.bf16.msra.mxu0 %v538
      %581 = vmatprep.subr.bf16.mxu0 0
      %582 = vmatpush1.bf16.msra.mxu0 %v539
      %583 = vmatprep.subr.bf16.mxu0 0
      %584 = vmatpush1.bf16.msra.mxu0 %v540
      %585 = vmatprep.subr.bf16.mxu0 0
      %586 = vmatpush1.bf16.msra.mxu0 %v541
      %587 = vmatprep.subr.bf16.mxu0 0
      %588 = vmatpush1.bf16.msra.mxu0 %v542
      %589 = vmatprep.subr.bf16.mxu0 0
      %590 = vmatpush1.bf16.msra.mxu0 %v543
      %591 = vmatprep.subr.bf16.mxu0 0
      %592 = vmatpush1.bf16.msra.mxu0 %v544
      %593 = vmatprep.mubr.bf16.mxu0 %v402
      %594 = vmatmul.mubr.bf16.gmra.mrb[0].mxu0 %v401
      %v595 = vpop.f32.mrb[0].mxu0
      %v596 = vadd.f32 0.0, %v595
      %v597 = vpop.f32.mrb[0].mxu0
      %v598 = vpop.f32.mrb[0].mxu0
      %v599 = vadd.f32 0.0, %v598
      %v600 = vpop.f32.mrb[0].mxu0
      %601 = vmatprep.mubr.bf16.mxu0 %v404
      %602 = vmatmul.mubr.bf16.gmra.mrb[0].mxu0 %v403
      %v603 = vpop.f32.mrb[0].mxu0
      %v604 = vadd.f32 0.0, %v603
      %v605 = vpop.f32.mrb[0].mxu0
      %v606 = vpop.f32.mrb[0].mxu0
      %v607 = vadd.f32 0.0, %v606
      %v608 = vpop.f32.mrb[0].mxu0
      %609 = vmatprep.mubr.bf16.mxu0 %v406
      %610 = vmatmul.mubr.bf16.gmra.mrb[0].mxu0 %v405
      %v611 = vpop.f32.mrb[0].mxu0
      %v612 = vadd.f32 0.0, %v611
      %v613 = vpop.f32.mrb[0].mxu0
      %v614 = vpop.f32.mrb[0].mxu0
      %v615 = vadd.f32 0.0, %v614
      %v616 = vpop.f32.mrb[0].mxu0
      %617 = vmatprep.mubr.bf16.mxu0 %v408
      %618 = vmatmul.mubr.bf16.gmra.mrb[0].mxu0 %v407
      %v619 = vpop.f32.mrb[0].mxu0
      %v620 = vadd.f32 0.0, %v619
      %v621 = vpop.f32.mrb[0].mxu0
      %v622 = vpop.f32.mrb[0].mxu0
      %v623 = vadd.f32 0.0, %v622
      %v624 = vpop.f32.mrb[0].mxu0
      %625 = vmatprep.mubr.bf16.mxu0 %v410
      %626 = vmatmul.mubr.bf16.gmra.mrb[0].mxu0 %v409
      %v627 = vpop.f32.mrb[0].mxu0
      %v628 = vadd.f32 0.0, %v627
      %v629 = vpop.f32.mrb[0].mxu0
      %v630 = vpop.f32.mrb[0].mxu0
      %v631 = vadd.f32 0.0, %v630
      %v632 = vpop.f32.mrb[0].mxu0
      %633 = vmatprep.mubr.bf16.mxu0 %v412
      %634 = vmatmul.mubr.bf16.gmra.mrb[0].mxu0 %v411
      %v635 = vpop.f32.mrb[0].mxu0
      %v636 = vadd.f32 0.0, %v635
      %v637 = vpop.f32.mrb[0].mxu0
      %v638 = vpop.f32.mrb[0].mxu0
      %v639 = vadd.f32 0.0, %v638
      %v640 = vpop.f32.mrb[0].mxu0
      %641 = vmatprep.mubr.bf16.mxu0 %v414
      %642 = vmatmul.mubr.bf16.gmra.mrb[0].mxu0 %v413
      %v643 = vpop.f32.mrb[0].mxu0
      %v644 = vadd.f32 0.0, %v643
      %v645 = vpop.f32.mrb[0].mxu0
      %v646 = vpop.f32.mrb[0].mxu0
      %v647 = vadd.f32 0.0, %v646
      %v648 = vpop.f32.mrb[0].mxu0
      %649 = vmatprep.mubr.bf16.mxu0 %v416
      %650 = vmatmul.mubr.bf16.gmra.mrb[0].mxu0 %v415
      %v651 = vpop.f32.mrb[0].mxu0
      %v652 = vadd.f32 0.0, %v651
      %v653 = vpop.f32.mrb[0].mxu0
      %v654 = vpop.f32.mrb[0].mxu0
      %v655 = vadd.f32 0.0, %v654
      %v656 = vpop.f32.mrb[0].mxu0
      %657 = vmatprep.mubr.bf16.mxu0 %v418
      %658 = vmatmul.mubr.bf16.gmra.mrb[0].mxu0 %v417
      %v659 = vpop.f32.mrb[0].mxu0
      %v660 = vadd.f32 0.0, %v659
      %v661 = vpop.f32.mrb[0].mxu0
      %v662 = vpop.f32.mrb[0].mxu0
      %v663 = vadd.f32 0.0, %v662
      %v664 = vpop.f32.mrb[0].mxu0
      %665 = vmatprep.mubr.bf16.mxu0 %v420
      %666 = vmatmul.mubr.bf16.gmra.mrb[0].mxu0 %v419
      %v667 = vpop.f32.mrb[0].mxu0
      %v668 = vadd.f32 0.0, %v667
      %v669 = vpop.f32.mrb[0].mxu0
      %v670 = vpop.f32.mrb[0].mxu0
      %v671 = vadd.f32 0.0, %v670
      %v672 = vpop.f32.mrb[0].mxu0
      %673 = vmatprep.mubr.bf16.mxu0 %v422
      %674 = vmatmul.mubr.bf16.gmra.mrb[0].mxu0 %v421
      %v675 = vpop.f32.mrb[0].mxu0
      %v676 = vadd.f32 0.0, %v675
      %v677 = vpop.f32.mrb[0].mxu0
      %v678 = vpop.f32.mrb[0].mxu0
      %v679 = vadd.f32 0.0, %v678
      %v680 = vpop.f32.mrb[0].mxu0
      %681 = vmatprep.mubr.bf16.mxu0 %v424
      %682 = vmatmul.mubr.bf16.gmra.mrb[0].mxu0 %v423
      %v683 = vpop.f32.mrb[0].mxu0
      %v684 = vadd.f32 0.0, %v683
      %v685 = vpop.f32.mrb[0].mxu0
      %v686 = vpop.f32.mrb[0].mxu0
      %v687 = vadd.f32 0.0, %v686
      %v688 = vpop.f32.mrb[0].mxu0
      %689 = vmatprep.mubr.bf16.mxu0 %v426
      %690 = vmatmul.mubr.bf16.gmra.mrb[0].mxu0 %v425
      %v691 = vpop.f32.mrb[0].mxu0
      %v692 = vadd.f32 0.0, %v691
      %v693 = vpop.f32.mrb[0].mxu0
      %v694 = vpop.f32.mrb[0].mxu0
      %v695 = vadd.f32 0.0, %v694
      %v696 = vpop.f32.mrb[0].mxu0
      %697 = vmatprep.mubr.bf16.mxu0 %v428
      %698 = vmatmul.mubr.bf16.gmra.mrb[0].mxu0 %v427
      %v699 = vpop.f32.mrb[0].mxu0
      %v700 = vadd.f32 0.0, %v699
      %v701 = vpop.f32.mrb[0].mxu0
      %v702 = vpop.f32.mrb[0].mxu0
      %v703 = vadd.f32 0.0, %v702
      %v704 = vpop.f32.mrb[0].mxu0
      %705 = vmatprep.mubr.bf16.mxu0 %v430
      %706 = vmatmul.mubr.bf16.gmra.mrb[0].mxu0 %v429
      %v707 = vpop.f32.mrb[0].mxu0
      %v708 = vadd.f32 0.0, %v707
      %v709 = vpop.f32.mrb[0].mxu0
      %v710 = vpop.f32.mrb[0].mxu0
      %v711 = vadd.f32 0.0, %v710
      %v712 = vpop.f32.mrb[0].mxu0
      %713 = vmatprep.mubr.bf16.mxu0 %v432
      %714 = vmatmul.mubr.bf16.gmra.mrb[0].mxu0 %v431
      %v715 = vpop.f32.mrb[0].mxu0
      %v716 = vadd.f32 0.0, %v715
      %v717 = vpop.f32.mrb[0].mxu0
      %v718 = vpop.f32.mrb[0].mxu0
      %v719 = vadd.f32 0.0, %v718
      %v720 = vpop.f32.mrb[0].mxu0
      %721 = vdwg.mxu0
      %723 = vset.pattern.permute.xlu0 3
      %724 = vperm.xlu0 %723, %v42
      %v725 = vpop.permute.xlu0 %724
      %728 = vset.pattern.permute.xlu0 3
      %729 = vperm.xlu0 %728, %v43
      %v730 = vpop.permute.xlu0 %729
      %733 = vset.pattern.permute.xlu0 3
      %734 = vperm.xlu0 %733, %v44
      %v735 = vpop.permute.xlu0 %734
      %738 = vset.pattern.permute.xlu0 3
      %739 = vperm.xlu0 %738, %v45
      %v740 = vpop.permute.xlu0 %739
      %743 = vset.pattern.permute.xlu0 3
      %744 = vperm.xlu0 %743, %v46
      %v745 = vpop.permute.xlu0 %744
      %748 = vset.pattern.permute.xlu0 3
      %749 = vperm.xlu0 %748, %v47
      %v750 = vpop.permute.xlu0 %749
      %753 = vset.pattern.permute.xlu0 3
      %754 = vperm.xlu0 %753, %v48
      %v755 = vpop.permute.xlu0 %754
      %758 = vset.pattern.permute.xlu0 3
      %759 = vperm.xlu0 %758, %v49
      %v760 = vpop.permute.xlu0 %759
      %763 = vset.pattern.permute.xlu0 3
      %764 = vperm.xlu0 %763, %v50
      %v765 = vpop.permute.xlu0 %764
      %768 = vset.pattern.permute.xlu0 3
      %769 = vperm.xlu0 %768, %v51
      %v770 = vpop.permute.xlu0 %769
      %773 = vset.pattern.permute.xlu0 3
      %774 = vperm.xlu0 %773, %v52
      %v775 = vpop.permute.xlu0 %774
      %778 = vset.pattern.permute.xlu0 3
      %779 = vperm.xlu0 %778, %v53
      %v780 = vpop.permute.xlu0 %779
      %783 = vset.pattern.permute.xlu0 3
      %784 = vperm.xlu0 %783, %v54
      %v785 = vpop.permute.xlu0 %784
      %788 = vset.pattern.permute.xlu0 3
      %789 = vperm.xlu0 %788, %v55
      %v790 = vpop.permute.xlu0 %789
      %793 = vset.pattern.permute.xlu0 3
      %794 = vperm.xlu0 %793, %v56
      %v795 = vpop.permute.xlu0 %794
      %798 = vset.pattern.permute.xlu0 3
      %799 = vperm.xlu0 %798, %v57
      %v800 = vpop.permute.xlu0 %799
      %803 = vset.pattern.permute.xlu0 3
      %804 = vperm.xlu0 %803, %v58
      %v805 = vpop.permute.xlu0 %804
      %808 = vset.pattern.permute.xlu0 3
      %809 = vperm.xlu0 %808, %v59
      %v810 = vpop.permute.xlu0 %809
      %813 = vset.pattern.permute.xlu0 3
      %814 = vperm.xlu0 %813, %v60
      %v815 = vpop.permute.xlu0 %814
      %818 = vset.pattern.permute.xlu0 3
      %819 = vperm.xlu0 %818, %v61
      %v820 = vpop.permute.xlu0 %819
      %823 = vset.pattern.permute.xlu0 3
      %824 = vperm.xlu0 %823, %v62
      %v825 = vpop.permute.xlu0 %824
      %828 = vset.pattern.permute.xlu0 3
      %829 = vperm.xlu0 %828, %v63
      %v830 = vpop.permute.xlu0 %829
      %833 = vset.pattern.permute.xlu0 3
      %834 = vperm.xlu0 %833, %v64
      %v835 = vpop.permute.xlu0 %834
      %838 = vset.pattern.permute.xlu0 3
      %839 = vperm.xlu0 %838, %v65
      %v840 = vpop.permute.xlu0 %839
      %843 = vset.pattern.permute.xlu0 3
      %844 = vperm.xlu0 %843, %v66
      %v845 = vpop.permute.xlu0 %844
      %848 = vset.pattern.permute.xlu0 3
      %849 = vperm.xlu0 %848, %v67
      %v850 = vpop.permute.xlu0 %849
      %853 = vset.pattern.permute.xlu0 3
      %854 = vperm.xlu0 %853, %v68
      %v855 = vpop.permute.xlu0 %854
      %858 = vset.pattern.permute.xlu0 3
      %859 = vperm.xlu0 %858, %v69
      %v860 = vpop.permute.xlu0 %859
      %863 = vset.pattern.permute.xlu0 3
      %864 = vperm.xlu0 %863, %v70
      %v865 = vpop.permute.xlu0 %864
      %868 = vset.pattern.permute.xlu0 3
      %869 = vperm.xlu0 %868, %v71
      %v870 = vpop.permute.xlu0 %869
      %873 = vset.pattern.permute.xlu0 3
      %874 = vperm.xlu0 %873, %v72
      %v875 = vpop.permute.xlu0 %874
      %878 = vset.pattern.permute.xlu0 3
      %879 = vperm.xlu0 %878, %v73
      %v880 = vpop.permute.xlu0 %879
      %v882 = vmul.f32 %v596, %v725
      %v883 = vmul.f32 %v599, %v730
      %v884 = vmul.f32 %v604, %v735
      %v885 = vmul.f32 %v607, %v740
      %v886 = vmul.f32 %v612, %v745
      %v887 = vmul.f32 %v615, %v750
      %v888 = vmul.f32 %v620, %v755
      %v889 = vmul.f32 %v623, %v760
      %v890 = vmul.f32 %v628, %v765
      %v891 = vmul.f32 %v631, %v770
      %v892 = vmul.f32 %v636, %v775
      %v893 = vmul.f32 %v639, %v780
      %v894 = vmul.f32 %v644, %v785
      %v895 = vmul.f32 %v647, %v790
      %v896 = vmul.f32 %v652, %v795
      %v897 = vmul.f32 %v655, %v800
      %v898 = vmul.f32 %v660, %v805
      %v899 = vmul.f32 %v663, %v810
      %v900 = vmul.f32 %v668, %v815
      %v901 = vmul.f32 %v671, %v820
      %v902 = vmul.f32 %v676, %v825
      %v903 = vmul.f32 %v679, %v830
      %v904 = vmul.f32 %v684, %v835
      %v905 = vmul.f32 %v687, %v840
      %v906 = vmul.f32 %v692, %v845
      %v907 = vmul.f32 %v695, %v850
      %v908 = vmul.f32 %v700, %v855
      %v909 = vmul.f32 %v703, %v860
      %v910 = vmul.f32 %v708, %v865
      %v911 = vmul.f32 %v711, %v870
      %v912 = vmul.f32 %v716, %v875
      %v913 = vmul.f32 %v719, %v880
      %v914 = vpack.c.bf16 %v883, %v882
      %v915 = vpack.c.bf16 %v885, %v884
      %v916 = vpack.c.bf16 %v887, %v886
      %v917 = vpack.c.bf16 %v889, %v888
      %v918 = vpack.c.bf16 %v891, %v890
      %v919 = vpack.c.bf16 %v893, %v892
      %v920 = vpack.c.bf16 %v895, %v894
      %v921 = vpack.c.bf16 %v897, %v896
      %v922 = vpack.c.bf16 %v899, %v898
      %v923 = vpack.c.bf16 %v901, %v900
      %v924 = vpack.c.bf16 %v903, %v902
      %v925 = vpack.c.bf16 %v905, %v904
      %v926 = vpack.c.bf16 %v907, %v906
      %v927 = vpack.c.bf16 %v909, %v908
      %v928 = vpack.c.bf16 %v911, %v910
      %v929 = vpack.c.bf16 %v913, %v912
      %v930 = vld [vmem:[#allocation4] sm:$0xf]
      %v931 = vld [vmem:[#allocation4 + $0x4] sm:$0xf]
      %v932 = vld [vmem:[#allocation4 + $0x8] sm:$0xf]
      %v933 = vld [vmem:[#allocation4 + $0xc] sm:$0xf]
      %v934 = vld [vmem:[#allocation4 + $0x10] sm:$0xf]
      %v935 = vld [vmem:[#allocation4 + $0x14] sm:$0xf]
      %v936 = vld [vmem:[#allocation4 + $0x18] sm:$0xf]
      %v937 = vld [vmem:[#allocation4 + $0x1c] sm:$0xf]
      %v938 = vld [vmem:[#allocation4 + $0x20] sm:$0xf]
      %v939 = vld [vmem:[#allocation4 + $0x24] sm:$0xf]
      %v940 = vld [vmem:[#allocation4 + $0x28] sm:$0xf]
      %v941 = vld [vmem:[#allocation4 + $0x2c] sm:$0xf]
      %v942 = vld [vmem:[#allocation4 + $0x30] sm:$0xf]
      %v943 = vld [vmem:[#allocation4 + $0x34] sm:$0xf]
      %v944 = vld [vmem:[#allocation4 + $0x38] sm:$0xf]
      %v945 = vld [vmem:[#allocation4 + $0x3c] sm:$0xf]
      %v946 = vld [vmem:[%s3] sm:$0x1]
      %v948 = vlaneseq
      %v949 = vshrl.u32 %v948, 7
      %v950 = vsub.s32 0, %v949
      %v951 = vrot.slane %v946, %v950
      %v969 = vunpack.c.l.b16 %v930
      %v970 = vunpack.c.l.b16 %v931
      %v971 = vunpack.c.l.b16 %v932
      %v972 = vunpack.c.l.b16 %v933
      %v973 = vunpack.c.l.b16 %v934
      %v974 = vunpack.c.l.b16 %v935
      %v975 = vunpack.c.l.b16 %v936
      %v976 = vunpack.c.l.b16 %v937
      %v977 = vunpack.c.l.b16 %v938
      %v978 = vunpack.c.l.b16 %v939
      %v979 = vunpack.c.l.b16 %v940
      %v980 = vunpack.c.l.b16 %v941
      %v981 = vunpack.c.l.b16 %v942
      %v982 = vunpack.c.l.b16 %v943
      %v983 = vunpack.c.l.b16 %v944
      %v984 = vunpack.c.l.b16 %v945
      %v985 = vpack.c.b16 %v970, %v969
      %v986 = vpack.c.b16 %v972, %v971
      %v987 = vpack.c.b16 %v974, %v973
      %v988 = vpack.c.b16 %v976, %v975
      %v989 = vpack.c.b16 %v978, %v977
      %v990 = vpack.c.b16 %v980, %v979
      %v991 = vpack.c.b16 %v982, %v981
      %v992 = vpack.c.b16 %v984, %v983
      %1001 = vmatprep.subr.bf16.mxu0 0
      %1002 = vmatpush1.bf16.msra.mxu0 %v985
      %1003 = vmatprep.subr.bf16.mxu0 0
      %1004 = vmatpush1.bf16.msra.mxu0 %v986
      %1005 = vmatprep.subr.bf16.mxu0 0
      %1006 = vmatpush1.bf16.msra.mxu0 %v987
      %1007 = vmatprep.subr.bf16.mxu0 0
      %1008 = vmatpush1.bf16.msra.mxu0 %v988
      %1009 = vmatprep.subr.bf16.mxu0 0
      %1010 = vmatpush1.bf16.msra.mxu0 %v989
      %1011 = vmatprep.subr.bf16.mxu0 0
      %1012 = vmatpush1.bf16.msra.mxu0 %v990
      %1013 = vmatprep.subr.bf16.mxu0 0
      %1014 = vmatpush1.bf16.msra.mxu0 %v991
      %1015 = vmatprep.subr.bf16.mxu0 0
      %1016 = vmatpush1.bf16.msra.mxu0 %v992
      %1017 = vmatprep.subr.bf16.mxu0 0
      %1018 = vmatpush1.bf16.msra.mxu0 0
      %1019 = vmatprep.subr.bf16.mxu0 0
      %1020 = vmatpush1.bf16.msra.mxu0 0
      %1021 = vmatprep.subr.bf16.mxu0 0
      %1022 = vmatpush1.bf16.msra.mxu0 0
      %1023 = vmatprep.subr.bf16.mxu0 0
      %1024 = vmatpush1.bf16.msra.mxu0 0
      %1025 = vmatprep.subr.bf16.mxu0 0
      %1026 = vmatpush1.bf16.msra.mxu0 0
      %1027 = vmatprep.subr.bf16.mxu0 0
      %1028 = vmatpush1.bf16.msra.mxu0 0
      %1029 = vmatprep.subr.bf16.mxu0 0
      %1030 = vmatpush1.bf16.msra.mxu0 0
      %1031 = vmatprep.subr.bf16.mxu0 0
      %1032 = vmatpush1.bf16.msra.mxu0 0
      %1033 = vmatprep.mubr.bf16.mxu0 0
      %1034 = vmatmul.mubr.bf16.gmra.mrb[0].mxu0 %v914
      %v1035 = vpop.f32.mrb[0].mxu0
      %v1036 = vadd.f32 %v951, %v1035
      %v1037 = vpop.f32.mrb[0].mxu0
      %v1038 = vpop.f32.mrb[0].mxu0
      %v1039 = vadd.f32 %v951, %v1038
      %v1040 = vpop.f32.mrb[0].mxu0
      %1041 = vmatprep.mubr.bf16.mxu0 0
      %1042 = vmatmul.mubr.bf16.gmra.mrb[0].mxu0 %v915
      %v1043 = vpop.f32.mrb[0].mxu0
      %v1044 = vadd.f32 %v951, %v1043
      %v1045 = vpop.f32.mrb[0].mxu0
      %v1046 = vpop.f32.mrb[0].mxu0
      %v1047 = vadd.f32 %v951, %v1046
      %v1048 = vpop.f32.mrb[0].mxu0
      %1049 = vmatprep.mubr.bf16.mxu0 0
      %1050 = vmatmul.mubr.bf16.gmra.mrb[0].mxu0 %v916
      %v1051 = vpop.f32.mrb[0].mxu0
      %v1052 = vadd.f32 %v951, %v1051
      %v1053 = vpop.f32.mrb[0].mxu0
      %v1054 = vpop.f32.mrb[0].mxu0
      %v1055 = vadd.f32 %v951, %v1054
      %v1056 = vpop.f32.mrb[0].mxu0
      %1057 = vmatprep.mubr.bf16.mxu0 0
      %1058 = vmatmul.mubr.bf16.gmra.mrb[0].mxu0 %v917
      %v1059 = vpop.f32.mrb[0].mxu0
      %v1060 = vadd.f32 %v951, %v1059
      %v1061 = vpop.f32.mrb[0].mxu0
      %v1062 = vpop.f32.mrb[0].mxu0
      %v1063 = vadd.f32 %v951, %v1062
      %v1064 = vpop.f32.mrb[0].mxu0
      %1065 = vmatprep.mubr.bf16.mxu0 0
      %1066 = vmatmul.mubr.bf16.gmra.mrb[0].mxu0 %v918
      %v1067 = vpop.f32.mrb[0].mxu0
      %v1068 = vadd.f32 %v951, %v1067
      %v1069 = vpop.f32.mrb[0].mxu0
      %v1070 = vpop.f32.mrb[0].mxu0
      %v1071 = vadd.f32 %v951, %v1070
      %v1072 = vpop.f32.mrb[0].mxu0
      %1073 = vmatprep.mubr.bf16.mxu0 0
      %1074 = vmatmul.mubr.bf16.gmra.mrb[0].mxu0 %v919
      %v1075 = vpop.f32.mrb[0].mxu0
      %v1076 = vadd.f32 %v951, %v1075
      %v1077 = vpop.f32.mrb[0].mxu0
      %v1078 = vpop.f32.mrb[0].mxu0
      %v1079 = vadd.f32 %v951, %v1078
      %v1080 = vpop.f32.mrb[0].mxu0
      %1081 = vmatprep.mubr.bf16.mxu0 0
      %1082 = vmatmul.mubr.bf16.gmra.mrb[0].mxu0 %v920
      %v1083 = vpop.f32.mrb[0].mxu0
      %v1084 = vadd.f32 %v951, %v1083
      %v1085 = vpop.f32.mrb[0].mxu0
      %v1086 = vpop.f32.mrb[0].mxu0
      %v1087 = vadd.f32 %v951, %v1086
      %v1088 = vpop.f32.mrb[0].mxu0
      %1089 = vmatprep.mubr.bf16.mxu0 0
      %1090 = vmatmul.mubr.bf16.gmra.mrb[0].mxu0 %v921
      %v1091 = vpop.f32.mrb[0].mxu0
      %v1092 = vadd.f32 %v951, %v1091
      %v1093 = vpop.f32.mrb[0].mxu0
      %v1094 = vpop.f32.mrb[0].mxu0
      %v1095 = vadd.f32 %v951, %v1094
      %v1096 = vpop.f32.mrb[0].mxu0
      %1097 = vmatprep.mubr.bf16.mxu0 0
      %1098 = vmatmul.mubr.bf16.gmra.mrb[0].mxu0 %v922
      %v1099 = vpop.f32.mrb[0].mxu0
      %v1100 = vadd.f32 %v951, %v1099
      %v1101 = vpop.f32.mrb[0].mxu0
      %v1102 = vpop.f32.mrb[0].mxu0
      %v1103 = vadd.f32 %v951, %v1102
      %v1104 = vpop.f32.mrb[0].mxu0
      %1105 = vmatprep.mubr.bf16.mxu0 0
      %1106 = vmatmul.mubr.bf16.gmra.mrb[0].mxu0 %v923
      %v1107 = vpop.f32.mrb[0].mxu0
      %v1108 = vadd.f32 %v951, %v1107
      %v1109 = vpop.f32.mrb[0].mxu0
      %v1110 = vpop.f32.mrb[0].mxu0
      %v1111 = vadd.f32 %v951, %v1110
      %v1112 = vpop.f32.mrb[0].mxu0
      %1113 = vmatprep.mubr.bf16.mxu0 0
      %1114 = vmatmul.mubr.bf16.gmra.mrb[0].mxu0 %v924
      %v1115 = vpop.f32.mrb[0].mxu0
      %v1116 = vadd.f32 %v951, %v1115
      %v1117 = vpop.f32.mrb[0].mxu0
      %v1118 = vpop.f32.mrb[0].mxu0
      %v1119 = vadd.f32 %v951, %v1118
      %v1120 = vpop.f32.mrb[0].mxu0
      %1121 = vmatprep.mubr.bf16.mxu0 0
      %1122 = vmatmul.mubr.bf16.gmra.mrb[0].mxu0 %v925
      %v1123 = vpop.f32.mrb[0].mxu0
      %v1124 = vadd.f32 %v951, %v1123
      %v1125 = vpop.f32.mrb[0].mxu0
      %v1126 = vpop.f32.mrb[0].mxu0
      %v1127 = vadd.f32 %v951, %v1126
      %v1128 = vpop.f32.mrb[0].mxu0
      %1129 = vmatprep.mubr.bf16.mxu0 0
      %1130 = vmatmul.mubr.bf16.gmra.mrb[0].mxu0 %v926
      %v1131 = vpop.f32.mrb[0].mxu0
      %v1132 = vadd.f32 %v951, %v1131
      %v1133 = vpop.f32.mrb[0].mxu0
      %v1134 = vpop.f32.mrb[0].mxu0
      %v1135 = vadd.f32 %v951, %v1134
      %v1136 = vpop.f32.mrb[0].mxu0
      %1137 = vmatprep.mubr.bf16.mxu0 0
      %1138 = vmatmul.mubr.bf16.gmra.mrb[0].mxu0 %v927
      %v1139 = vpop.f32.mrb[0].mxu0
      %v1140 = vadd.f32 %v951, %v1139
      %v1141 = vpop.f32.mrb[0].mxu0
      %v1142 = vpop.f32.mrb[0].mxu0
      %v1143 = vadd.f32 %v951, %v1142
      %v1144 = vpop.f32.mrb[0].mxu0
      %1145 = vmatprep.mubr.bf16.mxu0 0
      %1146 = vmatmul.mubr.bf16.gmra.mrb[0].mxu0 %v928
      %v1147 = vpop.f32.mrb[0].mxu0
      %v1148 = vadd.f32 %v951, %v1147
      %v1149 = vpop.f32.mrb[0].mxu0
      %v1150 = vpop.f32.mrb[0].mxu0
      %v1151 = vadd.f32 %v951, %v1150
      %v1152 = vpop.f32.mrb[0].mxu0
      %1153 = vmatprep.mubr.bf16.mxu0 0
      %1154 = vmatmul.mubr.bf16.gmra.mrb[0].mxu0 %v929
      %v1155 = vpop.f32.mrb[0].mxu0
      %v1156 = vadd.f32 %v951, %v1155
      %v1157 = vpop.f32.mrb[0].mxu0
      %v1158 = vpop.f32.mrb[0].mxu0
      %v1159 = vadd.f32 %v951, %v1158
      %v1160 = vpop.f32.mrb[0].mxu0
      %1161 = vdwg.mxu0
      %v1162 = vmul.f32 %v1036, %v1036
      %v1163 = vmul.f32 %v1039, %v1039
      %v1164 = vmul.f32 %v1044, %v1044
      %v1165 = vmul.f32 %v1047, %v1047
      %v1166 = vmul.f32 %v1052, %v1052
      %v1167 = vmul.f32 %v1055, %v1055
      %v1168 = vmul.f32 %v1060, %v1060
      %v1169 = vmul.f32 %v1063, %v1063
      %v1170 = vmul.f32 %v1068, %v1068
      %v1171 = vmul.f32 %v1071, %v1071
      %v1172 = vmul.f32 %v1076, %v1076
      %v1173 = vmul.f32 %v1079, %v1079
      %v1174 = vmul.f32 %v1084, %v1084
      %v1175 = vmul.f32 %v1087, %v1087
      %v1176 = vmul.f32 %v1092, %v1092
      %v1177 = vmul.f32 %v1095, %v1095
      %v1178 = vmul.f32 %v1100, %v1100
      %v1179 = vmul.f32 %v1103, %v1103
      %v1180 = vmul.f32 %v1108, %v1108
      %v1181 = vmul.f32 %v1111, %v1111
      %v1182 = vmul.f32 %v1116, %v1116
      %v1183 = vmul.f32 %v1119, %v1119
      %v1184 = vmul.f32 %v1124, %v1124
      %v1185 = vmul.f32 %v1127, %v1127
      %v1186 = vmul.f32 %v1132, %v1132
      %v1187 = vmul.f32 %v1135, %v1135
      %v1188 = vmul.f32 %v1140, %v1140
      %v1189 = vmul.f32 %v1143, %v1143
      %v1190 = vmul.f32 %v1148, %v1148
      %v1191 = vmul.f32 %v1151, %v1151
      %v1192 = vmul.f32 %v1156, %v1156
      %v1193 = vmul.f32 %v1159, %v1159
      %v1194 = vmul.f32 %v1036, %v1162
      %v1195 = vmul.f32 %v1039, %v1163
      %v1196 = vmul.f32 %v1044, %v1164
      %v1197 = vmul.f32 %v1047, %v1165
      %v1198 = vmul.f32 %v1052, %v1166
      %v1199 = vmul.f32 %v1055, %v1167
      %v1200 = vmul.f32 %v1060, %v1168
      %v1201 = vmul.f32 %v1063, %v1169
      %v1202 = vmul.f32 %v1068, %v1170
      %v1203 = vmul.f32 %v1071, %v1171
      %v1204 = vmul.f32 %v1076, %v1172
      %v1205 = vmul.f32 %v1079, %v1173
      %v1206 = vmul.f32 %v1084, %v1174
      %v1207 = vmul.f32 %v1087, %v1175
      %v1208 = vmul.f32 %v1092, %v1176
      %v1209 = vmul.f32 %v1095, %v1177
      %v1210 = vmul.f32 %v1100, %v1178
      %v1211 = vmul.f32 %v1103, %v1179
      %v1212 = vmul.f32 %v1108, %v1180
      %v1213 = vmul.f32 %v1111, %v1181
      %v1214 = vmul.f32 %v1116, %v1182
      %v1215 = vmul.f32 %v1119, %v1183
      %v1216 = vmul.f32 %v1124, %v1184
      %v1217 = vmul.f32 %v1127, %v1185
      %v1218 = vmul.f32 %v1132, %v1186
      %v1219 = vmul.f32 %v1135, %v1187
      %v1220 = vmul.f32 %v1140, %v1188
      %v1221 = vmul.f32 %v1143, %v1189
      %v1222 = vmul.f32 %v1148, %v1190
      %v1223 = vmul.f32 %v1151, %v1191
      %v1224 = vmul.f32 %v1156, %v1192
      %v1225 = vmul.f32 %v1159, %v1193
      %v1226 = vmul.f32 %v1194, 0.044715
      %v1227 = vmul.f32 %v1195, 0.044715
      %v1228 = vmul.f32 %v1196, 0.044715
      %v1229 = vmul.f32 %v1197, 0.044715
      %v1230 = vmul.f32 %v1198, 0.044715
      %v1231 = vmul.f32 %v1199, 0.044715
      %v1232 = vmul.f32 %v1200, 0.044715
      %v1233 = vmul.f32 %v1201, 0.044715
      %v1234 = vmul.f32 %v1202, 0.044715
      %v1235 = vmul.f32 %v1203, 0.044715
      %v1236 = vmul.f32 %v1204, 0.044715
      %v1237 = vmul.f32 %v1205, 0.044715
      %v1238 = vmul.f32 %v1206, 0.044715
      %v1239 = vmul.f32 %v1207, 0.044715
      %v1240 = vmul.f32 %v1208, 0.044715
      %v1241 = vmul.f32 %v1209, 0.044715
      %v1242 = vmul.f32 %v1210, 0.044715
      %v1243 = vmul.f32 %v1211, 0.044715
      %v1244 = vmul.f32 %v1212, 0.044715
      %v1245 = vmul.f32 %v1213, 0.044715
      %v1246 = vmul.f32 %v1214, 0.044715
      %v1247 = vmul.f32 %v1215, 0.044715
      %v1248 = vmul.f32 %v1216, 0.044715
      %v1249 = vmul.f32 %v1217, 0.044715
      %v1250 = vmul.f32 %v1218, 0.044715
      %v1251 = vmul.f32 %v1219, 0.044715
      %v1252 = vmul.f32 %v1220, 0.044715
      %v1253 = vmul.f32 %v1221, 0.044715
      %v1254 = vmul.f32 %v1222, 0.044715
      %v1255 = vmul.f32 %v1223, 0.044715
      %v1256 = vmul.f32 %v1224, 0.044715
      %v1257 = vmul.f32 %v1225, 0.044715
      %v1258 = vadd.f32 %v1036, %v1226
      %v1259 = vadd.f32 %v1039, %v1227
      %v1260 = vadd.f32 %v1044, %v1228
      %v1261 = vadd.f32 %v1047, %v1229
      %v1262 = vadd.f32 %v1052, %v1230
      %v1263 = vadd.f32 %v1055, %v1231
      %v1264 = vadd.f32 %v1060, %v1232
      %v1265 = vadd.f32 %v1063, %v1233
      %v1266 = vadd.f32 %v1068, %v1234
      %v1267 = vadd.f32 %v1071, %v1235
      %v1268 = vadd.f32 %v1076, %v1236
      %v1269 = vadd.f32 %v1079, %v1237
      %v1270 = vadd.f32 %v1084, %v1238
      %v1271 = vadd.f32 %v1087, %v1239
      %v1272 = vadd.f32 %v1092, %v1240
      %v1273 = vadd.f32 %v1095, %v1241
      %v1274 = vadd.f32 %v1100, %v1242
      %v1275 = vadd.f32 %v1103, %v1243
      %v1276 = vadd.f32 %v1108, %v1244
      %v1277 = vadd.f32 %v1111, %v1245
      %v1278 = vadd.f32 %v1116, %v1246
      %v1279 = vadd.f32 %v1119, %v1247
      %v1280 = vadd.f32 %v1124, %v1248
      %v1281 = vadd.f32 %v1127, %v1249
      %v1282 = vadd.f32 %v1132, %v1250
      %v1283 = vadd.f32 %v1135, %v1251
      %v1284 = vadd.f32 %v1140, %v1252
      %v1285 = vadd.f32 %v1143, %v1253
      %v1286 = vadd.f32 %v1148, %v1254
      %v1287 = vadd.f32 %v1151, %v1255
      %v1288 = vadd.f32 %v1156, %v1256
      %v1289 = vadd.f32 %v1159, %v1257
      %v1290 = vmul.f32 %v1258, 0.7978846
      %v1291 = vmul.f32 %v1259, 0.7978846
      %v1292 = vmul.f32 %v1260, 0.7978846
      %v1293 = vmul.f32 %v1261, 0.7978846
      %v1294 = vmul.f32 %v1262, 0.7978846
      %v1295 = vmul.f32 %v1263, 0.7978846
      %v1296 = vmul.f32 %v1264, 0.7978846
      %v1297 = vmul.f32 %v1265, 0.7978846
      %v1298 = vmul.f32 %v1266, 0.7978846
      %v1299 = vmul.f32 %v1267, 0.7978846
      %v1300 = vmul.f32 %v1268, 0.7978846
      %v1301 = vmul.f32 %v1269, 0.7978846
      %v1302 = vmul.f32 %v1270, 0.7978846
      %v1303 = vmul.f32 %v1271, 0.7978846
      %v1304 = vmul.f32 %v1272, 0.7978846
      %v1305 = vmul.f32 %v1273, 0.7978846
      %v1306 = vmul.f32 %v1274, 0.7978846
      %v1307 = vmul.f32 %v1275, 0.7978846
      %v1308 = vmul.f32 %v1276, 0.7978846
      %v1309 = vmul.f32 %v1277, 0.7978846
      %v1310 = vmul.f32 %v1278, 0.7978846
      %v1311 = vmul.f32 %v1279, 0.7978846
      %v1312 = vmul.f32 %v1280, 0.7978846
      %v1313 = vmul.f32 %v1281, 0.7978846
      %v1314 = vmul.f32 %v1282, 0.7978846
      %v1315 = vmul.f32 %v1283, 0.7978846
      %v1316 = vmul.f32 %v1284, 0.7978846
      %v1317 = vmul.f32 %v1285, 0.7978846
      %v1318 = vmul.f32 %v1286, 0.7978846
      %v1319 = vmul.f32 %v1287, 0.7978846
      %v1320 = vmul.f32 %v1288, 0.7978846
      %v1321 = vmul.f32 %v1289, 0.7978846
      %v1322 = vtanh.pop %v1290
      %v1323 = vtanh.pop %v1291
      %v1324 = vtanh.pop %v1292
      %v1325 = vtanh.pop %v1293
      %v1326 = vtanh.pop %v1294
      %v1327 = vtanh.pop %v1295
      %v1328 = vtanh.pop %v1296
      %v1329 = vtanh.pop %v1297
      %v1330 = vtanh.pop %v1298
      %v1331 = vtanh.pop %v1299
      %v1332 = vtanh.pop %v1300
      %v1333 = vtanh.pop %v1301
      %v1334 = vtanh.pop %v1302
      %v1335 = vtanh.pop %v1303
      %v1336 = vtanh.pop %v1304
      %v1337 = vtanh.pop %v1305
      %v1338 = vtanh.pop %v1306
      %v1339 = vtanh.pop %v1307
      %v1340 = vtanh.pop %v1308
      %v1341 = vtanh.pop %v1309
      %v1342 = vtanh.pop %v1310
      %v1343 = vtanh.pop %v1311
      %v1344 = vtanh.pop %v1312
      %v1345 = vtanh.pop %v1313
      %v1346 = vtanh.pop %v1314
      %v1347 = vtanh.pop %v1315
      %v1348 = vtanh.pop %v1316
      %v1349 = vtanh.pop %v1317
      %v1350 = vtanh.pop %v1318
      %v1351 = vtanh.pop %v1319
      %v1352 = vtanh.pop %v1320
      %v1353 = vtanh.pop %v1321
      %v1354 = vadd.f32 %v1322, 1.0
      %v1355 = vadd.f32 %v1323, 1.0
      %v1356 = vadd.f32 %v1324, 1.0
      %v1357 = vadd.f32 %v1325, 1.0
      %v1358 = vadd.f32 %v1326, 1.0
      %v1359 = vadd.f32 %v1327, 1.0
      %v1360 = vadd.f32 %v1328, 1.0
      %v1361 = vadd.f32 %v1329, 1.0
      %v1362 = vadd.f32 %v1330, 1.0
      %v1363 = vadd.f32 %v1331, 1.0
      %v1364 = vadd.f32 %v1332, 1.0
      %v1365 = vadd.f32 %v1333, 1.0
      %v1366 = vadd.f32 %v1334, 1.0
      %v1367 = vadd.f32 %v1335, 1.0
      %v1368 = vadd.f32 %v1336, 1.0
      %v1369 = vadd.f32 %v1337, 1.0
      %v1370 = vadd.f32 %v1338, 1.0
      %v1371 = vadd.f32 %v1339, 1.0
      %v1372 = vadd.f32 %v1340, 1.0
      %v1373 = vadd.f32 %v1341, 1.0
      %v1374 = vadd.f32 %v1342, 1.0
      %v1375 = vadd.f32 %v1343, 1.0
      %v1376 = vadd.f32 %v1344, 1.0
      %v1377 = vadd.f32 %v1345, 1.0
      %v1378 = vadd.f32 %v1346, 1.0
      %v1379 = vadd.f32 %v1347, 1.0
      %v1380 = vadd.f32 %v1348, 1.0
      %v1381 = vadd.f32 %v1349, 1.0
      %v1382 = vadd.f32 %v1350, 1.0
      %v1383 = vadd.f32 %v1351, 1.0
      %v1384 = vadd.f32 %v1352, 1.0
      %v1385 = vadd.f32 %v1353, 1.0
      %v1386 = vmul.f32 %v1354, 0.5
      %v1387 = vmul.f32 %v1355, 0.5
      %v1388 = vmul.f32 %v1356, 0.5
      %v1389 = vmul.f32 %v1357, 0.5
      %v1390 = vmul.f32 %v1358, 0.5
      %v1391 = vmul.f32 %v1359, 0.5
      %v1392 = vmul.f32 %v1360, 0.5
      %v1393 = vmul.f32 %v1361, 0.5
      %v1394 = vmul.f32 %v1362, 0.5
      %v1395 = vmul.f32 %v1363, 0.5
      %v1396 = vmul.f32 %v1364, 0.5
      %v1397 = vmul.f32 %v1365, 0.5
      %v1398 = vmul.f32 %v1366, 0.5
      %v1399 = vmul.f32 %v1367, 0.5
      %v1400 = vmul.f32 %v1368, 0.5
      %v1401 = vmul.f32 %v1369, 0.5
      %v1402 = vmul.f32 %v1370, 0.5
      %v1403 = vmul.f32 %v1371, 0.5
      %v1404 = vmul.f32 %v1372, 0.5
      %v1405 = vmul.f32 %v1373, 0.5
      %v1406 = vmul.f32 %v1374, 0.5
      %v1407 = vmul.f32 %v1375, 0.5
      %v1408 = vmul.f32 %v1376, 0.5
      %v1409 = vmul.f32 %v1377, 0.5
      %v1410 = vmul.f32 %v1378, 0.5
      %v1411 = vmul.f32 %v1379, 0.5
      %v1412 = vmul.f32 %v1380, 0.5
      %v1413 = vmul.f32 %v1381, 0.5
      %v1414 = vmul.f32 %v1382, 0.5
      %v1415 = vmul.f32 %v1383, 0.5
      %v1416 = vmul.f32 %v1384, 0.5
      %v1417 = vmul.f32 %v1385, 0.5
      %v1418 = vmul.f32 %v1036, %v1386
      %v1419 = vmul.f32 %v1039, %v1387
      %v1420 = vmul.f32 %v1044, %v1388
      %v1421 = vmul.f32 %v1047, %v1389
      %v1422 = vmul.f32 %v1052, %v1390
      %v1423 = vmul.f32 %v1055, %v1391
      %v1424 = vmul.f32 %v1060, %v1392
      %v1425 = vmul.f32 %v1063, %v1393
      %v1426 = vmul.f32 %v1068, %v1394
      %v1427 = vmul.f32 %v1071, %v1395
      %v1428 = vmul.f32 %v1076, %v1396
      %v1429 = vmul.f32 %v1079, %v1397
      %v1430 = vmul.f32 %v1084, %v1398
      %v1431 = vmul.f32 %v1087, %v1399
      %v1432 = vmul.f32 %v1092, %v1400
      %v1433 = vmul.f32 %v1095, %v1401
      %v1434 = vmul.f32 %v1100, %v1402
      %v1435 = vmul.f32 %v1103, %v1403
      %v1436 = vmul.f32 %v1108, %v1404
      %v1437 = vmul.f32 %v1111, %v1405
      %v1438 = vmul.f32 %v1116, %v1406
      %v1439 = vmul.f32 %v1119, %v1407
      %v1440 = vmul.f32 %v1124, %v1408
      %v1441 = vmul.f32 %v1127, %v1409
      %v1442 = vmul.f32 %v1132, %v1410
      %v1443 = vmul.f32 %v1135, %v1411
      %v1444 = vmul.f32 %v1140, %v1412
      %v1445 = vmul.f32 %v1143, %v1413
      %v1446 = vmul.f32 %v1148, %v1414
      %v1447 = vmul.f32 %v1151, %v1415
      %v1448 = vmul.f32 %v1156, %v1416
      %v1449 = vmul.f32 %v1159, %v1417
      %v1450 = vpack.c.bf16 %v1419, %v1418
      %v1451 = vpack.c.bf16 %v1421, %v1420
      %v1452 = vpack.c.bf16 %v1423, %v1422
      %v1453 = vpack.c.bf16 %v1425, %v1424
      %v1454 = vpack.c.bf16 %v1427, %v1426
      %v1455 = vpack.c.bf16 %v1429, %v1428
      %v1456 = vpack.c.bf16 %v1431, %v1430
      %v1457 = vpack.c.bf16 %v1433, %v1432
      %v1458 = vpack.c.bf16 %v1435, %v1434
      %v1459 = vpack.c.bf16 %v1437, %v1436
      %v1460 = vpack.c.bf16 %v1439, %v1438
      %v1461 = vpack.c.bf16 %v1441, %v1440
      %v1462 = vpack.c.bf16 %v1443, %v1442
      %v1463 = vpack.c.bf16 %v1445, %v1444
      %v1464 = vpack.c.bf16 %v1447, %v1446
      %v1465 = vpack.c.bf16 %v1449, %v1448
      %1466 = vst [vmem:[#allocation2] sm:$0xff] %v1450
      %1467 = vst [vmem:[#allocation2 + $0x8] sm:$0xff] %v1451
      %1468 = vst [vmem:[#allocation2 + $0x10] sm:$0xff] %v1452
      %1469 = vst [vmem:[#allocation2 + $0x18] sm:$0xff] %v1453
      %1470 = vst [vmem:[#allocation2 + $0x20] sm:$0xff] %v1454
      %1471 = vst [vmem:[#allocation2 + $0x28] sm:$0xff] %v1455
      %1472 = vst [vmem:[#allocation2 + $0x30] sm:$0xff] %v1456
      %1473 = vst [vmem:[#allocation2 + $0x38] sm:$0xff] %v1457
      %1474 = vst [vmem:[#allocation2 + $0x40] sm:$0xff] %v1458
      %1475 = vst [vmem:[#allocation2 + $0x48] sm:$0xff] %v1459
      %1476 = vst [vmem:[#allocation2 + $0x50] sm:$0xff] %v1460
      %1477 = vst [vmem:[#allocation2 + $0x58] sm:$0xff] %v1461
      %1478 = vst [vmem:[#allocation2 + $0x60] sm:$0xff] %v1462
      %1479 = vst [vmem:[#allocation2 + $0x68] sm:$0xff] %v1463
      %1480 = vst [vmem:[#allocation2 + $0x70] sm:$0xff] %v1464
      %1481 = vst [vmem:[#allocation2 + $0x78] sm:$0xff] %v1465
      %vm1482 = vcmp.eq.s32.totalorder %v111, 0
      %v1483 = vsel %vm1482, -inf, 0.0
      %vm1484 = vcmask 31744
      %1485 = vst.msk [vmem:[#allocation3] sm:$0xff] %vm1484, %v1483
      %1486 = vst.msk [vmem:[#allocation3 + $0x8] sm:$0xff] %vm1484, %v1483
      %1487 = vst.msk [vmem:[#allocation3 + $0x10] sm:$0xff] %vm1484, %v1483
      %1488 = vst.msk [vmem:[#allocation3 + $0x18] sm:$0xff] %vm1484, %v1483
      %1489 = vst.msk [vmem:[#allocation3 + $0x20] sm:$0xff] %vm1484, %v1483
      %1490 = vst.msk [vmem:[#allocation3 + $0x28] sm:$0xff] %vm1484, %v1483
      %1491 = vst.msk [vmem:[#allocation3 + $0x30] sm:$0xff] %vm1484, %v1483
      %1492 = vst.msk [vmem:[#allocation3 + $0x38] sm:$0xff] %vm1484, %v1483
      %1493 = vst.msk [vmem:[#allocation3 + $0x40] sm:$0xff] %vm1484, %v1483
      %1494 = vst.msk [vmem:[#allocation3 + $0x48] sm:$0xff] %vm1484, %v1483
      %1495 = vst.msk [vmem:[#allocation3 + $0x50] sm:$0xff] %vm1484, %v1483
      %1496 = vst.msk [vmem:[#allocation3 + $0x58] sm:$0xff] %vm1484, %v1483
      %1497 = vst.msk [vmem:[#allocation3 + $0x60] sm:$0xff] %vm1484, %v1483
      %1498 = vst.msk [vmem:[#allocation3 + $0x68] sm:$0xff] %vm1484, %v1483
      %1499 = vst.msk [vmem:[#allocation3 + $0x70] sm:$0xff] %vm1484, %v1483
      %1500 = vst.msk [vmem:[#allocation3 + $0x78] sm:$0xff] %vm1484, %v1483
      %1501 = vst.msk [vmem:[#allocation3 + $0x80] sm:$0xff] %vm1484, %v1483
      %1502 = vst.msk [vmem:[#allocation3 + $0x88] sm:$0xff] %vm1484, %v1483
      %1503 = vst.msk [vmem:[#allocation3 + $0x90] sm:$0xff] %vm1484, %v1483
      %1504 = vst.msk [vmem:[#allocation3 + $0x98] sm:$0xff] %vm1484, %v1483
      %1505 = vst.msk [vmem:[#allocation3 + $0xa0] sm:$0xff] %vm1484, %v1483
      %1506 = vst.msk [vmem:[#allocation3 + $0xa8] sm:$0xff] %vm1484, %v1483
      %1507 = vst.msk [vmem:[#allocation3 + $0xb0] sm:$0xff] %vm1484, %v1483
      %1508 = vst.msk [vmem:[#allocation3 + $0xb8] sm:$0xff] %vm1484, %v1483
      %1509 = vst.msk [vmem:[#allocation3 + $0xc0] sm:$0xff] %vm1484, %v1483
      %1510 = vst.msk [vmem:[#allocation3 + $0xc8] sm:$0xff] %vm1484, %v1483
      %1511 = vst.msk [vmem:[#allocation3 + $0xd0] sm:$0xff] %vm1484, %v1483
      %1512 = vst.msk [vmem:[#allocation3 + $0xd8] sm:$0xff] %vm1484, %v1483
      %1513 = vst.msk [vmem:[#allocation3 + $0xe0] sm:$0xff] %vm1484, %v1483
      %1514 = vst.msk [vmem:[#allocation3 + $0xe8] sm:$0xff] %vm1484, %v1483
      %1515 = vst.msk [vmem:[#allocation3 + $0xf0] sm:$0xff] %vm1484, %v1483
      %1516 = vst.msk [vmem:[#allocation3 + $0xf8] sm:$0xff] %vm1484, %v1483
    $region33: #{tpu_custom_call.1} parent=1 // pred_fallthru
      _
    %v1517 = vld [vmem:[#allocation2] sm:$0xff]
    %v1518 = vld [vmem:[#allocation2 + $0x8] sm:$0xff]
    %v1519 = vld [vmem:[#allocation2 + $0x10] sm:$0xff]
    %v1520 = vld [vmem:[#allocation2 + $0x18] sm:$0xff]
    %v1521 = vld [vmem:[#allocation2 + $0x20] sm:$0xff]
    %v1522 = vld [vmem:[#allocation2 + $0x28] sm:$0xff]
    %v1523 = vld [vmem:[#allocation2 + $0x30] sm:$0xff]
    %v1524 = vld [vmem:[#allocation2 + $0x38] sm:$0xff]
    %v1525 = vld [vmem:[#allocation2 + $0x40] sm:$0xff]
    %v1526 = vld [vmem:[#allocation2 + $0x48] sm:$0xff]
    %v1527 = vld [vmem:[#allocation2 + $0x50] sm:$0xff]
    %v1528 = vld [vmem:[#allocation2 + $0x58] sm:$0xff]
    %v1529 = vld [vmem:[#allocation2 + $0x60] sm:$0xff]
    %v1530 = vld [vmem:[#allocation2 + $0x68] sm:$0xff]
    %v1531 = vld [vmem:[#allocation2 + $0x70] sm:$0xff]
    %v1532 = vld [vmem:[#allocation2 + $0x78] sm:$0xff]
    %v1533 = vld [vmem:[%s4] sm:$0xff]
    %v1534 = vld [vmem:[%s4 + $0x8] sm:$0xff]
    %v1535 = vld [vmem:[%s4 + $0x10] sm:$0xff]
    %v1536 = vld [vmem:[%s4 + $0x18] sm:$0xff]
    %v1537 = vld [vmem:[%s4 + $0x20] sm:$0xff]
    %v1538 = vld [vmem:[%s4 + $0x28] sm:$0xff]
    %v1539 = vld [vmem:[%s4 + $0x30] sm:$0xff]
    %v1540 = vld [vmem:[%s4 + $0x38] sm:$0xff]
    %v1541 = vld [vmem:[%s4 + $0x40] sm:$0xff]
    %v1542 = vld [vmem:[%s4 + $0x48] sm:$0xff]
    %v1543 = vld [vmem:[%s4 + $0x50] sm:$0xff]
    %v1544 = vld [vmem:[%s4 + $0x58] sm:$0xff]
    %v1545 = vld [vmem:[%s4 + $0x60] sm:$0xff]
    %v1546 = vld [vmem:[%s4 + $0x68] sm:$0xff]
    %v1547 = vld [vmem:[%s4 + $0x70] sm:$0xff]
    %v1548 = vld [vmem:[%s4 + $0x78] sm:$0xff]
    %v1549 = vld [vmem:[%s5] sm:$0x3]
    %v1551 = vlaneseq
    %v1552 = vshrl.u32 %v1551, 7
    %v1553 = vsub.s32 0, %v1552
    %v1554 = vrot.slane %v1549, %v1553
    %v1555 = vlaneseq
    %v1556 = vshrl.u32 %v1555, 7
    %v1557 = vsub.s32 1, %v1556
    %v1558 = vrot.slane %v1549, %v1557
    %v1577 = vunpack.c.l.b16 %v1533
    %v1578 = vunpack.c.h.b16 %v1533
    %v1579 = vunpack.c.l.b16 %v1534
    %v1580 = vunpack.c.h.b16 %v1534
    %v1581 = vunpack.c.l.b16 %v1535
    %v1582 = vunpack.c.h.b16 %v1535
    %v1583 = vunpack.c.l.b16 %v1536
    %v1584 = vunpack.c.h.b16 %v1536
    %v1585 = vunpack.c.l.b16 %v1537
    %v1586 = vunpack.c.h.b16 %v1537
    %v1587 = vunpack.c.l.b16 %v1538
    %v1588 = vunpack.c.h.b16 %v1538
    %v1589 = vunpack.c.l.b16 %v1539
    %v1590 = vunpack.c.h.b16 %v1539
    %v1591 = vunpack.c.l.b16 %v1540
    %v1592 = vunpack.c.h.b16 %v1540
    %v1593 = vunpack.c.l.b16 %v1541
    %v1594 = vunpack.c.h.b16 %v1541
    %v1595 = vunpack.c.l.b16 %v1542
    %v1596 = vunpack.c.h.b16 %v1542
    %v1597 = vunpack.c.l.b16 %v1543
    %v1598 = vunpack.c.h.b16 %v1543
    %v1599 = vunpack.c.l.b16 %v1544
    %v1600 = vunpack.c.h.b16 %v1544
    %v1601 = vunpack.c.l.b16 %v1545
    %v1602 = vunpack.c.h.b16 %v1545
    %v1603 = vunpack.c.l.b16 %v1546
    %v1604 = vunpack.c.h.b16 %v1546
    %v1605 = vunpack.c.l.b16 %v1547
    %v1606 = vunpack.c.h.b16 %v1547
    %v1607 = vunpack.c.l.b16 %v1548
    %v1608 = vunpack.c.h.b16 %v1548
    %v1609 = vpack.c.b16 %v1579, %v1577
    %v1610 = vpack.c.b16 %v1580, %v1578
    %v1611 = vpack.c.b16 %v1583, %v1581
    %v1612 = vpack.c.b16 %v1584, %v1582
    %v1613 = vpack.c.b16 %v1587, %v1585
    %v1614 = vpack.c.b16 %v1588, %v1586
    %v1615 = vpack.c.b16 %v1591, %v1589
    %v1616 = vpack.c.b16 %v1592, %v1590
    %v1617 = vpack.c.b16 %v1595, %v1593
    %v1618 = vpack.c.b16 %v1596, %v1594
    %v1619 = vpack.c.b16 %v1599, %v1597
    %v1620 = vpack.c.b16 %v1600, %v1598
    %v1621 = vpack.c.b16 %v1603, %v1601
    %v1622 = vpack.c.b16 %v1604, %v1602
    %v1623 = vpack.c.b16 %v1607, %v1605
    %v1624 = vpack.c.b16 %v1608, %v1606
    %1641 = vmatprep.subr.bf16.mxu0 %v1610
    %1642 = vmatpush1.bf16.msra.mxu0 %v1609
    %1643 = vmatprep.subr.bf16.mxu0 %v1612
    %1644 = vmatpush1.bf16.msra.mxu0 %v1611
    %1645 = vmatprep.subr.bf16.mxu0 %v1614
    %1646 = vmatpush1.bf16.msra.mxu0 %v1613
    %1647 = vmatprep.subr.bf16.mxu0 %v1616
    %1648 = vmatpush1.bf16.msra.mxu0 %v1615
    %1649 = vmatprep.subr.bf16.mxu0 %v1618
    %1650 = vmatpush1.bf16.msra.mxu0 %v1617
    %1651 = vmatprep.subr.bf16.mxu0 %v1620
    %1652 = vmatpush1.bf16.msra.mxu0 %v1619
    %1653 = vmatprep.subr.bf16.mxu0 %v1622
    %1654 = vmatpush1.bf16.msra.mxu0 %v1621
    %1655 = vmatprep.subr.bf16.mxu0 %v1624
    %1656 = vmatpush1.bf16.msra.mxu0 %v1623
    %1657 = vmatprep.subr.bf16.mxu0 0
    %1658 = vmatpush1.bf16.msra.mxu0 0
    %1659 = vmatprep.subr.bf16.mxu0 0
    %1660 = vmatpush1.bf16.msra.mxu0 0
    %1661 = vmatprep.subr.bf16.mxu0 0
    %1662 = vmatpush1.bf16.msra.mxu0 0
    %1663 = vmatprep.subr.bf16.mxu0 0
    %1664 = vmatpush1.bf16.msra.mxu0 0
    %1665 = vmatprep.subr.bf16.mxu0 0
    %1666 = vmatpush1.bf16.msra.mxu0 0
    %1667 = vmatprep.subr.bf16.mxu0 0
    %1668 = vmatpush1.bf16.msra.mxu0 0
    %1669 = vmatprep.subr.bf16.mxu0 0
    %1670 = vmatpush1.bf16.msra.mxu0 0
    %1671 = vmatprep.subr.bf16.mxu0 0
    %1672 = vmatpush1.bf16.msra.mxu0 0
    %1673 = vmatprep.mubr.bf16.mxu0 0
    %1674 = vmatmul.mubr.bf16.gmra.mrb[0].mxu0 %v1517
    %v1675 = vpop.f32.mrb[0].mxu0
    %v1676 = vadd.f32 %v1554, %v1675
    %v1677 = vpop.f32.mrb[0].mxu0
    %v1678 = vadd.f32 %v1558, %v1677
    %v1679 = vpop.f32.mrb[0].mxu0
    %v1680 = vadd.f32 %v1554, %v1679
    %v1681 = vpop.f32.mrb[0].mxu0
    %v1682 = vadd.f32 %v1558, %v1681
    %1683 = vmatprep.mubr.bf16.mxu0 0
    %1684 = vmatmul.mubr.bf16.gmra.mrb[0].mxu0 %v1518
    %v1685 = vpop.f32.mrb[0].mxu0
    %v1686 = vadd.f32 %v1554, %v1685
    %v1687 = vpop.f32.mrb[0].mxu0
    %v1688 = vadd.f32 %v1558, %v1687
    %v1689 = vpop.f32.mrb[0].mxu0
    %v1690 = vadd.f32 %v1554, %v1689
    %v1691 = vpop.f32.mrb[0].mxu0
    %v1692 = vadd.f32 %v1558, %v1691
    %1693 = vmatprep.mubr.bf16.mxu0 0
    %1694 = vmatmul.mubr.bf16.gmra.mrb[0].mxu0 %v1519
    %v1695 = vpop.f32.mrb[0].mxu0
    %v1696 = vadd.f32 %v1554, %v1695
    %v1697 = vpop.f32.mrb[0].mxu0
    %v1698 = vadd.f32 %v1558, %v1697
    %v1699 = vpop.f32.mrb[0].mxu0
    %v1700 = vadd.f32 %v1554, %v1699
    %v1701 = vpop.f32.mrb[0].mxu0
    %v1702 = vadd.f32 %v1558, %v1701
    %1703 = vmatprep.mubr.bf16.mxu0 0
    %1704 = vmatmul.mubr.bf16.gmra.mrb[0].mxu0 %v1520
    %v1705 = vpop.f32.mrb[0].mxu0
    %v1706 = vadd.f32 %v1554, %v1705
    %v1707 = vpop.f32.mrb[0].mxu0
    %v1708 = vadd.f32 %v1558, %v1707
    %v1709 = vpop.f32.mrb[0].mxu0
    %v1710 = vadd.f32 %v1554, %v1709
    %v1711 = vpop.f32.mrb[0].mxu0
    %v1712 = vadd.f32 %v1558, %v1711
    %1713 = vmatprep.mubr.bf16.mxu0 0
    %1714 = vmatmul.mubr.bf16.gmra.mrb[0].mxu0 %v1521
    %v1715 = vpop.f32.mrb[0].mxu0
    %v1716 = vadd.f32 %v1554, %v1715
    %v1717 = vpop.f32.mrb[0].mxu0
    %v1718 = vadd.f32 %v1558, %v1717
    %v1719 = vpop.f32.mrb[0].mxu0
    %v1720 = vadd.f32 %v1554, %v1719
    %v1721 = vpop.f32.mrb[0].mxu0
    %v1722 = vadd.f32 %v1558, %v1721
    %1723 = vmatprep.mubr.bf16.mxu0 0
    %1724 = vmatmul.mubr.bf16.gmra.mrb[0].mxu0 %v1522
    %v1725 = vpop.f32.mrb[0].mxu0
    %v1726 = vadd.f32 %v1554, %v1725
    %v1727 = vpop.f32.mrb[0].mxu0
    %v1728 = vadd.f32 %v1558, %v1727
    %v1729 = vpop.f32.mrb[0].mxu0
    %v1730 = vadd.f32 %v1554, %v1729
    %v1731 = vpop.f32.mrb[0].mxu0
    %v1732 = vadd.f32 %v1558, %v1731
    %1733 = vmatprep.mubr.bf16.mxu0 0
    %1734 = vmatmul.mubr.bf16.gmra.mrb[0].mxu0 %v1523
    %v1735 = vpop.f32.mrb[0].mxu0
    %v1736 = vadd.f32 %v1554, %v1735
    %v1737 = vpop.f32.mrb[0].mxu0
    %v1738 = vadd.f32 %v1558, %v1737
    %v1739 = vpop.f32.mrb[0].mxu0
    %v1740 = vadd.f32 %v1554, %v1739
    %v1741 = vpop.f32.mrb[0].mxu0
    %v1742 = vadd.f32 %v1558, %v1741
    %1743 = vmatprep.mubr.bf16.mxu0 0
    %1744 = vmatmul.mubr.bf16.gmra.mrb[0].mxu0 %v1524
    %v1745 = vpop.f32.mrb[0].mxu0
    %v1746 = vadd.f32 %v1554, %v1745
    %v1747 = vpop.f32.mrb[0].mxu0
    %v1748 = vadd.f32 %v1558, %v1747
    %v1749 = vpop.f32.mrb[0].mxu0
    %v1750 = vadd.f32 %v1554, %v1749
    %v1751 = vpop.f32.mrb[0].mxu0
    %v1752 = vadd.f32 %v1558, %v1751
    %1753 = vmatprep.mubr.bf16.mxu0 0
    %1754 = vmatmul.mubr.bf16.gmra.mrb[0].mxu0 %v1525
    %v1755 = vpop.f32.mrb[0].mxu0
    %v1756 = vadd.f32 %v1554, %v1755
    %v1757 = vpop.f32.mrb[0].mxu0
    %v1758 = vadd.f32 %v1558, %v1757
    %v1759 = vpop.f32.mrb[0].mxu0
    %v1760 = vadd.f32 %v1554, %v1759
    %v1761 = vpop.f32.mrb[0].mxu0
    %v1762 = vadd.f32 %v1558, %v1761
    %1763 = vmatprep.mubr.bf16.mxu0 0
    %1764 = vmatmul.mubr.bf16.gmra.mrb[0].mxu0 %v1526
    %v1765 = vpop.f32.mrb[0].mxu0
    %v1766 = vadd.f32 %v1554, %v1765
    %v1767 = vpop.f32.mrb[0].mxu0
    %v1768 = vadd.f32 %v1558, %v1767
    %v1769 = vpop.f32.mrb[0].mxu0
    %v1770 = vadd.f32 %v1554, %v1769
    %v1771 = vpop.f32.mrb[0].mxu0
    %v1772 = vadd.f32 %v1558, %v1771
    %1773 = vmatprep.mubr.bf16.mxu0 0
    %1774 = vmatmul.mubr.bf16.gmra.mrb[0].mxu0 %v1527
    %v1775 = vpop.f32.mrb[0].mxu0
    %v1776 = vadd.f32 %v1554, %v1775
    %v1777 = vpop.f32.mrb[0].mxu0
    %v1778 = vadd.f32 %v1558, %v1777
    %v1779 = vpop.f32.mrb[0].mxu0
    %v1780 = vadd.f32 %v1554, %v1779
    %v1781 = vpop.f32.mrb[0].mxu0
    %v1782 = vadd.f32 %v1558, %v1781
    %1783 = vmatprep.mubr.bf16.mxu0 0
    %1784 = vmatmul.mubr.bf16.gmra.mrb[0].mxu0 %v1528
    %v1785 = vpop.f32.mrb[0].mxu0
    %v1786 = vadd.f32 %v1554, %v1785
    %v1787 = vpop.f32.mrb[0].mxu0
    %v1788 = vadd.f32 %v1558, %v1787
    %v1789 = vpop.f32.mrb[0].mxu0
    %v1790 = vadd.f32 %v1554, %v1789
    %v1791 = vpop.f32.mrb[0].mxu0
    %v1792 = vadd.f32 %v1558, %v1791
    %1793 = vmatprep.mubr.bf16.mxu0 0
    %1794 = vmatmul.mubr.bf16.gmra.mrb[0].mxu0 %v1529
    %v1795 = vpop.f32.mrb[0].mxu0
    %v1796 = vadd.f32 %v1554, %v1795
    %v1797 = vpop.f32.mrb[0].mxu0
    %v1798 = vadd.f32 %v1558, %v1797
    %v1799 = vpop.f32.mrb[0].mxu0
    %v1800 = vadd.f32 %v1554, %v1799
    %v1801 = vpop.f32.mrb[0].mxu0
    %v1802 = vadd.f32 %v1558, %v1801
    %1803 = vmatprep.mubr.bf16.mxu0 0
    %1804 = vmatmul.mubr.bf16.gmra.mrb[0].mxu0 %v1530
    %v1805 = vpop.f32.mrb[0].mxu0
    %v1806 = vadd.f32 %v1554, %v1805
    %v1807 = vpop.f32.mrb[0].mxu0
    %v1808 = vadd.f32 %v1558, %v1807
    %v1809 = vpop.f32.mrb[0].mxu0
    %v1810 = vadd.f32 %v1554, %v1809
    %v1811 = vpop.f32.mrb[0].mxu0
    %v1812 = vadd.f32 %v1558, %v1811
    %1813 = vmatprep.mubr.bf16.mxu0 0
    %1814 = vmatmul.mubr.bf16.gmra.mrb[0].mxu0 %v1531
    %v1815 = vpop.f32.mrb[0].mxu0
    %v1816 = vadd.f32 %v1554, %v1815
    %v1817 = vpop.f32.mrb[0].mxu0
    %v1818 = vadd.f32 %v1558, %v1817
    %v1819 = vpop.f32.mrb[0].mxu0
    %v1820 = vadd.f32 %v1554, %v1819
    %v1821 = vpop.f32.mrb[0].mxu0
    %v1822 = vadd.f32 %v1558, %v1821
    %1823 = vmatprep.mubr.bf16.mxu0 0
    %1824 = vmatmul.mubr.bf16.gmra.mrb[0].mxu0 %v1532
    %v1825 = vpop.f32.mrb[0].mxu0
    %v1826 = vadd.f32 %v1554, %v1825
    %v1827 = vpop.f32.mrb[0].mxu0
    %v1828 = vadd.f32 %v1558, %v1827
    %v1829 = vpop.f32.mrb[0].mxu0
    %v1830 = vadd.f32 %v1554, %v1829
    %v1831 = vpop.f32.mrb[0].mxu0
    %v1832 = vadd.f32 %v1558, %v1831
    %1833 = vdwg.mxu0
    %v1834 = vpack.c.bf16 %v1680, %v1676
    %v1835 = vpack.c.bf16 %v1682, %v1678
    %v1836 = vpack.c.bf16 %v1690, %v1686
    %v1837 = vpack.c.bf16 %v1692, %v1688
    %v1838 = vpack.c.bf16 %v1700, %v1696
    %v1839 = vpack.c.bf16 %v1702, %v1698
    %v1840 = vpack.c.bf16 %v1710, %v1706
    %v1841 = vpack.c.bf16 %v1712, %v1708
    %v1842 = vpack.c.bf16 %v1720, %v1716
    %v1843 = vpack.c.bf16 %v1722, %v1718
    %v1844 = vpack.c.bf16 %v1730, %v1726
    %v1845 = vpack.c.bf16 %v1732, %v1728
    %v1846 = vpack.c.bf16 %v1740, %v1736
    %v1847 = vpack.c.bf16 %v1742, %v1738
    %v1848 = vpack.c.bf16 %v1750, %v1746
    %v1849 = vpack.c.bf16 %v1752, %v1748
    %v1850 = vpack.c.bf16 %v1760, %v1756
    %v1851 = vpack.c.bf16 %v1762, %v1758
    %v1852 = vpack.c.bf16 %v1770, %v1766
    %v1853 = vpack.c.bf16 %v1772, %v1768
    %v1854 = vpack.c.bf16 %v1780, %v1776
    %v1855 = vpack.c.bf16 %v1782, %v1778
    %v1856 = vpack.c.bf16 %v1790, %v1786
    %v1857 = vpack.c.bf16 %v1792, %v1788
    %v1858 = vpack.c.bf16 %v1800, %v1796
    %v1859 = vpack.c.bf16 %v1802, %v1798
    %v1860 = vpack.c.bf16 %v1810, %v1806
    %v1861 = vpack.c.bf16 %v1812, %v1808
    %v1862 = vpack.c.bf16 %v1820, %v1816
    %v1863 = vpack.c.bf16 %v1822, %v1818
    %v1864 = vpack.c.bf16 %v1830, %v1826
    %v1865 = vpack.c.bf16 %v1832, %v1828
    %v1898 = vunpack.c.l.b16 %v1834
    %v1899 = vunpack.c.l.b16 %v1835
    %v1900 = vunpack.c.h.b16 %v1834
    %v1901 = vunpack.c.h.b16 %v1835
    %v1902 = vunpack.c.l.b16 %v1836
    %v1903 = vunpack.c.l.b16 %v1837
    %v1904 = vunpack.c.h.b16 %v1836
    %v1905 = vunpack.c.h.b16 %v1837
    %v1906 = vunpack.c.l.b16 %v1838
    %v1907 = vunpack.c.l.b16 %v1839
    %v1908 = vunpack.c.h.b16 %v1838
    %v1909 = vunpack.c.h.b16 %v1839
    %v1910 = vunpack.c.l.b16 %v1840
    %v1911 = vunpack.c.l.b16 %v1841
    %v1912 = vunpack.c.h.b16 %v1840
    %v1913 = vunpack.c.h.b16 %v1841
    %v1914 = vunpack.c.l.b16 %v1842
    %v1915 = vunpack.c.l.b16 %v1843
    %v1916 = vunpack.c.h.b16 %v1842
    %v1917 = vunpack.c.h.b16 %v1843
    %v1918 = vunpack.c.l.b16 %v1844
    %v1919 = vunpack.c.l.b16 %v1845
    %v1920 = vunpack.c.h.b16 %v1844
    %v1921 = vunpack.c.h.b16 %v1845
    %v1922 = vunpack.c.l.b16 %v1846
    %v1923 = vunpack.c.l.b16 %v1847
    %v1924 = vunpack.c.h.b16 %v1846
    %v1925 = vunpack.c.h.b16 %v1847
    %v1926 = vunpack.c.l.b16 %v1848
    %v1927 = vunpack.c.l.b16 %v1849
    %v1928 = vunpack.c.h.b16 %v1848
    %v1929 = vunpack.c.h.b16 %v1849
    %v1930 = vunpack.c.l.b16 %v1850
    %v1931 = vunpack.c.l.b16 %v1851
    %v1932 = vunpack.c.h.b16 %v1850
    %v1933 = vunpack.c.h.b16 %v1851
    %v1934 = vunpack.c.l.b16 %v1852
    %v1935 = vunpack.c.l.b16 %v1853
    %v1936 = vunpack.c.h.b16 %v1852
    %v1937 = vunpack.c.h.b16 %v1853
    %v1938 = vunpack.c.l.b16 %v1854
    %v1939 = vunpack.c.l.b16 %v1855
    %v1940 = vunpack.c.h.b16 %v1854
    %v1941 = vunpack.c.h.b16 %v1855
    %v1942 = vunpack.c.l.b16 %v1856
    %v1943 = vunpack.c.l.b16 %v1857
    %v1944 = vunpack.c.h.b16 %v1856
    %v1945 = vunpack.c.h.b16 %v1857
    %v1946 = vunpack.c.l.b16 %v1858
    %v1947 = vunpack.c.l.b16 %v1859
    %v1948 = vunpack.c.h.b16 %v1858
    %v1949 = vunpack.c.h.b16 %v1859
    %v1950 = vunpack.c.l.b16 %v1860
    %v1951 = vunpack.c.l.b16 %v1861
    %v1952 = vunpack.c.h.b16 %v1860
    %v1953 = vunpack.c.h.b16 %v1861
    %v1954 = vunpack.c.l.b16 %v1862
    %v1955 = vunpack.c.l.b16 %v1863
    %v1956 = vunpack.c.h.b16 %v1862
    %v1957 = vunpack.c.h.b16 %v1863
    %v1958 = vunpack.c.l.b16 %v1864
    %v1959 = vunpack.c.l.b16 %v1865
    %v1960 = vunpack.c.h.b16 %v1864
    %v1961 = vunpack.c.h.b16 %v1865
    %v1962 = vpack.c.b16 %v1899, %v1898
    %v1963 = vpack.c.b16 %v1901, %v1900
    %v1964 = vpack.c.b16 %v1903, %v1902
    %v1965 = vpack.c.b16 %v1905, %v1904
    %v1966 = vpack.c.b16 %v1907, %v1906
    %v1967 = vpack.c.b16 %v1909, %v1908
    %v1968 = vpack.c.b16 %v1911, %v1910
    %v1969 = vpack.c.b16 %v1913, %v1912
    %v1970 = vpack.c.b16 %v1915, %v1914
    %v1971 = vpack.c.b16 %v1917, %v1916
    %v1972 = vpack.c.b16 %v1919, %v1918
    %v1973 = vpack.c.b16 %v1921, %v1920
    %v1974 = vpack.c.b16 %v1923, %v1922
    %v1975 = vpack.c.b16 %v1925, %v1924
    %v1976 = vpack.c.b16 %v1927, %v1926
    %v1977 = vpack.c.b16 %v1929, %v1928
    %v1978 = vpack.c.b16 %v1931, %v1930
    %v1979 = vpack.c.b16 %v1933, %v1932
    %v1980 = vpack.c.b16 %v1935, %v1934
    %v1981 = vpack.c.b16 %v1937, %v1936
    %v1982 = vpack.c.b16 %v1939, %v1938
    %v1983 = vpack.c.b16 %v1941, %v1940
    %v1984 = vpack.c.b16 %v1943, %v1942
    %v1985 = vpack.c.b16 %v1945, %v1944
    %v1986 = vpack.c.b16 %v1947, %v1946
    %v1987 = vpack.c.b16 %v1949, %v1948
    %v1988 = vpack.c.b16 %v1951, %v1950
    %v1989 = vpack.c.b16 %v1953, %v1952
    %v1990 = vpack.c.b16 %v1955, %v1954
    %v1991 = vpack.c.b16 %v1957, %v1956
    %v1992 = vpack.c.b16 %v1959, %v1958
    %v1993 = vpack.c.b16 %v1961, %v1960
    %2026 = vst [vmem:[#allocation7] sm:$0xff] %v1962
    %2027 = vst [vmem:[#allocation7 + $0x8] sm:$0xff] %v1963
    %2028 = vst [vmem:[#allocation7 + $0x10] sm:$0xff] %v1964
    %2029 = vst [vmem:[#allocation7 + $0x18] sm:$0xff] %v1965
    %2030 = vst [vmem:[#allocation7 + $0x20] sm:$0xff] %v1966
    %2031 = vst [vmem:[#allocation7 + $0x28] sm:$0xff] %v1967
    %2032 = vst [vmem:[#allocation7 + $0x30] sm:$0xff] %v1968
    %2033 = vst [vmem:[#allocation7 + $0x38] sm:$0xff] %v1969
    %2034 = vst [vmem:[#allocation7 + $0x40] sm:$0xff] %v1970
    %2035 = vst [vmem:[#allocation7 + $0x48] sm:$0xff] %v1971
    %2036 = vst [vmem:[#allocation7 + $0x50] sm:$0xff] %v1972
    %2037 = vst [vmem:[#allocation7 + $0x58] sm:$0xff] %v1973
    %2038 = vst [vmem:[#allocation7 + $0x60] sm:$0xff] %v1974
    %2039 = vst [vmem:[#allocation7 + $0x68] sm:$0xff] %v1975
    %2040 = vst [vmem:[#allocation7 + $0x70] sm:$0xff] %v1976
    %2041 = vst [vmem:[#allocation7 + $0x78] sm:$0xff] %v1977
    %2042 = vst [vmem:[#allocation7 + $0x80] sm:$0xff] %v1978
    %2043 = vst [vmem:[#allocation7 + $0x88] sm:$0xff] %v1979
    %2044 = vst [vmem:[#allocation7 + $0x90] sm:$0xff] %v1980
    %2045 = vst [vmem:[#allocation7 + $0x98] sm:$0xff] %v1981
    %2046 = vst [vmem:[#allocation7 + $0xa0] sm:$0xff] %v1982
    %2047 = vst [vmem:[#allocation7 + $0xa8] sm:$0xff] %v1983
    %2048 = vst [vmem:[#allocation7 + $0xb0] sm:$0xff] %v1984
    %2049 = vst [vmem:[#allocation7 + $0xb8] sm:$0xff] %v1985
    %2050 = vst [vmem:[#allocation7 + $0xc0] sm:$0xff] %v1986
    %2051 = vst [vmem:[#allocation7 + $0xc8] sm:$0xff] %v1987
    %2052 = vst [vmem:[#allocation7 + $0xd0] sm:$0xff] %v1988
    %2053 = vst [vmem:[#allocation7 + $0xd8] sm:$0xff] %v1989
    %2054 = vst [vmem:[#allocation7 + $0xe0] sm:$0xff] %v1990
    %2055 = vst [vmem:[#allocation7 + $0xe8] sm:$0xff] %v1991
    %2056 = vst [vmem:[#allocation7 + $0xf0] sm:$0xff] %v1992
    %2057 = vst [vmem:[#allocation7 + $0xf8] sm:$0xff] %v1993
    %v2058 = vlaneseq
    %v2059 = vand.u32 %v2058, 127
    %v2060 = vadd.s32 %v2059, 128
    %s2061 = smul.u32 0, 256
    %v2062 = vstv %s2061
    %v2063 = vadd.s32 %v2059, %v2062
    %v2064 = vadd.s32 %v2060, %v2062
    %v2065 = vmax.f32 %v1676, %v1678
    %2066 = vmax.xlane.f32.xlu0 %v2065
    %v2067 = vpop.xlane.xlu0 %2066
    %v2068 = vmax.f32 %v1680, %v1682
    %2069 = vmax.xlane.f32.xlu0 %v2068
    %v2070 = vpop.xlane.xlu0 %2069
    %v2071 = vmax.f32 %v1686, %v1688
    %2072 = vmax.xlane.f32.xlu0 %v2071
    %v2073 = vpop.xlane.xlu0 %2072
    %v2074 = vmax.f32 %v1690, %v1692
    %2075 = vmax.xlane.f32.xlu0 %v2074
    %v2076 = vpop.xlane.xlu0 %2075
    %v2077 = vmax.f32 %v1696, %v1698
    %2078 = vmax.xlane.f32.xlu0 %v2077
    %v2079 = vpop.xlane.xlu0 %2078
    %v2080 = vmax.f32 %v1700, %v1702
    %2081 = vmax.xlane.f32.xlu0 %v2080
    %v2082 = vpop.xlane.xlu0 %2081
    %v2083 = vmax.f32 %v1706, %v1708
    %2084 = vmax.xlane.f32.xlu0 %v2083
    %v2085 = vpop.xlane.xlu0 %2084
    %v2086 = vmax.f32 %v1710, %v1712
    %2087 = vmax.xlane.f32.xlu0 %v2086
    %v2088 = vpop.xlane.xlu0 %2087
    %v2089 = vmax.f32 %v1716, %v1718
    %2090 = vmax.xlane.f32.xlu0 %v2089
    %v2091 = vpop.xlane.xlu0 %2090
    %v2092 = vmax.f32 %v1720, %v1722
    %2093 = vmax.xlane.f32.xlu0 %v2092
    %v2094 = vpop.xlane.xlu0 %2093
    %v2095 = vmax.f32 %v1726, %v1728
    %2096 = vmax.xlane.f32.xlu0 %v2095
    %v2097 = vpop.xlane.xlu0 %2096
    %v2098 = vmax.f32 %v1730, %v1732
    %2099 = vmax.xlane.f32.xlu0 %v2098
    %v2100 = vpop.xlane.xlu0 %2099
    %v2101 = vmax.f32 %v1736, %v1738
    %2102 = vmax.xlane.f32.xlu0 %v2101
    %v2103 = vpop.xlane.xlu0 %2102
    %v2104 = vmax.f32 %v1740, %v1742
    %2105 = vmax.xlane.f32.xlu0 %v2104
    %v2106 = vpop.xlane.xlu0 %2105
    %v2107 = vmax.f32 %v1746, %v1748
    %2108 = vmax.xlane.f32.xlu0 %v2107
    %v2109 = vpop.xlane.xlu0 %2108
    %v2110 = vmax.f32 %v1750, %v1752
    %2111 = vmax.xlane.f32.xlu0 %v2110
    %v2112 = vpop.xlane.xlu0 %2111
    %v2113 = vmax.f32 %v1756, %v1758
    %2114 = vmax.xlane.f32.xlu0 %v2113
    %v2115 = vpop.xlane.xlu0 %2114
    %v2116 = vmax.f32 %v1760, %v1762
    %2117 = vmax.xlane.f32.xlu0 %v2116
    %v2118 = vpop.xlane.xlu0 %2117
    %v2119 = vmax.f32 %v1766, %v1768
    %2120 = vmax.xlane.f32.xlu0 %v2119
    %v2121 = vpop.xlane.xlu0 %2120
    %v2122 = vmax.f32 %v1770, %v1772
    %2123 = vmax.xlane.f32.xlu0 %v2122
    %v2124 = vpop.xlane.xlu0 %2123
    %v2125 = vmax.f32 %v1776, %v1778
    %2126 = vmax.xlane.f32.xlu0 %v2125
    %v2127 = vpop.xlane.xlu0 %2126
    %v2128 = vmax.f32 %v1780, %v1782
    %2129 = vmax.xlane.f32.xlu0 %v2128
    %v2130 = vpop.xlane.xlu0 %2129
    %v2131 = vmax.f32 %v1786, %v1788
    %2132 = vmax.xlane.f32.xlu0 %v2131
    %v2133 = vpop.xlane.xlu0 %2132
    %v2134 = vmax.f32 %v1790, %v1792
    %2135 = vmax.xlane.f32.xlu0 %v2134
    %v2136 = vpop.xlane.xlu0 %2135
    %v2137 = vmax.f32 %v1796, %v1798
    %2138 = vmax.xlane.f32.xlu0 %v2137
    %v2139 = vpop.xlane.xlu0 %2138
    %v2140 = vmax.f32 %v1800, %v1802
    %2141 = vmax.xlane.f32.xlu0 %v2140
    %v2142 = vpop.xlane.xlu0 %2141
    %v2143 = vmax.f32 %v1806, %v1808
    %2144 = vmax.xlane.f32.xlu0 %v2143
    %v2145 = vpop.xlane.xlu0 %2144
    %v2146 = vmax.f32 %v1810, %v1812
    %2147 = vmax.xlane.f32.xlu0 %v2146
    %v2148 = vpop.xlane.xlu0 %2147
    %v2149 = vmax.f32 %v1816, %v1818
    %2150 = vmax.xlane.f32.xlu0 %v2149
    %v2151 = vpop.xlane.xlu0 %2150
    %v2152 = vmax.f32 %v1820, %v1822
    %2153 = vmax.xlane.f32.xlu0 %v2152
    %v2154 = vpop.xlane.xlu0 %2153
    %v2155 = vmax.f32 %v1826, %v1828
    %2156 = vmax.xlane.f32.xlu0 %v2155
    %v2157 = vpop.xlane.xlu0 %2156
    %v2158 = vmax.f32 %v1830, %v1832
    %2159 = vmax.xlane.f32.xlu0 %v2158
    %v2160 = vpop.xlane.xlu0 %2159
    %vm2161 = vcmp.eq.f32.partialorder %v1676, %v2067
    %vm2162 = vcmp.eq.f32.partialorder %v1678, %v2067
    %vm2163 = vcmp.eq.f32.partialorder %v1680, %v2070
    %vm2164 = vcmp.eq.f32.partialorder %v1682, %v2070
    %vm2165 = vcmp.eq.f32.partialorder %v1686, %v2073
    %vm2166 = vcmp.eq.f32.partialorder %v1688, %v2073
    %vm2167 = vcmp.eq.f32.partialorder %v1690, %v2076
    %vm2168 = vcmp.eq.f32.partialorder %v1692, %v2076
    %vm2169 = vcmp.eq.f32.partialorder %v1696, %v2079
    %vm2170 = vcmp.eq.f32.partialorder %v1698, %v2079
    %vm2171 = vcmp.eq.f32.partialorder %v1700, %v2082
    %vm2172 = vcmp.eq.f32.partialorder %v1702, %v2082
    %vm2173 = vcmp.eq.f32.partialorder %v1706, %v2085
    %vm2174 = vcmp.eq.f32.partialorder %v1708, %v2085
    %vm2175 = vcmp.eq.f32.partialorder %v1710, %v2088
    %vm2176 = vcmp.eq.f32.partialorder %v1712, %v2088
    %vm2177 = vcmp.eq.f32.partialorder %v1716, %v2091
    %vm2178 = vcmp.eq.f32.partialorder %v1718, %v2091
    %vm2179 = vcmp.eq.f32.partialorder %v1720, %v2094
    %vm2180 = vcmp.eq.f32.partialorder %v1722, %v2094
    %vm2181 = vcmp.eq.f32.partialorder %v1726, %v2097
    %vm2182 = vcmp.eq.f32.partialorder %v1728, %v2097
    %vm2183 = vcmp.eq.f32.partialorder %v1730, %v2100
    %vm2184 = vcmp.eq.f32.partialorder %v1732, %v2100
    %vm2185 = vcmp.eq.f32.partialorder %v1736, %v2103
    %vm2186 = vcmp.eq.f32.partialorder %v1738, %v2103
    %vm2187 = vcmp.eq.f32.partialorder %v1740, %v2106
    %vm2188 = vcmp.eq.f32.partialorder %v1742, %v2106
    %vm2189 = vcmp.eq.f32.partialorder %v1746, %v2109
    %vm2190 = vcmp.eq.f32.partialorder %v1748, %v2109
    %vm2191 = vcmp.eq.f32.partialorder %v1750, %v2112
    %vm2192 = vcmp.eq.f32.partialorder %v1752, %v2112
    %vm2193 = vcmp.eq.f32.partialorder %v1756, %v2115
    %vm2194 = vcmp.eq.f32.partialorder %v1758, %v2115
    %vm2195 = vcmp.eq.f32.partialorder %v1760, %v2118
    %vm2196 = vcmp.eq.f32.partialorder %v1762, %v2118
    %vm2197 = vcmp.eq.f32.partialorder %v1766, %v2121
    %vm2198 = vcmp.eq.f32.partialorder %v1768, %v2121
    %vm2199 = vcmp.eq.f32.partialorder %v1770, %v2124
    %vm2200 = vcmp.eq.f32.partialorder %v1772, %v2124
    %vm2201 = vcmp.eq.f32.partialorder %v1776, %v2127
    %vm2202 = vcmp.eq.f32.partialorder %v1778, %v2127
    %vm2203 = vcmp.eq.f32.partialorder %v1780, %v2130
    %vm2204 = vcmp.eq.f32.partialorder %v1782, %v2130
    %vm2205 = vcmp.eq.f32.partialorder %v1786, %v2133
    %vm2206 = vcmp.eq.f32.partialorder %v1788, %v2133
    %vm2207 = vcmp.eq.f32.partialorder %v1790, %v2136
    %vm2208 = vcmp.eq.f32.partialorder %v1792, %v2136
    %vm2209 = vcmp.eq.f32.partialorder %v1796, %v2139
    %vm2210 = vcmp.eq.f32.partialorder %v1798, %v2139
    %vm2211 = vcmp.eq.f32.partialorder %v1800, %v2142
    %vm2212 = vcmp.eq.f32.partialorder %v1802, %v2142
    %vm2213 = vcmp.eq.f32.partialorder %v1806, %v2145
    %vm2214 = vcmp.eq.f32.partialorder %v1808, %v2145
    %vm2215 = vcmp.eq.f32.partialorder %v1810, %v2148
    %vm2216 = vcmp.eq.f32.partialorder %v1812, %v2148
    %vm2217 = vcmp.eq.f32.partialorder %v1816, %v2151
    %vm2218 = vcmp.eq.f32.partialorder %v1818, %v2151
    %vm2219 = vcmp.eq.f32.partialorder %v1820, %v2154
    %vm2220 = vcmp.eq.f32.partialorder %v1822, %v2154
    %vm2221 = vcmp.eq.f32.partialorder %v1826, %v2157
    %vm2222 = vcmp.eq.f32.partialorder %v1828, %v2157
    %vm2223 = vcmp.eq.f32.partialorder %v1830, %v2160
    %vm2224 = vcmp.eq.f32.partialorder %v1832, %v2160
    %v2225 = vsel %vm2161, %v2063, 1073741824
    %v2226 = vsel %vm2162, %v2064, 1073741824
    %v2227 = vsel %vm2163, %v2063, 1073741824
    %v2228 = vsel %vm2164, %v2064, 1073741824
    %v2229 = vsel %vm2165, %v2063, 1073741824
    %v2230 = vsel %vm2166, %v2064, 1073741824
    %v2231 = vsel %vm2167, %v2063, 1073741824
    %v2232 = vsel %vm2168, %v2064, 1073741824
    %v2233 = vsel %vm2169, %v2063, 1073741824
    %v2234 = vsel %vm2170, %v2064, 1073741824
    %v2235 = vsel %vm2171, %v2063, 1073741824
    %v2236 = vsel %vm2172, %v2064, 1073741824
    %v2237 = vsel %vm2173, %v2063, 1073741824
    %v2238 = vsel %vm2174, %v2064, 1073741824
    %v2239 = vsel %vm2175, %v2063, 1073741824
    %v2240 = vsel %vm2176, %v2064, 1073741824
    %v2241 = vsel %vm2177, %v2063, 1073741824
    %v2242 = vsel %vm2178, %v2064, 1073741824
    %v2243 = vsel %vm2179, %v2063, 1073741824
    %v2244 = vsel %vm2180, %v2064, 1073741824
    %v2245 = vsel %vm2181, %v2063, 1073741824
    %v2246 = vsel %vm2182, %v2064, 1073741824
    %v2247 = vsel %vm2183, %v2063, 1073741824
    %v2248 = vsel %vm2184, %v2064, 1073741824
    %v2249 = vsel %vm2185, %v2063, 1073741824
    %v2250 = vsel %vm2186, %v2064, 1073741824
    %v2251 = vsel %vm2187, %v2063, 1073741824
    %v2252 = vsel %vm2188, %v2064, 1073741824
    %v2253 = vsel %vm2189, %v2063, 1073741824
    %v2254 = vsel %vm2190, %v2064, 1073741824
    %v2255 = vsel %vm2191, %v2063, 1073741824
    %v2256 = vsel %vm2192, %v2064, 1073741824
    %v2257 = vsel %vm2193, %v2063, 1073741824
    %v2258 = vsel %vm2194, %v2064, 1073741824
    %v2259 = vsel %vm2195, %v2063, 1073741824
    %v2260 = vsel %vm2196, %v2064, 1073741824
    %v2261 = vsel %vm2197, %v2063, 1073741824
    %v2262 = vsel %vm2198, %v2064, 1073741824
    %v2263 = vsel %vm2199, %v2063, 1073741824
    %v2264 = vsel %vm2200, %v2064, 1073741824
    %v2265 = vsel %vm2201, %v2063, 1073741824
    %v2266 = vsel %vm2202, %v2064, 1073741824
    %v2267 = vsel %vm2203, %v2063, 1073741824
    %v2268 = vsel %vm2204, %v2064, 1073741824
    %v2269 = vsel %vm2205, %v2063, 1073741824
    %v2270 = vsel %vm2206, %v2064, 1073741824
    %v2271 = vsel %vm2207, %v2063, 1073741824
    %v2272 = vsel %vm2208, %v2064, 1073741824
    %v2273 = vsel %vm2209, %v2063, 1073741824
    %v2274 = vsel %vm2210, %v2064, 1073741824
    %v2275 = vsel %vm2211, %v2063, 1073741824
    %v2276 = vsel %vm2212, %v2064, 1073741824
    %v2277 = vsel %vm2213, %v2063, 1073741824
    %v2278 = vsel %vm2214, %v2064, 1073741824
    %v2279 = vsel %vm2215, %v2063, 1073741824
    %v2280 = vsel %vm2216, %v2064, 1073741824
    %v2281 = vsel %vm2217, %v2063, 1073741824
    %v2282 = vsel %vm2218, %v2064, 1073741824
    %v2283 = vsel %vm2219, %v2063, 1073741824
    %v2284 = vsel %vm2220, %v2064, 1073741824
    %v2285 = vsel %vm2221, %v2063, 1073741824
    %v2286 = vsel %vm2222, %v2064, 1073741824
    %v2287 = vsel %vm2223, %v2063, 1073741824
    %v2288 = vsel %vm2224, %v2064, 1073741824
    %vm2289 = vcmp.lt.s32.totalorder %v2225, %v2226
    %v2290 = vsel %vm2289, %v2225, %v2226
    %v2291 = vand.u32 %v2290, 65535
    %v2292 = vshra.s32 %v2290, 16
    %v2293 = vcvt.s32.f32 %v2291
    %v2294 = vcvt.s32.f32 %v2292
    %2295 = vmin.xlane.f32.xlu0 %v2294
    %v2296 = vpop.xlane.xlu0 %2295
    %vm2297 = vcmp.eq.f32.partialorder %v2294, %v2296
    %v2298 = vsel %vm2297, %v2293, inf
    %2299 = vmin.xlane.f32.xlu0 %v2298
    %v2300 = vpop.xlane.xlu0 %2299
    %v2301 = vcvt.f32.s32 %v2300
    %v2302 = vcvt.f32.s32 %v2296
    %v2303 = vshll.u32 %v2302, 16
    %v2304 = vadd.s32 %v2303, %v2301
    %vm2305 = vcmp.lt.s32.totalorder %v2227, %v2228
    %v2306 = vsel %vm2305, %v2227, %v2228
    %v2307 = vand.u32 %v2306, 65535
    %v2308 = vshra.s32 %v2306, 16
    %v2309 = vcvt.s32.f32 %v2307
    %v2310 = vcvt.s32.f32 %v2308
    %2311 = vmin.xlane.f32.xlu0 %v2310
    %v2312 = vpop.xlane.xlu0 %2311
    %vm2313 = vcmp.eq.f32.partialorder %v2310, %v2312
    %v2314 = vsel %vm2313, %v2309, inf
    %2315 = vmin.xlane.f32.xlu0 %v2314
    %v2316 = vpop.xlane.xlu0 %2315
    %v2317 = vcvt.f32.s32 %v2316
    %v2318 = vcvt.f32.s32 %v2312
    %v2319 = vshll.u32 %v2318, 16
    %v2320 = vadd.s32 %v2319, %v2317
    %vm2321 = vcmp.lt.s32.totalorder %v2229, %v2230
    %v2322 = vsel %vm2321, %v2229, %v2230
    %v2323 = vand.u32 %v2322, 65535
    %v2324 = vshra.s32 %v2322, 16
    %v2325 = vcvt.s32.f32 %v2323
    %v2326 = vcvt.s32.f32 %v2324
    %2327 = vmin.xlane.f32.xlu0 %v2326
    %v2328 = vpop.xlane.xlu0 %2327
    %vm2329 = vcmp.eq.f32.partialorder %v2326, %v2328
    %v2330 = vsel %vm2329, %v2325, inf
    %2331 = vmin.xlane.f32.xlu0 %v2330
    %v2332 = vpop.xlane.xlu0 %2331
    %v2333 = vcvt.f32.s32 %v2332
    %v2334 = vcvt.f32.s32 %v2328
    %v2335 = vshll.u32 %v2334, 16
    %v2336 = vadd.s32 %v2335, %v2333
    %vm2337 = vcmp.lt.s32.totalorder %v2231, %v2232
    %v2338 = vsel %vm2337, %v2231, %v2232
    %v2339 = vand.u32 %v2338, 65535
    %v2340 = vshra.s32 %v2338, 16
    %v2341 = vcvt.s32.f32 %v2339
    %v2342 = vcvt.s32.f32 %v2340
    %2343 = vmin.xlane.f32.xlu0 %v2342
    %v2344 = vpop.xlane.xlu0 %2343
    %vm2345 = vcmp.eq.f32.partialorder %v2342, %v2344
    %v2346 = vsel %vm2345, %v2341, inf
    %2347 = vmin.xlane.f32.xlu0 %v2346
    %v2348 = vpop.xlane.xlu0 %2347
    %v2349 = vcvt.f32.s32 %v2348
    %v2350 = vcvt.f32.s32 %v2344
    %v2351 = vshll.u32 %v2350, 16
    %v2352 = vadd.s32 %v2351, %v2349
    %vm2353 = vcmp.lt.s32.totalorder %v2233, %v2234
    %v2354 = vsel %vm2353, %v2233, %v2234
    %v2355 = vand.u32 %v2354, 65535
    %v2356 = vshra.s32 %v2354, 16
    %v2357 = vcvt.s32.f32 %v2355
    %v2358 = vcvt.s32.f32 %v2356
    %2359 = vmin.xlane.f32.xlu0 %v2358
    %v2360 = vpop.xlane.xlu0 %2359
    %vm2361 = vcmp.eq.f32.partialorder %v2358, %v2360
    %v2362 = vsel %vm2361, %v2357, inf
    %2363 = vmin.xlane.f32.xlu0 %v2362
    %v2364 = vpop.xlane.xlu0 %2363
    %v2365 = vcvt.f32.s32 %v2364
    %v2366 = vcvt.f32.s32 %v2360
    %v2367 = vshll.u32 %v2366, 16
    %v2368 = vadd.s32 %v2367, %v2365
    %vm2369 = vcmp.lt.s32.totalorder %v2235, %v2236
    %v2370 = vsel %vm2369, %v2235, %v2236
    %v2371 = vand.u32 %v2370, 65535
    %v2372 = vshra.s32 %v2370, 16
    %v2373 = vcvt.s32.f32 %v2371
    %v2374 = vcvt.s32.f32 %v2372
    %2375 = vmin.xlane.f32.xlu0 %v2374
    %v2376 = vpop.xlane.xlu0 %2375
    %vm2377 = vcmp.eq.f32.partialorder %v2374, %v2376
    %v2378 = vsel %vm2377, %v2373, inf
    %2379 = vmin.xlane.f32.xlu0 %v2378
    %v2380 = vpop.xlane.xlu0 %2379
    %v2381 = vcvt.f32.s32 %v2380
    %v2382 = vcvt.f32.s32 %v2376
    %v2383 = vshll.u32 %v2382, 16
    %v2384 = vadd.s32 %v2383, %v2381
    %vm2385 = vcmp.lt.s32.totalorder %v2237, %v2238
    %v2386 = vsel %vm2385, %v2237, %v2238
    %v2387 = vand.u32 %v2386, 65535
    %v2388 = vshra.s32 %v2386, 16
    %v2389 = vcvt.s32.f32 %v2387
    %v2390 = vcvt.s32.f32 %v2388
    %2391 = vmin.xlane.f32.xlu0 %v2390
    %v2392 = vpop.xlane.xlu0 %2391
    %vm2393 = vcmp.eq.f32.partialorder %v2390, %v2392
    %v2394 = vsel %vm2393, %v2389, inf
    %2395 = vmin.xlane.f32.xlu0 %v2394
    %v2396 = vpop.xlane.xlu0 %2395
    %v2397 = vcvt.f32.s32 %v2396
    %v2398 = vcvt.f32.s32 %v2392
    %v2399 = vshll.u32 %v2398, 16
    %v2400 = vadd.s32 %v2399, %v2397
    %vm2401 = vcmp.lt.s32.totalorder %v2239, %v2240
    %v2402 = vsel %vm2401, %v2239, %v2240
    %v2403 = vand.u32 %v2402, 65535
    %v2404 = vshra.s32 %v2402, 16
    %v2405 = vcvt.s32.f32 %v2403
    %v2406 = vcvt.s32.f32 %v2404
    %2407 = vmin.xlane.f32.xlu0 %v2406
    %v2408 = vpop.xlane.xlu0 %2407
    %vm2409 = vcmp.eq.f32.partialorder %v2406, %v2408
    %v2410 = vsel %vm2409, %v2405, inf
    %2411 = vmin.xlane.f32.xlu0 %v2410
    %v2412 = vpop.xlane.xlu0 %2411
    %v2413 = vcvt.f32.s32 %v2412
    %v2414 = vcvt.f32.s32 %v2408
    %v2415 = vshll.u32 %v2414, 16
    %v2416 = vadd.s32 %v2415, %v2413
    %vm2417 = vcmp.lt.s32.totalorder %v2241, %v2242
    %v2418 = vsel %vm2417, %v2241, %v2242
    %v2419 = vand.u32 %v2418, 65535
    %v2420 = vshra.s32 %v2418, 16
    %v2421 = vcvt.s32.f32 %v2419
    %v2422 = vcvt.s32.f32 %v2420
    %2423 = vmin.xlane.f32.xlu0 %v2422
    %v2424 = vpop.xlane.xlu0 %2423
    %vm2425 = vcmp.eq.f32.partialorder %v2422, %v2424
    %v2426 = vsel %vm2425, %v2421, inf
    %2427 = vmin.xlane.f32.xlu0 %v2426
    %v2428 = vpop.xlane.xlu0 %2427
    %v2429 = vcvt.f32.s32 %v2428
    %v2430 = vcvt.f32.s32 %v2424
    %v2431 = vshll.u32 %v2430, 16
    %v2432 = vadd.s32 %v2431, %v2429
    %vm2433 = vcmp.lt.s32.totalorder %v2243, %v2244
    %v2434 = vsel %vm2433, %v2243, %v2244
    %v2435 = vand.u32 %v2434, 65535
    %v2436 = vshra.s32 %v2434, 16
    %v2437 = vcvt.s32.f32 %v2435
    %v2438 = vcvt.s32.f32 %v2436
    %2439 = vmin.xlane.f32.xlu0 %v2438
    %v2440 = vpop.xlane.xlu0 %2439
    %vm2441 = vcmp.eq.f32.partialorder %v2438, %v2440
    %v2442 = vsel %vm2441, %v2437, inf
    %2443 = vmin.xlane.f32.xlu0 %v2442
    %v2444 = vpop.xlane.xlu0 %2443
    %v2445 = vcvt.f32.s32 %v2444
    %v2446 = vcvt.f32.s32 %v2440
    %v2447 = vshll.u32 %v2446, 16
    %v2448 = vadd.s32 %v2447, %v2445
    %vm2449 = vcmp.lt.s32.totalorder %v2245, %v2246
    %v2450 = vsel %vm2449, %v2245, %v2246
    %v2451 = vand.u32 %v2450, 65535
    %v2452 = vshra.s32 %v2450, 16
    %v2453 = vcvt.s32.f32 %v2451
    %v2454 = vcvt.s32.f32 %v2452
    %2455 = vmin.xlane.f32.xlu0 %v2454
    %v2456 = vpop.xlane.xlu0 %2455
    %vm2457 = vcmp.eq.f32.partialorder %v2454, %v2456
    %v2458 = vsel %vm2457, %v2453, inf
    %2459 = vmin.xlane.f32.xlu0 %v2458
    %v2460 = vpop.xlane.xlu0 %2459
    %v2461 = vcvt.f32.s32 %v2460
    %v2462 = vcvt.f32.s32 %v2456
    %v2463 = vshll.u32 %v2462, 16
    %v2464 = vadd.s32 %v2463, %v2461
    %vm2465 = vcmp.lt.s32.totalorder %v2247, %v2248
    %v2466 = vsel %vm2465, %v2247, %v2248
    %v2467 = vand.u32 %v2466, 65535
    %v2468 = vshra.s32 %v2466, 16
    %v2469 = vcvt.s32.f32 %v2467
    %v2470 = vcvt.s32.f32 %v2468
    %2471 = vmin.xlane.f32.xlu0 %v2470
    %v2472 = vpop.xlane.xlu0 %2471
    %vm2473 = vcmp.eq.f32.partialorder %v2470, %v2472
    %v2474 = vsel %vm2473, %v2469, inf
    %2475 = vmin.xlane.f32.xlu0 %v2474
    %v2476 = vpop.xlane.xlu0 %2475
    %v2477 = vcvt.f32.s32 %v2476
    %v2478 = vcvt.f32.s32 %v2472
    %v2479 = vshll.u32 %v2478, 16
    %v2480 = vadd.s32 %v2479, %v2477
    %vm2481 = vcmp.lt.s32.totalorder %v2249, %v2250
    %v2482 = vsel %vm2481, %v2249, %v2250
    %v2483 = vand.u32 %v2482, 65535
    %v2484 = vshra.s32 %v2482, 16
    %v2485 = vcvt.s32.f32 %v2483
    %v2486 = vcvt.s32.f32 %v2484
    %2487 = vmin.xlane.f32.xlu0 %v2486
    %v2488 = vpop.xlane.xlu0 %2487
    %vm2489 = vcmp.eq.f32.partialorder %v2486, %v2488
    %v2490 = vsel %vm2489, %v2485, inf
    %2491 = vmin.xlane.f32.xlu0 %v2490
    %v2492 = vpop.xlane.xlu0 %2491
    %v2493 = vcvt.f32.s32 %v2492
    %v2494 = vcvt.f32.s32 %v2488
    %v2495 = vshll.u32 %v2494, 16
    %v2496 = vadd.s32 %v2495, %v2493
    %vm2497 = vcmp.lt.s32.totalorder %v2251, %v2252
    %v2498 = vsel %vm2497, %v2251, %v2252
    %v2499 = vand.u32 %v2498, 65535
    %v2500 = vshra.s32 %v2498, 16
    %v2501 = vcvt.s32.f32 %v2499
    %v2502 = vcvt.s32.f32 %v2500
    %2503 = vmin.xlane.f32.xlu0 %v2502
    %v2504 = vpop.xlane.xlu0 %2503
    %vm2505 = vcmp.eq.f32.partialorder %v2502, %v2504
    %v2506 = vsel %vm2505, %v2501, inf
    %2507 = vmin.xlane.f32.xlu0 %v2506
    %v2508 = vpop.xlane.xlu0 %2507
    %v2509 = vcvt.f32.s32 %v2508
    %v2510 = vcvt.f32.s32 %v2504
    %v2511 = vshll.u32 %v2510, 16
    %v2512 = vadd.s32 %v2511, %v2509
    %vm2513 = vcmp.lt.s32.totalorder %v2253, %v2254
    %v2514 = vsel %vm2513, %v2253, %v2254
    %v2515 = vand.u32 %v2514, 65535
    %v2516 = vshra.s32 %v2514, 16
    %v2517 = vcvt.s32.f32 %v2515
    %v2518 = vcvt.s32.f32 %v2516
    %2519 = vmin.xlane.f32.xlu0 %v2518
    %v2520 = vpop.xlane.xlu0 %2519
    %vm2521 = vcmp.eq.f32.partialorder %v2518, %v2520
    %v2522 = vsel %vm2521, %v2517, inf
    %2523 = vmin.xlane.f32.xlu0 %v2522
    %v2524 = vpop.xlane.xlu0 %2523
    %v2525 = vcvt.f32.s32 %v2524
    %v2526 = vcvt.f32.s32 %v2520
    %v2527 = vshll.u32 %v2526, 16
    %v2528 = vadd.s32 %v2527, %v2525
    %vm2529 = vcmp.lt.s32.totalorder %v2255, %v2256
    %v2530 = vsel %vm2529, %v2255, %v2256
    %v2531 = vand.u32 %v2530, 65535
    %v2532 = vshra.s32 %v2530, 16
    %v2533 = vcvt.s32.f32 %v2531
    %v2534 = vcvt.s32.f32 %v2532
    %2535 = vmin.xlane.f32.xlu0 %v2534
    %v2536 = vpop.xlane.xlu0 %2535
    %vm2537 = vcmp.eq.f32.partialorder %v2534, %v2536
    %v2538 = vsel %vm2537, %v2533, inf
    %2539 = vmin.xlane.f32.xlu0 %v2538
    %v2540 = vpop.xlane.xlu0 %2539
    %v2541 = vcvt.f32.s32 %v2540
    %v2542 = vcvt.f32.s32 %v2536
    %v2543 = vshll.u32 %v2542, 16
    %v2544 = vadd.s32 %v2543, %v2541
    %vm2545 = vcmp.lt.s32.totalorder %v2257, %v2258
    %v2546 = vsel %vm2545, %v2257, %v2258
    %v2547 = vand.u32 %v2546, 65535
    %v2548 = vshra.s32 %v2546, 16
    %v2549 = vcvt.s32.f32 %v2547
    %v2550 = vcvt.s32.f32 %v2548
    %2551 = vmin.xlane.f32.xlu0 %v2550
    %v2552 = vpop.xlane.xlu0 %2551
    %vm2553 = vcmp.eq.f32.partialorder %v2550, %v2552
    %v2554 = vsel %vm2553, %v2549, inf
    %2555 = vmin.xlane.f32.xlu0 %v2554
    %v2556 = vpop.xlane.xlu0 %2555
    %v2557 = vcvt.f32.s32 %v2556
    %v2558 = vcvt.f32.s32 %v2552
    %v2559 = vshll.u32 %v2558, 16
    %v2560 = vadd.s32 %v2559, %v2557
    %vm2561 = vcmp.lt.s32.totalorder %v2259, %v2260
    %v2562 = vsel %vm2561, %v2259, %v2260
    %v2563 = vand.u32 %v2562, 65535
    %v2564 = vshra.s32 %v2562, 16
    %v2565 = vcvt.s32.f32 %v2563
    %v2566 = vcvt.s32.f32 %v2564
    %2567 = vmin.xlane.f32.xlu0 %v2566
    %v2568 = vpop.xlane.xlu0 %2567
    %vm2569 = vcmp.eq.f32.partialorder %v2566, %v2568
    %v2570 = vsel %vm2569, %v2565, inf
    %2571 = vmin.xlane.f32.xlu0 %v2570
    %v2572 = vpop.xlane.xlu0 %2571
    %v2573 = vcvt.f32.s32 %v2572
    %v2574 = vcvt.f32.s32 %v2568
    %v2575 = vshll.u32 %v2574, 16
    %v2576 = vadd.s32 %v2575, %v2573
    %vm2577 = vcmp.lt.s32.totalorder %v2261, %v2262
    %v2578 = vsel %vm2577, %v2261, %v2262
    %v2579 = vand.u32 %v2578, 65535
    %v2580 = vshra.s32 %v2578, 16
    %v2581 = vcvt.s32.f32 %v2579
    %v2582 = vcvt.s32.f32 %v2580
    %2583 = vmin.xlane.f32.xlu0 %v2582
    %v2584 = vpop.xlane.xlu0 %2583
    %vm2585 = vcmp.eq.f32.partialorder %v2582, %v2584
    %v2586 = vsel %vm2585, %v2581, inf
    %2587 = vmin.xlane.f32.xlu0 %v2586
    %v2588 = vpop.xlane.xlu0 %2587
    %v2589 = vcvt.f32.s32 %v2588
    %v2590 = vcvt.f32.s32 %v2584
    %v2591 = vshll.u32 %v2590, 16
    %v2592 = vadd.s32 %v2591, %v2589
    %vm2593 = vcmp.lt.s32.totalorder %v2263, %v2264
    %v2594 = vsel %vm2593, %v2263, %v2264
    %v2595 = vand.u32 %v2594, 65535
    %v2596 = vshra.s32 %v2594, 16
    %v2597 = vcvt.s32.f32 %v2595
    %v2598 = vcvt.s32.f32 %v2596
    %2599 = vmin.xlane.f32.xlu0 %v2598
    %v2600 = vpop.xlane.xlu0 %2599
    %vm2601 = vcmp.eq.f32.partialorder %v2598, %v2600
    %v2602 = vsel %vm2601, %v2597, inf
    %2603 = vmin.xlane.f32.xlu0 %v2602
    %v2604 = vpop.xlane.xlu0 %2603
    %v2605 = vcvt.f32.s32 %v2604
    %v2606 = vcvt.f32.s32 %v2600
    %v2607 = vshll.u32 %v2606, 16
    %v2608 = vadd.s32 %v2607, %v2605
    %vm2609 = vcmp.lt.s32.totalorder %v2265, %v2266
    %v2610 = vsel %vm2609, %v2265, %v2266
    %v2611 = vand.u32 %v2610, 65535
    %v2612 = vshra.s32 %v2610, 16
    %v2613 = vcvt.s32.f32 %v2611
    %v2614 = vcvt.s32.f32 %v2612
    %2615 = vmin.xlane.f32.xlu0 %v2614
    %v2616 = vpop.xlane.xlu0 %2615
    %vm2617 = vcmp.eq.f32.partialorder %v2614, %v2616
    %v2618 = vsel %vm2617, %v2613, inf
    %2619 = vmin.xlane.f32.xlu0 %v2618
    %v2620 = vpop.xlane.xlu0 %2619
    %v2621 = vcvt.f32.s32 %v2620
    %v2622 = vcvt.f32.s32 %v2616
    %v2623 = vshll.u32 %v2622, 16
    %v2624 = vadd.s32 %v2623, %v2621
    %vm2625 = vcmp.lt.s32.totalorder %v2267, %v2268
    %v2626 = vsel %vm2625, %v2267, %v2268
    %v2627 = vand.u32 %v2626, 65535
    %v2628 = vshra.s32 %v2626, 16
    %v2629 = vcvt.s32.f32 %v2627
    %v2630 = vcvt.s32.f32 %v2628
    %2631 = vmin.xlane.f32.xlu0 %v2630
    %v2632 = vpop.xlane.xlu0 %2631
    %vm2633 = vcmp.eq.f32.partialorder %v2630, %v2632
    %v2634 = vsel %vm2633, %v2629, inf
    %2635 = vmin.xlane.f32.xlu0 %v2634
    %v2636 = vpop.xlane.xlu0 %2635
    %v2637 = vcvt.f32.s32 %v2636
    %v2638 = vcvt.f32.s32 %v2632
    %v2639 = vshll.u32 %v2638, 16
    %v2640 = vadd.s32 %v2639, %v2637
    %vm2641 = vcmp.lt.s32.totalorder %v2269, %v2270
    %v2642 = vsel %vm2641, %v2269, %v2270
    %v2643 = vand.u32 %v2642, 65535
    %v2644 = vshra.s32 %v2642, 16
    %v2645 = vcvt.s32.f32 %v2643
    %v2646 = vcvt.s32.f32 %v2644
    %2647 = vmin.xlane.f32.xlu0 %v2646
    %v2648 = vpop.xlane.xlu0 %2647
    %vm2649 = vcmp.eq.f32.partialorder %v2646, %v2648
    %v2650 = vsel %vm2649, %v2645, inf
    %2651 = vmin.xlane.f32.xlu0 %v2650
    %v2652 = vpop.xlane.xlu0 %2651
    %v2653 = vcvt.f32.s32 %v2652
    %v2654 = vcvt.f32.s32 %v2648
    %v2655 = vshll.u32 %v2654, 16
    %v2656 = vadd.s32 %v2655, %v2653
    %vm2657 = vcmp.lt.s32.totalorder %v2271, %v2272
    %v2658 = vsel %vm2657, %v2271, %v2272
    %v2659 = vand.u32 %v2658, 65535
    %v2660 = vshra.s32 %v2658, 16
    %v2661 = vcvt.s32.f32 %v2659
    %v2662 = vcvt.s32.f32 %v2660
    %2663 = vmin.xlane.f32.xlu0 %v2662
    %v2664 = vpop.xlane.xlu0 %2663
    %vm2665 = vcmp.eq.f32.partialorder %v2662, %v2664
    %v2666 = vsel %vm2665, %v2661, inf
    %2667 = vmin.xlane.f32.xlu0 %v2666
    %v2668 = vpop.xlane.xlu0 %2667
    %v2669 = vcvt.f32.s32 %v2668
    %v2670 = vcvt.f32.s32 %v2664
    %v2671 = vshll.u32 %v2670, 16
    %v2672 = vadd.s32 %v2671, %v2669
    %vm2673 = vcmp.lt.s32.totalorder %v2273, %v2274
    %v2674 = vsel %vm2673, %v2273, %v2274
    %v2675 = vand.u32 %v2674, 65535
    %v2676 = vshra.s32 %v2674, 16
    %v2677 = vcvt.s32.f32 %v2675
    %v2678 = vcvt.s32.f32 %v2676
    %2679 = vmin.xlane.f32.xlu0 %v2678
    %v2680 = vpop.xlane.xlu0 %2679
    %vm2681 = vcmp.eq.f32.partialorder %v2678, %v2680
    %v2682 = vsel %vm2681, %v2677, inf
    %2683 = vmin.xlane.f32.xlu0 %v2682
    %v2684 = vpop.xlane.xlu0 %2683
    %v2685 = vcvt.f32.s32 %v2684
    %v2686 = vcvt.f32.s32 %v2680
    %v2687 = vshll.u32 %v2686, 16
    %v2688 = vadd.s32 %v2687, %v2685
    %vm2689 = vcmp.lt.s32.totalorder %v2275, %v2276
    %v2690 = vsel %vm2689, %v2275, %v2276
    %v2691 = vand.u32 %v2690, 65535
    %v2692 = vshra.s32 %v2690, 16
    %v2693 = vcvt.s32.f32 %v2691
    %v2694 = vcvt.s32.f32 %v2692
    %2695 = vmin.xlane.f32.xlu0 %v2694
    %v2696 = vpop.xlane.xlu0 %2695
    %vm2697 = vcmp.eq.f32.partialorder %v2694, %v2696
    %v2698 = vsel %vm2697, %v2693, inf
    %2699 = vmin.xlane.f32.xlu0 %v2698
    %v2700 = vpop.xlane.xlu0 %2699
    %v2701 = vcvt.f32.s32 %v2700
    %v2702 = vcvt.f32.s32 %v2696
    %v2703 = vshll.u32 %v2702, 16
    %v2704 = vadd.s32 %v2703, %v2701
    %vm2705 = vcmp.lt.s32.totalorder %v2277, %v2278
    %v2706 = vsel %vm2705, %v2277, %v2278
    %v2707 = vand.u32 %v2706, 65535
    %v2708 = vshra.s32 %v2706, 16
    %v2709 = vcvt.s32.f32 %v2707
    %v2710 = vcvt.s32.f32 %v2708
    %2711 = vmin.xlane.f32.xlu0 %v2710
    %v2712 = vpop.xlane.xlu0 %2711
    %vm2713 = vcmp.eq.f32.partialorder %v2710, %v2712
    %v2714 = vsel %vm2713, %v2709, inf
    %2715 = vmin.xlane.f32.xlu0 %v2714
    %v2716 = vpop.xlane.xlu0 %2715
    %v2717 = vcvt.f32.s32 %v2716
    %v2718 = vcvt.f32.s32 %v2712
    %v2719 = vshll.u32 %v2718, 16
    %v2720 = vadd.s32 %v2719, %v2717
    %vm2721 = vcmp.lt.s32.totalorder %v2279, %v2280
    %v2722 = vsel %vm2721, %v2279, %v2280
    %v2723 = vand.u32 %v2722, 65535
    %v2724 = vshra.s32 %v2722, 16
    %v2725 = vcvt.s32.f32 %v2723
    %v2726 = vcvt.s32.f32 %v2724
    %2727 = vmin.xlane.f32.xlu0 %v2726
    %v2728 = vpop.xlane.xlu0 %2727
    %vm2729 = vcmp.eq.f32.partialorder %v2726, %v2728
    %v2730 = vsel %vm2729, %v2725, inf
    %2731 = vmin.xlane.f32.xlu0 %v2730
    %v2732 = vpop.xlane.xlu0 %2731
    %v2733 = vcvt.f32.s32 %v2732
    %v2734 = vcvt.f32.s32 %v2728
    %v2735 = vshll.u32 %v2734, 16
    %v2736 = vadd.s32 %v2735, %v2733
    %vm2737 = vcmp.lt.s32.totalorder %v2281, %v2282
    %v2738 = vsel %vm2737, %v2281, %v2282
    %v2739 = vand.u32 %v2738, 65535
    %v2740 = vshra.s32 %v2738, 16
    %v2741 = vcvt.s32.f32 %v2739
    %v2742 = vcvt.s32.f32 %v2740
    %2743 = vmin.xlane.f32.xlu0 %v2742
    %v2744 = vpop.xlane.xlu0 %2743
    %vm2745 = vcmp.eq.f32.partialorder %v2742, %v2744
    %v2746 = vsel %vm2745, %v2741, inf
    %2747 = vmin.xlane.f32.xlu0 %v2746
    %v2748 = vpop.xlane.xlu0 %2747
    %v2749 = vcvt.f32.s32 %v2748
    %v2750 = vcvt.f32.s32 %v2744
    %v2751 = vshll.u32 %v2750, 16
    %v2752 = vadd.s32 %v2751, %v2749
    %vm2753 = vcmp.lt.s32.totalorder %v2283, %v2284
    %v2754 = vsel %vm2753, %v2283, %v2284
    %v2755 = vand.u32 %v2754, 65535
    %v2756 = vshra.s32 %v2754, 16
    %v2757 = vcvt.s32.f32 %v2755
    %v2758 = vcvt.s32.f32 %v2756
    %2759 = vmin.xlane.f32.xlu0 %v2758
    %v2760 = vpop.xlane.xlu0 %2759
    %vm2761 = vcmp.eq.f32.partialorder %v2758, %v2760
    %v2762 = vsel %vm2761, %v2757, inf
    %2763 = vmin.xlane.f32.xlu0 %v2762
    %v2764 = vpop.xlane.xlu0 %2763
    %v2765 = vcvt.f32.s32 %v2764
    %v2766 = vcvt.f32.s32 %v2760
    %v2767 = vshll.u32 %v2766, 16
    %v2768 = vadd.s32 %v2767, %v2765
    %vm2769 = vcmp.lt.s32.totalorder %v2285, %v2286
    %v2770 = vsel %vm2769, %v2285, %v2286
    %v2771 = vand.u32 %v2770, 65535
    %v2772 = vshra.s32 %v2770, 16
    %v2773 = vcvt.s32.f32 %v2771
    %v2774 = vcvt.s32.f32 %v2772
    %2775 = vmin.xlane.f32.xlu0 %v2774
    %v2776 = vpop.xlane.xlu0 %2775
    %vm2777 = vcmp.eq.f32.partialorder %v2774, %v2776
    %v2778 = vsel %vm2777, %v2773, inf
    %2779 = vmin.xlane.f32.xlu0 %v2778
    %v2780 = vpop.xlane.xlu0 %2779
    %v2781 = vcvt.f32.s32 %v2780
    %v2782 = vcvt.f32.s32 %v2776
    %v2783 = vshll.u32 %v2782, 16
    %v2784 = vadd.s32 %v2783, %v2781
    %vm2785 = vcmp.lt.s32.totalorder %v2287, %v2288
    %v2786 = vsel %vm2785, %v2287, %v2288
    %v2787 = vand.u32 %v2786, 65535
    %v2788 = vshra.s32 %v2786, 16
    %v2789 = vcvt.s32.f32 %v2787
    %v2790 = vcvt.s32.f32 %v2788
    %2791 = vmin.xlane.f32.xlu0 %v2790
    %v2792 = vpop.xlane.xlu0 %2791
    %vm2793 = vcmp.eq.f32.partialorder %v2790, %v2792
    %v2794 = vsel %vm2793, %v2789, inf
    %2795 = vmin.xlane.f32.xlu0 %v2794
    %v2796 = vpop.xlane.xlu0 %2795
    %v2797 = vcvt.f32.s32 %v2796
    %v2798 = vcvt.f32.s32 %v2792
    %v2799 = vshll.u32 %v2798, 16
    %v2800 = vadd.s32 %v2799, %v2797
    %v2801 = vcvt.s32.f32 %v2304
    %v2802 = vcvt.s32.f32 %v2320
    %v2803 = vcvt.s32.f32 %v2336
    %v2804 = vcvt.s32.f32 %v2352
    %v2805 = vcvt.s32.f32 %v2368
    %v2806 = vcvt.s32.f32 %v2384
    %v2807 = vcvt.s32.f32 %v2400
    %v2808 = vcvt.s32.f32 %v2416
    %v2809 = vcvt.s32.f32 %v2432
    %v2810 = vcvt.s32.f32 %v2448
    %v2811 = vcvt.s32.f32 %v2464
    %v2812 = vcvt.s32.f32 %v2480
    %v2813 = vcvt.s32.f32 %v2496
    %v2814 = vcvt.s32.f32 %v2512
    %v2815 = vcvt.s32.f32 %v2528
    %v2816 = vcvt.s32.f32 %v2544
    %v2817 = vcvt.s32.f32 %v2560
    %v2818 = vcvt.s32.f32 %v2576
    %v2819 = vcvt.s32.f32 %v2592
    %v2820 = vcvt.s32.f32 %v2608
    %v2821 = vcvt.s32.f32 %v2624
    %v2822 = vcvt.s32.f32 %v2640
    %v2823 = vcvt.s32.f32 %v2656
    %v2824 = vcvt.s32.f32 %v2672
    %v2825 = vcvt.s32.f32 %v2688
    %v2826 = vcvt.s32.f32 %v2704
    %v2827 = vcvt.s32.f32 %v2720
    %v2828 = vcvt.s32.f32 %v2736
    %v2829 = vcvt.s32.f32 %v2752
    %v2830 = vcvt.s32.f32 %v2768
    %v2831 = vcvt.s32.f32 %v2784
    %v2832 = vcvt.s32.f32 %v2800
    %v2833 = vld [vmem:[#allocation3] sm:$0xff]
    %v2834 = vld [vmem:[#allocation3 + $0x8] sm:$0xff]
    %v2835 = vld [vmem:[#allocation3 + $0x10] sm:$0xff]
    %v2836 = vld [vmem:[#allocation3 + $0x18] sm:$0xff]
    %v2837 = vld [vmem:[#allocation3 + $0x20] sm:$0xff]
    %v2838 = vld [vmem:[#allocation3 + $0x28] sm:$0xff]
    %v2839 = vld [vmem:[#allocation3 + $0x30] sm:$0xff]
    %v2840 = vld [vmem:[#allocation3 + $0x38] sm:$0xff]
    %v2841 = vld [vmem:[#allocation3 + $0x40] sm:$0xff]
    %v2842 = vld [vmem:[#allocation3 + $0x48] sm:$0xff]
    %v2843 = vld [vmem:[#allocation3 + $0x50] sm:$0xff]
    %v2844 = vld [vmem:[#allocation3 + $0x58] sm:$0xff]
    %v2845 = vld [vmem:[#allocation3 + $0x60] sm:$0xff]
    %v2846 = vld [vmem:[#allocation3 + $0x68] sm:$0xff]
    %v2847 = vld [vmem:[#allocation3 + $0x70] sm:$0xff]
    %v2848 = vld [vmem:[#allocation3 + $0x78] sm:$0xff]
    %v2849 = vld [vmem:[#allocation3 + $0x80] sm:$0xff]
    %v2850 = vld [vmem:[#allocation3 + $0x88] sm:$0xff]
    %v2851 = vld [vmem:[#allocation3 + $0x90] sm:$0xff]
    %v2852 = vld [vmem:[#allocation3 + $0x98] sm:$0xff]
    %v2853 = vld [vmem:[#allocation3 + $0xa0] sm:$0xff]
    %v2854 = vld [vmem:[#allocation3 + $0xa8] sm:$0xff]
    %v2855 = vld [vmem:[#allocation3 + $0xb0] sm:$0xff]
    %v2856 = vld [vmem:[#allocation3 + $0xb8] sm:$0xff]
    %v2857 = vld [vmem:[#allocation3 + $0xc0] sm:$0xff]
    %v2858 = vld [vmem:[#allocation3 + $0xc8] sm:$0xff]
    %v2859 = vld [vmem:[#allocation3 + $0xd0] sm:$0xff]
    %v2860 = vld [vmem:[#allocation3 + $0xd8] sm:$0xff]
    %v2861 = vld [vmem:[#allocation3 + $0xe0] sm:$0xff]
    %v2862 = vld [vmem:[#allocation3 + $0xe8] sm:$0xff]
    %v2863 = vld [vmem:[#allocation3 + $0xf0] sm:$0xff]
    %v2864 = vld [vmem:[#allocation3 + $0xf8] sm:$0xff]
    %2865 = vset.pattern.permute.xlu0 0
    %2866 = vperm.xlu0 %2865, %v74
    %v2867 = vpop.permute.xlu0 %2866
    %2868 = vset.pattern.permute.xlu0 0
    %2869 = vperm.xlu0 %2868, %v75
    %v2870 = vpop.permute.xlu0 %2869
    %2871 = vset.pattern.permute.xlu0 0
    %2872 = vperm.xlu0 %2871, %v76
    %v2873 = vpop.permute.xlu0 %2872
    %2874 = vset.pattern.permute.xlu0 0
    %2875 = vperm.xlu0 %2874, %v77
    %v2876 = vpop.permute.xlu0 %2875
    %2877 = vset.pattern.permute.xlu0 0
    %2878 = vperm.xlu0 %2877, %v78
    %v2879 = vpop.permute.xlu0 %2878
    %2880 = vset.pattern.permute.xlu0 0
    %2881 = vperm.xlu0 %2880, %v79
    %v2882 = vpop.permute.xlu0 %2881
    %2883 = vset.pattern.permute.xlu0 0
    %2884 = vperm.xlu0 %2883, %v80
    %v2885 = vpop.permute.xlu0 %2884
    %2886 = vset.pattern.permute.xlu0 0
    %2887 = vperm.xlu0 %2886, %v81
    %v2888 = vpop.permute.xlu0 %2887
    %2889 = vset.pattern.permute.xlu0 0
    %2890 = vperm.xlu0 %2889, %v82
    %v2891 = vpop.permute.xlu0 %2890
    %2892 = vset.pattern.permute.xlu0 0
    %2893 = vperm.xlu0 %2892, %v83
    %v2894 = vpop.permute.xlu0 %2893
    %2895 = vset.pattern.permute.xlu0 0
    %2896 = vperm.xlu0 %2895, %v84
    %v2897 = vpop.permute.xlu0 %2896
    %2898 = vset.pattern.permute.xlu0 0
    %2899 = vperm.xlu0 %2898, %v85
    %v2900 = vpop.permute.xlu0 %2899
    %2901 = vset.pattern.permute.xlu0 0
    %2902 = vperm.xlu0 %2901, %v86
    %v2903 = vpop.permute.xlu0 %2902
    %2904 = vset.pattern.permute.xlu0 0
    %2905 = vperm.xlu0 %2904, %v87
    %v2906 = vpop.permute.xlu0 %2905
    %2907 = vset.pattern.permute.xlu0 0
    %2908 = vperm.xlu0 %2907, %v88
    %v2909 = vpop.permute.xlu0 %2908
    %2910 = vset.pattern.permute.xlu0 0
    %2911 = vperm.xlu0 %2910, %v89
    %v2912 = vpop.permute.xlu0 %2911
    %2913 = vset.pattern.permute.xlu0 0
    %2914 = vperm.xlu0 %2913, %v90
    %v2915 = vpop.permute.xlu0 %2914
    %2916 = vset.pattern.permute.xlu0 0
    %2917 = vperm.xlu0 %2916, %v91
    %v2918 = vpop.permute.xlu0 %2917
    %2919 = vset.pattern.permute.xlu0 0
    %2920 = vperm.xlu0 %2919, %v92
    %v2921 = vpop.permute.xlu0 %2920
    %2922 = vset.pattern.permute.xlu0 0
    %2923 = vperm.xlu0 %2922, %v93
    %v2924 = vpop.permute.xlu0 %2923
    %2925 = vset.pattern.permute.xlu0 0
    %2926 = vperm.xlu0 %2925, %v94
    %v2927 = vpop.permute.xlu0 %2926
    %2928 = vset.pattern.permute.xlu0 0
    %2929 = vperm.xlu0 %2928, %v95
    %v2930 = vpop.permute.xlu0 %2929
    %2931 = vset.pattern.permute.xlu0 0
    %2932 = vperm.xlu0 %2931, %v96
    %v2933 = vpop.permute.xlu0 %2932
    %2934 = vset.pattern.permute.xlu0 0
    %2935 = vperm.xlu0 %2934, %v97
    %v2936 = vpop.permute.xlu0 %2935
    %2937 = vset.pattern.permute.xlu0 0
    %2938 = vperm.xlu0 %2937, %v98
    %v2939 = vpop.permute.xlu0 %2938
    %2940 = vset.pattern.permute.xlu0 0
    %2941 = vperm.xlu0 %2940, %v99
    %v2942 = vpop.permute.xlu0 %2941
    %2943 = vset.pattern.permute.xlu0 0
    %2944 = vperm.xlu0 %2943, %v100
    %v2945 = vpop.permute.xlu0 %2944
    %2946 = vset.pattern.permute.xlu0 0
    %2947 = vperm.xlu0 %2946, %v101
    %v2948 = vpop.permute.xlu0 %2947
    %2949 = vset.pattern.permute.xlu0 0
    %2950 = vperm.xlu0 %2949, %v102
    %v2951 = vpop.permute.xlu0 %2950
    %2952 = vset.pattern.permute.xlu0 0
    %2953 = vperm.xlu0 %2952, %v103
    %v2954 = vpop.permute.xlu0 %2953
    %2955 = vset.pattern.permute.xlu0 0
    %2956 = vperm.xlu0 %2955, %v104
    %v2957 = vpop.permute.xlu0 %2956
    %2958 = vset.pattern.permute.xlu0 0
    %2959 = vperm.xlu0 %2958, %v105
    %v2960 = vpop.permute.xlu0 %2959
    %vm2961 = vcmp.eq.s32.totalorder %v2063, %v2867
    %vm2962 = vcmp.eq.s32.totalorder %v2064, %v2867
    %vm2963 = vcmp.eq.s32.totalorder %v2063, %v2870
    %vm2964 = vcmp.eq.s32.totalorder %v2064, %v2870
    %vm2965 = vcmp.eq.s32.totalorder %v2063, %v2873
    %vm2966 = vcmp.eq.s32.totalorder %v2064, %v2873
    %vm2967 = vcmp.eq.s32.totalorder %v2063, %v2876
    %vm2968 = vcmp.eq.s32.totalorder %v2064, %v2876
    %vm2969 = vcmp.eq.s32.totalorder %v2063, %v2879
    %vm2970 = vcmp.eq.s32.totalorder %v2064, %v2879
    %vm2971 = vcmp.eq.s32.totalorder %v2063, %v2882
    %vm2972 = vcmp.eq.s32.totalorder %v2064, %v2882
    %vm2973 = vcmp.eq.s32.totalorder %v2063, %v2885
    %vm2974 = vcmp.eq.s32.totalorder %v2064, %v2885
    %vm2975 = vcmp.eq.s32.totalorder %v2063, %v2888
    %vm2976 = vcmp.eq.s32.totalorder %v2064, %v2888
    %vm2977 = vcmp.eq.s32.totalorder %v2063, %v2891
    %vm2978 = vcmp.eq.s32.totalorder %v2064, %v2891
    %vm2979 = vcmp.eq.s32.totalorder %v2063, %v2894
    %vm2980 = vcmp.eq.s32.totalorder %v2064, %v2894
    %vm2981 = vcmp.eq.s32.totalorder %v2063, %v2897
    %vm2982 = vcmp.eq.s32.totalorder %v2064, %v2897
    %vm2983 = vcmp.eq.s32.totalorder %v2063, %v2900
    %vm2984 = vcmp.eq.s32.totalorder %v2064, %v2900
    %vm2985 = vcmp.eq.s32.totalorder %v2063, %v2903
    %vm2986 = vcmp.eq.s32.totalorder %v2064, %v2903
    %vm2987 = vcmp.eq.s32.totalorder %v2063, %v2906
    %vm2988 = vcmp.eq.s32.totalorder %v2064, %v2906
    %vm2989 = vcmp.eq.s32.totalorder %v2063, %v2909
    %vm2990 = vcmp.eq.s32.totalorder %v2064, %v2909
    %vm2991 = vcmp.eq.s32.totalorder %v2063, %v2912
    %vm2992 = vcmp.eq.s32.totalorder %v2064, %v2912
    %vm2993 = vcmp.eq.s32.totalorder %v2063, %v2915
    %vm2994 = vcmp.eq.s32.totalorder %v2064, %v2915
    %vm2995 = vcmp.eq.s32.totalorder %v2063, %v2918
    %vm2996 = vcmp.eq.s32.totalorder %v2064, %v2918
    %vm2997 = vcmp.eq.s32.totalorder %v2063, %v2921
    %vm2998 = vcmp.eq.s32.totalorder %v2064, %v2921
    %vm2999 = vcmp.eq.s32.totalorder %v2063, %v2924
    %vm3000 = vcmp.eq.s32.totalorder %v2064, %v2924
    %vm3001 = vcmp.eq.s32.totalorder %v2063, %v2927
    %vm3002 = vcmp.eq.s32.totalorder %v2064, %v2927
    %vm3003 = vcmp.eq.s32.totalorder %v2063, %v2930
    %vm3004 = vcmp.eq.s32.totalorder %v2064, %v2930
    %vm3005 = vcmp.eq.s32.totalorder %v2063, %v2933
    %vm3006 = vcmp.eq.s32.totalorder %v2064, %v2933
    %vm3007 = vcmp.eq.s32.totalorder %v2063, %v2936
    %vm3008 = vcmp.eq.s32.totalorder %v2064, %v2936
    %vm3009 = vcmp.eq.s32.totalorder %v2063, %v2939
    %vm3010 = vcmp.eq.s32.totalorder %v2064, %v2939
    %vm3011 = vcmp.eq.s32.totalorder %v2063, %v2942
    %vm3012 = vcmp.eq.s32.totalorder %v2064, %v2942
    %vm3013 = vcmp.eq.s32.totalorder %v2063, %v2945
    %vm3014 = vcmp.eq.s32.totalorder %v2064, %v2945
    %vm3015 = vcmp.eq.s32.totalorder %v2063, %v2948
    %vm3016 = vcmp.eq.s32.totalorder %v2064, %v2948
    %vm3017 = vcmp.eq.s32.totalorder %v2063, %v2951
    %vm3018 = vcmp.eq.s32.totalorder %v2064, %v2951
    %vm3019 = vcmp.eq.s32.totalorder %v2063, %v2954
    %vm3020 = vcmp.eq.s32.totalorder %v2064, %v2954
    %vm3021 = vcmp.eq.s32.totalorder %v2063, %v2957
    %vm3022 = vcmp.eq.s32.totalorder %v2064, %v2957
    %vm3023 = vcmp.eq.s32.totalorder %v2063, %v2960
    %vm3024 = vcmp.eq.s32.totalorder %v2064, %v2960
    %v3025 = vsel %vm2961, %v1676, 0.0
    %v3026 = vsel %vm2962, %v1678, 0.0
    %v3027 = vsel %vm2963, %v1680, 0.0
    %v3028 = vsel %vm2964, %v1682, 0.0
    %v3029 = vsel %vm2965, %v1686, 0.0
    %v3030 = vsel %vm2966, %v1688, 0.0
    %v3031 = vsel %vm2967, %v1690, 0.0
    %v3032 = vsel %vm2968, %v1692, 0.0
    %v3033 = vsel %vm2969, %v1696, 0.0
    %v3034 = vsel %vm2970, %v1698, 0.0
    %v3035 = vsel %vm2971, %v1700, 0.0
    %v3036 = vsel %vm2972, %v1702, 0.0
    %v3037 = vsel %vm2973, %v1706, 0.0
    %v3038 = vsel %vm2974, %v1708, 0.0
    %v3039 = vsel %vm2975, %v1710, 0.0
    %v3040 = vsel %vm2976, %v1712, 0.0
    %v3041 = vsel %vm2977, %v1716, 0.0
    %v3042 = vsel %vm2978, %v1718, 0.0
    %v3043 = vsel %vm2979, %v1720, 0.0
    %v3044 = vsel %vm2980, %v1722, 0.0
    %v3045 = vsel %vm2981, %v1726, 0.0
    %v3046 = vsel %vm2982, %v1728, 0.0
    %v3047 = vsel %vm2983, %v1730, 0.0
    %v3048 = vsel %vm2984, %v1732, 0.0
    %v3049 = vsel %vm2985, %v1736, 0.0
    %v3050 = vsel %vm2986, %v1738, 0.0
    %v3051 = vsel %vm2987, %v1740, 0.0
    %v3052 = vsel %vm2988, %v1742, 0.0
    %v3053 = vsel %vm2989, %v1746, 0.0
    %v3054 = vsel %vm2990, %v1748, 0.0
    %v3055 = vsel %vm2991, %v1750, 0.0
    %v3056 = vsel %vm2992, %v1752, 0.0
    %v3057 = vsel %vm2993, %v1756, 0.0
    %v3058 = vsel %vm2994, %v1758, 0.0
    %v3059 = vsel %vm2995, %v1760, 0.0
    %v3060 = vsel %vm2996, %v1762, 0.0
    %v3061 = vsel %vm2997, %v1766, 0.0
    %v3062 = vsel %vm2998, %v1768, 0.0
    %v3063 = vsel %vm2999, %v1770, 0.0
    %v3064 = vsel %vm3000, %v1772, 0.0
    %v3065 = vsel %vm3001, %v1776, 0.0
    %v3066 = vsel %vm3002, %v1778, 0.0
    %v3067 = vsel %vm3003, %v1780, 0.0
    %v3068 = vsel %vm3004, %v1782, 0.0
    %v3069 = vsel %vm3005, %v1786, 0.0
    %v3070 = vsel %vm3006, %v1788, 0.0
    %v3071 = vsel %vm3007, %v1790, 0.0
    %v3072 = vsel %vm3008, %v1792, 0.0
    %v3073 = vsel %vm3009, %v1796, 0.0
    %v3074 = vsel %vm3010, %v1798, 0.0
    %v3075 = vsel %vm3011, %v1800, 0.0
    %v3076 = vsel %vm3012, %v1802, 0.0
    %v3077 = vsel %vm3013, %v1806, 0.0
    %v3078 = vsel %vm3014, %v1808, 0.0
    %v3079 = vsel %vm3015, %v1810, 0.0
    %v3080 = vsel %vm3016, %v1812, 0.0
    %v3081 = vsel %vm3017, %v1816, 0.0
    %v3082 = vsel %vm3018, %v1818, 0.0
    %v3083 = vsel %vm3019, %v1820, 0.0
    %v3084 = vsel %vm3020, %v1822, 0.0
    %v3085 = vsel %vm3021, %v1826, 0.0
    %v3086 = vsel %vm3022, %v1828, 0.0
    %v3087 = vsel %vm3023, %v1830, 0.0
    %v3088 = vsel %vm3024, %v1832, 0.0
    %v3089 = vadd.f32 %v3025, %v3026
    %3090 = vadd.xlane.f32.xlu0 %v3089
    %v3091 = vpop.xlane.xlu0 %3090
    %v3092 = vadd.f32 %v3027, %v3028
    %3093 = vadd.xlane.f32.xlu0 %v3092
    %v3094 = vpop.xlane.xlu0 %3093
    %v3095 = vadd.f32 %v3029, %v3030
    %3096 = vadd.xlane.f32.xlu0 %v3095
    %v3097 = vpop.xlane.xlu0 %3096
    %v3098 = vadd.f32 %v3031, %v3032
    %3099 = vadd.xlane.f32.xlu0 %v3098
    %v3100 = vpop.xlane.xlu0 %3099
    %v3101 = vadd.f32 %v3033, %v3034
    %3102 = vadd.xlane.f32.xlu0 %v3101
    %v3103 = vpop.xlane.xlu0 %3102
    %v3104 = vadd.f32 %v3035, %v3036
    %3105 = vadd.xlane.f32.xlu0 %v3104
    %v3106 = vpop.xlane.xlu0 %3105
    %v3107 = vadd.f32 %v3037, %v3038
    %3108 = vadd.xlane.f32.xlu0 %v3107
    %v3109 = vpop.xlane.xlu0 %3108
    %v3110 = vadd.f32 %v3039, %v3040
    %3111 = vadd.xlane.f32.xlu0 %v3110
    %v3112 = vpop.xlane.xlu0 %3111
    %v3113 = vadd.f32 %v3041, %v3042
    %3114 = vadd.xlane.f32.xlu0 %v3113
    %v3115 = vpop.xlane.xlu0 %3114
    %v3116 = vadd.f32 %v3043, %v3044
    %3117 = vadd.xlane.f32.xlu0 %v3116
    %v3118 = vpop.xlane.xlu0 %3117
    %v3119 = vadd.f32 %v3045, %v3046
    %3120 = vadd.xlane.f32.xlu0 %v3119
    %v3121 = vpop.xlane.xlu0 %3120
    %v3122 = vadd.f32 %v3047, %v3048
    %3123 = vadd.xlane.f32.xlu0 %v3122
    %v3124 = vpop.xlane.xlu0 %3123
    %v3125 = vadd.f32 %v3049, %v3050
    %3126 = vadd.xlane.f32.xlu0 %v3125
    %v3127 = vpop.xlane.xlu0 %3126
    %v3128 = vadd.f32 %v3051, %v3052
    %3129 = vadd.xlane.f32.xlu0 %v3128
    %v3130 = vpop.xlane.xlu0 %3129
    %v3131 = vadd.f32 %v3053, %v3054
    %3132 = vadd.xlane.f32.xlu0 %v3131
    %v3133 = vpop.xlane.xlu0 %3132
    %v3134 = vadd.f32 %v3055, %v3056
    %3135 = vadd.xlane.f32.xlu0 %v3134
    %v3136 = vpop.xlane.xlu0 %3135
    %v3137 = vadd.f32 %v3057, %v3058
    %3138 = vadd.xlane.f32.xlu0 %v3137
    %v3139 = vpop.xlane.xlu0 %3138
    %v3140 = vadd.f32 %v3059, %v3060
    %3141 = vadd.xlane.f32.xlu0 %v3140
    %v3142 = vpop.xlane.xlu0 %3141
    %v3143 = vadd.f32 %v3061, %v3062
    %3144 = vadd.xlane.f32.xlu0 %v3143
    %v3145 = vpop.xlane.xlu0 %3144
    %v3146 = vadd.f32 %v3063, %v3064
    %3147 = vadd.xlane.f32.xlu0 %v3146
    %v3148 = vpop.xlane.xlu0 %3147
    %v3149 = vadd.f32 %v3065, %v3066
    %3150 = vadd.xlane.f32.xlu0 %v3149
    %v3151 = vpop.xlane.xlu0 %3150
    %v3152 = vadd.f32 %v3067, %v3068
    %3153 = vadd.xlane.f32.xlu0 %v3152
    %v3154 = vpop.xlane.xlu0 %3153
    %v3155 = vadd.f32 %v3069, %v3070
    %3156 = vadd.xlane.f32.xlu0 %v3155
    %v3157 = vpop.xlane.xlu0 %3156
    %v3158 = vadd.f32 %v3071, %v3072
    %3159 = vadd.xlane.f32.xlu0 %v3158
    %v3160 = vpop.xlane.xlu0 %3159
    %v3161 = vadd.f32 %v3073, %v3074
    %3162 = vadd.xlane.f32.xlu0 %v3161
    %v3163 = vpop.xlane.xlu0 %3162
    %v3164 = vadd.f32 %v3075, %v3076
    %3165 = vadd.xlane.f32.xlu0 %v3164
    %v3166 = vpop.xlane.xlu0 %3165
    %v3167 = vadd.f32 %v3077, %v3078
    %3168 = vadd.xlane.f32.xlu0 %v3167
    %v3169 = vpop.xlane.xlu0 %3168
    %v3170 = vadd.f32 %v3079, %v3080
    %3171 = vadd.xlane.f32.xlu0 %v3170
    %v3172 = vpop.xlane.xlu0 %3171
    %v3173 = vadd.f32 %v3081, %v3082
    %3174 = vadd.xlane.f32.xlu0 %v3173
    %v3175 = vpop.xlane.xlu0 %3174
    %v3176 = vadd.f32 %v3083, %v3084
    %3177 = vadd.xlane.f32.xlu0 %v3176
    %v3178 = vpop.xlane.xlu0 %3177
    %v3179 = vadd.f32 %v3085, %v3086
    %3180 = vadd.xlane.f32.xlu0 %v3179
    %v3181 = vpop.xlane.xlu0 %3180
    %v3182 = vadd.f32 %v3087, %v3088
    %3183 = vadd.xlane.f32.xlu0 %v3182
    %v3184 = vpop.xlane.xlu0 %3183
    %v3185 = vadd.f32 %v2833, %v3091
    %v3186 = vadd.f32 %v2834, %v3094
    %v3187 = vadd.f32 %v2835, %v3097
    %v3188 = vadd.f32 %v2836, %v3100
    %v3189 = vadd.f32 %v2837, %v3103
    %v3190 = vadd.f32 %v2838, %v3106
    %v3191 = vadd.f32 %v2839, %v3109
    %v3192 = vadd.f32 %v2840, %v3112
    %v3193 = vadd.f32 %v2841, %v3115
    %v3194 = vadd.f32 %v2842, %v3118
    %v3195 = vadd.f32 %v2843, %v3121
    %v3196 = vadd.f32 %v2844, %v3124
    %v3197 = vadd.f32 %v2845, %v3127
    %v3198 = vadd.f32 %v2846, %v3130
    %v3199 = vadd.f32 %v2847, %v3133
    %v3200 = vadd.f32 %v2848, %v3136
    %v3201 = vadd.f32 %v2849, %v3139
    %v3202 = vadd.f32 %v2850, %v3142
    %v3203 = vadd.f32 %v2851, %v3145
    %v3204 = vadd.f32 %v2852, %v3148
    %v3205 = vadd.f32 %v2853, %v3151
    %v3206 = vadd.f32 %v2854, %v3154
    %v3207 = vadd.f32 %v2855, %v3157
    %v3208 = vadd.f32 %v2856, %v3160
    %v3209 = vadd.f32 %v2857, %v3163
    %v3210 = vadd.f32 %v2858, %v3166
    %v3211 = vadd.f32 %v2859, %v3169
    %v3212 = vadd.f32 %v2860, %v3172
    %v3213 = vadd.f32 %v2861, %v3175
    %v3214 = vadd.f32 %v2862, %v3178
    %v3215 = vadd.f32 %v2863, %v3181
    %v3216 = vadd.f32 %v2864, %v3184
    %vm3217 = vcmask 23568
    %3218 = vst.msk [vmem:[#allocation3] sm:$0xff] %vm3217, %v3185
    %3219 = vst.msk [vmem:[#allocation3 + $0x8] sm:$0xff] %vm3217, %v3186
    %3220 = vst.msk [vmem:[#allocation3 + $0x10] sm:$0xff] %vm3217, %v3187
    %3221 = vst.msk [vmem:[#allocation3 + $0x18] sm:$0xff] %vm3217, %v3188
    %3222 = vst.msk [vmem:[#allocation3 + $0x20] sm:$0xff] %vm3217, %v3189
    %3223 = vst.msk [vmem:[#allocation3 + $0x28] sm:$0xff] %vm3217, %v3190
    %3224 = vst.msk [vmem:[#allocation3 + $0x30] sm:$0xff] %vm3217, %v3191
    %3225 = vst.msk [vmem:[#allocation3 + $0x38] sm:$0xff] %vm3217, %v3192
    %3226 = vst.msk [vmem:[#allocation3 + $0x40] sm:$0xff] %vm3217, %v3193
    %3227 = vst.msk [vmem:[#allocation3 + $0x48] sm:$0xff] %vm3217, %v3194
    %3228 = vst.msk [vmem:[#allocation3 + $0x50] sm:$0xff] %vm3217, %v3195
    %3229 = vst.msk [vmem:[#allocation3 + $0x58] sm:$0xff] %vm3217, %v3196
    %3230 = vst.msk [vmem:[#allocation3 + $0x60] sm:$0xff] %vm3217, %v3197
    %3231 = vst.msk [vmem:[#allocation3 + $0x68] sm:$0xff] %vm3217, %v3198
    %3232 = vst.msk [vmem:[#allocation3 + $0x70] sm:$0xff] %vm3217, %v3199
    %3233 = vst.msk [vmem:[#allocation3 + $0x78] sm:$0xff] %vm3217, %v3200
    %3234 = vst.msk [vmem:[#allocation3 + $0x80] sm:$0xff] %vm3217, %v3201
    %3235 = vst.msk [vmem:[#allocation3 + $0x88] sm:$0xff] %vm3217, %v3202
    %3236 = vst.msk [vmem:[#allocation3 + $0x90] sm:$0xff] %vm3217, %v3203
    %3237 = vst.msk [vmem:[#allocation3 + $0x98] sm:$0xff] %vm3217, %v3204
    %3238 = vst.msk [vmem:[#allocation3 + $0xa0] sm:$0xff] %vm3217, %v3205
    %3239 = vst.msk [vmem:[#allocation3 + $0xa8] sm:$0xff] %vm3217, %v3206
    %3240 = vst.msk [vmem:[#allocation3 + $0xb0] sm:$0xff] %vm3217, %v3207
    %3241 = vst.msk [vmem:[#allocation3 + $0xb8] sm:$0xff] %vm3217, %v3208
    %3242 = vst.msk [vmem:[#allocation3 + $0xc0] sm:$0xff] %vm3217, %v3209
    %3243 = vst.msk [vmem:[#allocation3 + $0xc8] sm:$0xff] %vm3217, %v3210
    %3244 = vst.msk [vmem:[#allocation3 + $0xd0] sm:$0xff] %vm3217, %v3211
    %3245 = vst.msk [vmem:[#allocation3 + $0xd8] sm:$0xff] %vm3217, %v3212
    %3246 = vst.msk [vmem:[#allocation3 + $0xe0] sm:$0xff] %vm3217, %v3213
    %3247 = vst.msk [vmem:[#allocation3 + $0xe8] sm:$0xff] %vm3217, %v3214
    %3248 = vst.msk [vmem:[#allocation3 + $0xf0] sm:$0xff] %vm3217, %v3215
    %3249 = vst.msk [vmem:[#allocation3 + $0xf8] sm:$0xff] %vm3217, %v3216
    %v3250 = vld [vmem:[#allocation3] sm:$0xff]
    %v3251 = vld [vmem:[#allocation3 + $0x8] sm:$0xff]
    %v3252 = vld [vmem:[#allocation3 + $0x10] sm:$0xff]
    %v3253 = vld [vmem:[#allocation3 + $0x18] sm:$0xff]
    %v3254 = vld [vmem:[#allocation3 + $0x20] sm:$0xff]
    %v3255 = vld [vmem:[#allocation3 + $0x28] sm:$0xff]
    %v3256 = vld [vmem:[#allocation3 + $0x30] sm:$0xff]
    %v3257 = vld [vmem:[#allocation3 + $0x38] sm:$0xff]
    %v3258 = vld [vmem:[#allocation3 + $0x40] sm:$0xff]
    %v3259 = vld [vmem:[#allocation3 + $0x48] sm:$0xff]
    %v3260 = vld [vmem:[#allocation3 + $0x50] sm:$0xff]
    %v3261 = vld [vmem:[#allocation3 + $0x58] sm:$0xff]
    %v3262 = vld [vmem:[#allocation3 + $0x60] sm:$0xff]
    %v3263 = vld [vmem:[#allocation3 + $0x68] sm:$0xff]
    %v3264 = vld [vmem:[#allocation3 + $0x70] sm:$0xff]
    %v3265 = vld [vmem:[#allocation3 + $0x78] sm:$0xff]
    %v3266 = vld [vmem:[#allocation3 + $0x80] sm:$0xff]
    %v3267 = vld [vmem:[#allocation3 + $0x88] sm:$0xff]
    %v3268 = vld [vmem:[#allocation3 + $0x90] sm:$0xff]
    %v3269 = vld [vmem:[#allocation3 + $0x98] sm:$0xff]
    %v3270 = vld [vmem:[#allocation3 + $0xa0] sm:$0xff]
    %v3271 = vld [vmem:[#allocation3 + $0xa8] sm:$0xff]
    %v3272 = vld [vmem:[#allocation3 + $0xb0] sm:$0xff]
    %v3273 = vld [vmem:[#allocation3 + $0xb8] sm:$0xff]
    %v3274 = vld [vmem:[#allocation3 + $0xc0] sm:$0xff]
    %v3275 = vld [vmem:[#allocation3 + $0xc8] sm:$0xff]
    %v3276 = vld [vmem:[#allocation3 + $0xd0] sm:$0xff]
    %v3277 = vld [vmem:[#allocation3 + $0xd8] sm:$0xff]
    %v3278 = vld [vmem:[#allocation3 + $0xe0] sm:$0xff]
    %v3279 = vld [vmem:[#allocation3 + $0xe8] sm:$0xff]
    %v3280 = vld [vmem:[#allocation3 + $0xf0] sm:$0xff]
    %v3281 = vld [vmem:[#allocation3 + $0xf8] sm:$0xff]
    %v3282 = vmax.f32 %v3250, %v2067
    %v3283 = vmax.f32 %v3251, %v2070
    %v3284 = vmax.f32 %v3252, %v2073
    %v3285 = vmax.f32 %v3253, %v2076
    %v3286 = vmax.f32 %v3254, %v2079
    %v3287 = vmax.f32 %v3255, %v2082
    %v3288 = vmax.f32 %v3256, %v2085
    %v3289 = vmax.f32 %v3257, %v2088
    %v3290 = vmax.f32 %v3258, %v2091
    %v3291 = vmax.f32 %v3259, %v2094
    %v3292 = vmax.f32 %v3260, %v2097
    %v3293 = vmax.f32 %v3261, %v2100
    %v3294 = vmax.f32 %v3262, %v2103
    %v3295 = vmax.f32 %v3263, %v2106
    %v3296 = vmax.f32 %v3264, %v2109
    %v3297 = vmax.f32 %v3265, %v2112
    %v3298 = vmax.f32 %v3266, %v2115
    %v3299 = vmax.f32 %v3267, %v2118
    %v3300 = vmax.f32 %v3268, %v2121
    %v3301 = vmax.f32 %v3269, %v2124
    %v3302 = vmax.f32 %v3270, %v2127
    %v3303 = vmax.f32 %v3271, %v2130
    %v3304 = vmax.f32 %v3272, %v2133
    %v3305 = vmax.f32 %v3273, %v2136
    %v3306 = vmax.f32 %v3274, %v2139
    %v3307 = vmax.f32 %v3275, %v2142
    %v3308 = vmax.f32 %v3276, %v2145
    %v3309 = vmax.f32 %v3277, %v2148
    %v3310 = vmax.f32 %v3278, %v2151
    %v3311 = vmax.f32 %v3279, %v2154
    %v3312 = vmax.f32 %v3280, %v2157
    %v3313 = vmax.f32 %v3281, %v2160
    %v3314 = vsub.f32 %v3250, %v3282
    %v3315 = vsub.f32 %v3251, %v3283
    %v3316 = vsub.f32 %v3252, %v3284
    %v3317 = vsub.f32 %v3253, %v3285
    %v3318 = vsub.f32 %v3254, %v3286
    %v3319 = vsub.f32 %v3255, %v3287
    %v3320 = vsub.f32 %v3256, %v3288
    %v3321 = vsub.f32 %v3257, %v3289
    %v3322 = vsub.f32 %v3258, %v3290
    %v3323 = vsub.f32 %v3259, %v3291
    %v3324 = vsub.f32 %v3260, %v3292
    %v3325 = vsub.f32 %v3261, %v3293
    %v3326 = vsub.f32 %v3262, %v3294
    %v3327 = vsub.f32 %v3263, %v3295
    %v3328 = vsub.f32 %v3264, %v3296
    %v3329 = vsub.f32 %v3265, %v3297
    %v3330 = vsub.f32 %v3266, %v3298
    %v3331 = vsub.f32 %v3267, %v3299
    %v3332 = vsub.f32 %v3268, %v3300
    %v3333 = vsub.f32 %v3269, %v3301
    %v3334 = vsub.f32 %v3270, %v3302
    %v3335 = vsub.f32 %v3271, %v3303
    %v3336 = vsub.f32 %v3272, %v3304
    %v3337 = vsub.f32 %v3273, %v3305
    %v3338 = vsub.f32 %v3274, %v3306
    %v3339 = vsub.f32 %v3275, %v3307
    %v3340 = vsub.f32 %v3276, %v3308
    %v3341 = vsub.f32 %v3277, %v3309
    %v3342 = vsub.f32 %v3278, %v3310
    %v3343 = vsub.f32 %v3279, %v3311
    %v3344 = vsub.f32 %v3280, %v3312
    %v3345 = vsub.f32 %v3281, %v3313
    %v3346 = vmul.f32 %v3314, 1.442695
    %v3347 = vpow.pop %v3346
    %v3348 = vmul.f32 %v3315, 1.442695
    %v3349 = vpow.pop %v3348
    %v3350 = vmul.f32 %v3316, 1.442695
    %v3351 = vpow.pop %v3350
    %v3352 = vmul.f32 %v3317, 1.442695
    %v3353 = vpow.pop %v3352
    %v3354 = vmul.f32 %v3318, 1.442695
    %v3355 = vpow.pop %v3354
    %v3356 = vmul.f32 %v3319, 1.442695
    %v3357 = vpow.pop %v3356
    %v3358 = vmul.f32 %v3320, 1.442695
    %v3359 = vpow.pop %v3358
    %v3360 = vmul.f32 %v3321, 1.442695
    %v3361 = vpow.pop %v3360
    %v3362 = vmul.f32 %v3322, 1.442695
    %v3363 = vpow.pop %v3362
    %v3364 = vmul.f32 %v3323, 1.442695
    %v3365 = vpow.pop %v3364
    %v3366 = vmul.f32 %v3324, 1.442695
    %v3367 = vpow.pop %v3366
    %v3368 = vmul.f32 %v3325, 1.442695
    %v3369 = vpow.pop %v3368
    %v3370 = vmul.f32 %v3326, 1.442695
    %v3371 = vpow.pop %v3370
    %v3372 = vmul.f32 %v3327, 1.442695
    %v3373 = vpow.pop %v3372
    %v3374 = vmul.f32 %v3328, 1.442695
    %v3375 = vpow.pop %v3374
    %v3376 = vmul.f32 %v3329, 1.442695
    %v3377 = vpow.pop %v3376
    %v3378 = vmul.f32 %v3330, 1.442695
    %v3379 = vpow.pop %v3378
    %v3380 = vmul.f32 %v3331, 1.442695
    %v3381 = vpow.pop %v3380
    %v3382 = vmul.f32 %v3332, 1.442695
    %v3383 = vpow.pop %v3382
    %v3384 = vmul.f32 %v3333, 1.442695
    %v3385 = vpow.pop %v3384
    %v3386 = vmul.f32 %v3334, 1.442695
    %v3387 = vpow.pop %v3386
    %v3388 = vmul.f32 %v3335, 1.442695
    %v3389 = vpow.pop %v3388
    %v3390 = vmul.f32 %v3336, 1.442695
    %v3391 = vpow.pop %v3390
    %v3392 = vmul.f32 %v3337, 1.442695
    %v3393 = vpow.pop %v3392
    %v3394 = vmul.f32 %v3338, 1.442695
    %v3395 = vpow.pop %v3394
    %v3396 = vmul.f32 %v3339, 1.442695
    %v3397 = vpow.pop %v3396
    %v3398 = vmul.f32 %v3340, 1.442695
    %v3399 = vpow.pop %v3398
    %v3400 = vmul.f32 %v3341, 1.442695
    %v3401 = vpow.pop %v3400
    %v3402 = vmul.f32 %v3342, 1.442695
    %v3403 = vpow.pop %v3402
    %v3404 = vmul.f32 %v3343, 1.442695
    %v3405 = vpow.pop %v3404
    %v3406 = vmul.f32 %v3344, 1.442695
    %v3407 = vpow.pop %v3406
    %v3408 = vmul.f32 %v3345, 1.442695
    %v3409 = vpow.pop %v3408
    %3442 = vrot.lane.b32.xlu0 %v3347, 1
    %v3443 = vpop.permute.xlu0 %3442
    %3444 = vrot.lane.b32.xlu0 %v3349, 1
    %v3445 = vpop.permute.xlu0 %3444
    %3446 = vrot.lane.b32.xlu0 %v3351, 1
    %v3447 = vpop.permute.xlu0 %3446
    %3448 = vrot.lane.b32.xlu0 %v3353, 1
    %v3449 = vpop.permute.xlu0 %3448
    %3450 = vrot.lane.b32.xlu0 %v3355, 1
    %v3451 = vpop.permute.xlu0 %3450
    %3452 = vrot.lane.b32.xlu0 %v3357, 1
    %v3453 = vpop.permute.xlu0 %3452
    %3454 = vrot.lane.b32.xlu0 %v3359, 1
    %v3455 = vpop.permute.xlu0 %3454
    %3456 = vrot.lane.b32.xlu0 %v3361, 1
    %v3457 = vpop.permute.xlu0 %3456
    %3458 = vrot.lane.b32.xlu0 %v3363, 1
    %v3459 = vpop.permute.xlu0 %3458
    %3460 = vrot.lane.b32.xlu0 %v3365, 1
    %v3461 = vpop.permute.xlu0 %3460
    %3462 = vrot.lane.b32.xlu0 %v3367, 1
    %v3463 = vpop.permute.xlu0 %3462
    %3464 = vrot.lane.b32.xlu0 %v3369, 1
    %v3465 = vpop.permute.xlu0 %3464
    %3466 = vrot.lane.b32.xlu0 %v3371, 1
    %v3467 = vpop.permute.xlu0 %3466
    %3468 = vrot.lane.b32.xlu0 %v3373, 1
    %v3469 = vpop.permute.xlu0 %3468
    %3470 = vrot.lane.b32.xlu0 %v3375, 1
    %v3471 = vpop.permute.xlu0 %3470
    %3472 = vrot.lane.b32.xlu0 %v3377, 1
    %v3473 = vpop.permute.xlu0 %3472
    %3474 = vrot.lane.b32.xlu0 %v3379, 1
    %v3475 = vpop.permute.xlu0 %3474
    %3476 = vrot.lane.b32.xlu0 %v3381, 1
    %v3477 = vpop.permute.xlu0 %3476
    %3478 = vrot.lane.b32.xlu0 %v3383, 1
    %v3479 = vpop.permute.xlu0 %3478
    %3480 = vrot.lane.b32.xlu0 %v3385, 1
    %v3481 = vpop.permute.xlu0 %3480
    %3482 = vrot.lane.b32.xlu0 %v3387, 1
    %v3483 = vpop.permute.xlu0 %3482
    %3484 = vrot.lane.b32.xlu0 %v3389, 1
    %v3485 = vpop.permute.xlu0 %3484
    %3486 = vrot.lane.b32.xlu0 %v3391, 1
    %v3487 = vpop.permute.xlu0 %3486
    %3488 = vrot.lane.b32.xlu0 %v3393, 1
    %v3489 = vpop.permute.xlu0 %3488
    %3490 = vrot.lane.b32.xlu0 %v3395, 1
    %v3491 = vpop.permute.xlu0 %3490
    %3492 = vrot.lane.b32.xlu0 %v3397, 1
    %v3493 = vpop.permute.xlu0 %3492
    %3494 = vrot.lane.b32.xlu0 %v3399, 1
    %v3495 = vpop.permute.xlu0 %3494
    %3496 = vrot.lane.b32.xlu0 %v3401, 1
    %v3497 = vpop.permute.xlu0 %3496
    %3498 = vrot.lane.b32.xlu0 %v3403, 1
    %v3499 = vpop.permute.xlu0 %3498
    %3500 = vrot.lane.b32.xlu0 %v3405, 1
    %v3501 = vpop.permute.xlu0 %3500
    %3502 = vrot.lane.b32.xlu0 %v3407, 1
    %v3503 = vpop.permute.xlu0 %3502
    %3504 = vrot.lane.b32.xlu0 %v3409, 1
    %v3505 = vpop.permute.xlu0 %3504
    %v3538 = vmul.f32 %v3250, %v3443
    %v3539 = vmul.f32 %v3251, %v3445
    %v3540 = vmul.f32 %v3252, %v3447
    %v3541 = vmul.f32 %v3253, %v3449
    %v3542 = vmul.f32 %v3254, %v3451
    %v3543 = vmul.f32 %v3255, %v3453
    %v3544 = vmul.f32 %v3256, %v3455
    %v3545 = vmul.f32 %v3257, %v3457
    %v3546 = vmul.f32 %v3258, %v3459
    %v3547 = vmul.f32 %v3259, %v3461
    %v3548 = vmul.f32 %v3260, %v3463
    %v3549 = vmul.f32 %v3261, %v3465
    %v3550 = vmul.f32 %v3262, %v3467
    %v3551 = vmul.f32 %v3263, %v3469
    %v3552 = vmul.f32 %v3264, %v3471
    %v3553 = vmul.f32 %v3265, %v3473
    %v3554 = vmul.f32 %v3266, %v3475
    %v3555 = vmul.f32 %v3267, %v3477
    %v3556 = vmul.f32 %v3268, %v3479
    %v3557 = vmul.f32 %v3269, %v3481
    %v3558 = vmul.f32 %v3270, %v3483
    %v3559 = vmul.f32 %v3271, %v3485
    %v3560 = vmul.f32 %v3272, %v3487
    %v3561 = vmul.f32 %v3273, %v3489
    %v3562 = vmul.f32 %v3274, %v3491
    %v3563 = vmul.f32 %v3275, %v3493
    %v3564 = vmul.f32 %v3276, %v3495
    %v3565 = vmul.f32 %v3277, %v3497
    %v3566 = vmul.f32 %v3278, %v3499
    %v3567 = vmul.f32 %v3279, %v3501
    %v3568 = vmul.f32 %v3280, %v3503
    %v3569 = vmul.f32 %v3281, %v3505
    %3571 = vset.pattern.permute.xlu0 0
    %3572 = vperm.xlu0 %3571, %v3282
    %v3573 = vpop.permute.xlu0 %3572
    %3576 = vset.pattern.permute.xlu0 0
    %3577 = vperm.xlu0 %3576, %v3283
    %v3578 = vpop.permute.xlu0 %3577
    %3581 = vset.pattern.permute.xlu0 0
    %3582 = vperm.xlu0 %3581, %v3284
    %v3583 = vpop.permute.xlu0 %3582
    %3586 = vset.pattern.permute.xlu0 0
    %3587 = vperm.xlu0 %3586, %v3285
    %v3588 = vpop.permute.xlu0 %3587
    %3591 = vset.pattern.permute.xlu0 0
    %3592 = vperm.xlu0 %3591, %v3286
    %v3593 = vpop.permute.xlu0 %3592
    %3596 = vset.pattern.permute.xlu0 0
    %3597 = vperm.xlu0 %3596, %v3287
    %v3598 = vpop.permute.xlu0 %3597
    %3601 = vset.pattern.permute.xlu0 0
    %3602 = vperm.xlu0 %3601, %v3288
    %v3603 = vpop.permute.xlu0 %3602
    %3606 = vset.pattern.permute.xlu0 0
    %3607 = vperm.xlu0 %3606, %v3289
    %v3608 = vpop.permute.xlu0 %3607
    %3611 = vset.pattern.permute.xlu0 0
    %3612 = vperm.xlu0 %3611, %v3290
    %v3613 = vpop.permute.xlu0 %3612
    %3616 = vset.pattern.permute.xlu0 0
    %3617 = vperm.xlu0 %3616, %v3291
    %v3618 = vpop.permute.xlu0 %3617
    %3621 = vset.pattern.permute.xlu0 0
    %3622 = vperm.xlu0 %3621, %v3292
    %v3623 = vpop.permute.xlu0 %3622
    %3626 = vset.pattern.permute.xlu0 0
    %3627 = vperm.xlu0 %3626, %v3293
    %v3628 = vpop.permute.xlu0 %3627
    %3631 = vset.pattern.permute.xlu0 0
    %3632 = vperm.xlu0 %3631, %v3294
    %v3633 = vpop.permute.xlu0 %3632
    %3636 = vset.pattern.permute.xlu0 0
    %3637 = vperm.xlu0 %3636, %v3295
    %v3638 = vpop.permute.xlu0 %3637
    %3641 = vset.pattern.permute.xlu0 0
    %3642 = vperm.xlu0 %3641, %v3296
    %v3643 = vpop.permute.xlu0 %3642
    %3646 = vset.pattern.permute.xlu0 0
    %3647 = vperm.xlu0 %3646, %v3297
    %v3648 = vpop.permute.xlu0 %3647
    %3651 = vset.pattern.permute.xlu0 0
    %3652 = vperm.xlu0 %3651, %v3298
    %v3653 = vpop.permute.xlu0 %3652
    %3656 = vset.pattern.permute.xlu0 0
    %3657 = vperm.xlu0 %3656, %v3299
    %v3658 = vpop.permute.xlu0 %3657
    %3661 = vset.pattern.permute.xlu0 0
    %3662 = vperm.xlu0 %3661, %v3300
    %v3663 = vpop.permute.xlu0 %3662
    %3666 = vset.pattern.permute.xlu0 0
    %3667 = vperm.xlu0 %3666, %v3301
    %v3668 = vpop.permute.xlu0 %3667
    %3671 = vset.pattern.permute.xlu0 0
    %3672 = vperm.xlu0 %3671, %v3302
    %v3673 = vpop.permute.xlu0 %3672
    %3676 = vset.pattern.permute.xlu0 0
    %3677 = vperm.xlu0 %3676, %v3303
    %v3678 = vpop.permute.xlu0 %3677
    %3681 = vset.pattern.permute.xlu0 0
    %3682 = vperm.xlu0 %3681, %v3304
    %v3683 = vpop.permute.xlu0 %3682
    %3686 = vset.pattern.permute.xlu0 0
    %3687 = vperm.xlu0 %3686, %v3305
    %v3688 = vpop.permute.xlu0 %3687
    %3691 = vset.pattern.permute.xlu0 0
    %3692 = vperm.xlu0 %3691, %v3306
    %v3693 = vpop.permute.xlu0 %3692
    %3696 = vset.pattern.permute.xlu0 0
    %3697 = vperm.xlu0 %3696, %v3307
    %v3698 = vpop.permute.xlu0 %3697
    %3701 = vset.pattern.permute.xlu0 0
    %3702 = vperm.xlu0 %3701, %v3308
    %v3703 = vpop.permute.xlu0 %3702
    %3706 = vset.pattern.permute.xlu0 0
    %3707 = vperm.xlu0 %3706, %v3309
    %v3708 = vpop.permute.xlu0 %3707
    %3711 = vset.pattern.permute.xlu0 0
    %3712 = vperm.xlu0 %3711, %v3310
    %v3713 = vpop.permute.xlu0 %3712
    %3716 = vset.pattern.permute.xlu0 0
    %3717 = vperm.xlu0 %3716, %v3311
    %v3718 = vpop.permute.xlu0 %3717
    %3721 = vset.pattern.permute.xlu0 0
    %3722 = vperm.xlu0 %3721, %v3312
    %v3723 = vpop.permute.xlu0 %3722
    %3726 = vset.pattern.permute.xlu0 0
    %3727 = vperm.xlu0 %3726, %v3313
    %v3728 = vpop.permute.xlu0 %3727
    %v3730 = vsub.f32 %v1676, %v3573
    %v3731 = vsub.f32 %v1678, %v3573
    %v3732 = vsub.f32 %v1680, %v3578
    %v3733 = vsub.f32 %v1682, %v3578
    %v3734 = vsub.f32 %v1686, %v3583
    %v3735 = vsub.f32 %v1688, %v3583
    %v3736 = vsub.f32 %v1690, %v3588
    %v3737 = vsub.f32 %v1692, %v3588
    %v3738 = vsub.f32 %v1696, %v3593
    %v3739 = vsub.f32 %v1698, %v3593
    %v3740 = vsub.f32 %v1700, %v3598
    %v3741 = vsub.f32 %v1702, %v3598
    %v3742 = vsub.f32 %v1706, %v3603
    %v3743 = vsub.f32 %v1708, %v3603
    %v3744 = vsub.f32 %v1710, %v3608
    %v3745 = vsub.f32 %v1712, %v3608
    %v3746 = vsub.f32 %v1716, %v3613
    %v3747 = vsub.f32 %v1718, %v3613
    %v3748 = vsub.f32 %v1720, %v3618
    %v3749 = vsub.f32 %v1722, %v3618
    %v3750 = vsub.f32 %v1726, %v3623
    %v3751 = vsub.f32 %v1728, %v3623
    %v3752 = vsub.f32 %v1730, %v3628
    %v3753 = vsub.f32 %v1732, %v3628
    %v3754 = vsub.f32 %v1736, %v3633
    %v3755 = vsub.f32 %v1738, %v3633
    %v3756 = vsub.f32 %v1740, %v3638
    %v3757 = vsub.f32 %v1742, %v3638
    %v3758 = vsub.f32 %v1746, %v3643
    %v3759 = vsub.f32 %v1748, %v3643
    %v3760 = vsub.f32 %v1750, %v3648
    %v3761 = vsub.f32 %v1752, %v3648
    %v3762 = vsub.f32 %v1756, %v3653
    %v3763 = vsub.f32 %v1758, %v3653
    %v3764 = vsub.f32 %v1760, %v3658
    %v3765 = vsub.f32 %v1762, %v3658
    %v3766 = vsub.f32 %v1766, %v3663
    %v3767 = vsub.f32 %v1768, %v3663
    %v3768 = vsub.f32 %v1770, %v3668
    %v3769 = vsub.f32 %v1772, %v3668
    %v3770 = vsub.f32 %v1776, %v3673
    %v3771 = vsub.f32 %v1778, %v3673
    %v3772 = vsub.f32 %v1780, %v3678
    %v3773 = vsub.f32 %v1782, %v3678
    %v3774 = vsub.f32 %v1786, %v3683
    %v3775 = vsub.f32 %v1788, %v3683
    %v3776 = vsub.f32 %v1790, %v3688
    %v3777 = vsub.f32 %v1792, %v3688
    %v3778 = vsub.f32 %v1796, %v3693
    %v3779 = vsub.f32 %v1798, %v3693
    %v3780 = vsub.f32 %v1800, %v3698
    %v3781 = vsub.f32 %v1802, %v3698
    %v3782 = vsub.f32 %v1806, %v3703
    %v3783 = vsub.f32 %v1808, %v3703
    %v3784 = vsub.f32 %v1810, %v3708
    %v3785 = vsub.f32 %v1812, %v3708
    %v3786 = vsub.f32 %v1816, %v3713
    %v3787 = vsub.f32 %v1818, %v3713
    %v3788 = vsub.f32 %v1820, %v3718
    %v3789 = vsub.f32 %v1822, %v3718
    %v3790 = vsub.f32 %v1826, %v3723
    %v3791 = vsub.f32 %v1828, %v3723
    %v3792 = vsub.f32 %v1830, %v3728
    %v3793 = vsub.f32 %v1832, %v3728
    %v3794 = vmul.f32 %v3730, 1.442695
    %v3795 = vpow.pop %v3794
    %v3796 = vmul.f32 %v3731, 1.442695
    %v3797 = vpow.pop %v3796
    %v3798 = vmul.f32 %v3732, 1.442695
    %v3799 = vpow.pop %v3798
    %v3800 = vmul.f32 %v3733, 1.442695
    %v3801 = vpow.pop %v3800
    %v3802 = vmul.f32 %v3734, 1.442695
    %v3803 = vpow.pop %v3802
    %v3804 = vmul.f32 %v3735, 1.442695
    %v3805 = vpow.pop %v3804
    %v3806 = vmul.f32 %v3736, 1.442695
    %v3807 = vpow.pop %v3806
    %v3808 = vmul.f32 %v3737, 1.442695
    %v3809 = vpow.pop %v3808
    %v3810 = vmul.f32 %v3738, 1.442695
    %v3811 = vpow.pop %v3810
    %v3812 = vmul.f32 %v3739, 1.442695
    %v3813 = vpow.pop %v3812
    %v3814 = vmul.f32 %v3740, 1.442695
    %v3815 = vpow.pop %v3814
    %v3816 = vmul.f32 %v3741, 1.442695
    %v3817 = vpow.pop %v3816
    %v3818 = vmul.f32 %v3742, 1.442695
    %v3819 = vpow.pop %v3818
    %v3820 = vmul.f32 %v3743, 1.442695
    %v3821 = vpow.pop %v3820
    %v3822 = vmul.f32 %v3744, 1.442695
    %v3823 = vpow.pop %v3822
    %v3824 = vmul.f32 %v3745, 1.442695
    %v3825 = vpow.pop %v3824
    %v3826 = vmul.f32 %v3746, 1.442695
    %v3827 = vpow.pop %v3826
    %v3828 = vmul.f32 %v3747, 1.442695
    %v3829 = vpow.pop %v3828
    %v3830 = vmul.f32 %v3748, 1.442695
    %v3831 = vpow.pop %v3830
    %v3832 = vmul.f32 %v3749, 1.442695
    %v3833 = vpow.pop %v3832
    %v3834 = vmul.f32 %v3750, 1.442695
    %v3835 = vpow.pop %v3834
    %v3836 = vmul.f32 %v3751, 1.442695
    %v3837 = vpow.pop %v3836
    %v3838 = vmul.f32 %v3752, 1.442695
    %v3839 = vpow.pop %v3838
    %v3840 = vmul.f32 %v3753, 1.442695
    %v3841 = vpow.pop %v3840
    %v3842 = vmul.f32 %v3754, 1.442695
    %v3843 = vpow.pop %v3842
    %v3844 = vmul.f32 %v3755, 1.442695
    %v3845 = vpow.pop %v3844
    %v3846 = vmul.f32 %v3756, 1.442695
    %v3847 = vpow.pop %v3846
    %v3848 = vmul.f32 %v3757, 1.442695
    %v3849 = vpow.pop %v3848
    %v3850 = vmul.f32 %v3758, 1.442695
    %v3851 = vpow.pop %v3850
    %v3852 = vmul.f32 %v3759, 1.442695
    %v3853 = vpow.pop %v3852
    %v3854 = vmul.f32 %v3760, 1.442695
    %v3855 = vpow.pop %v3854
    %v3856 = vmul.f32 %v3761, 1.442695
    %v3857 = vpow.pop %v3856
    %v3858 = vmul.f32 %v3762, 1.442695
    %v3859 = vpow.pop %v3858
    %v3860 = vmul.f32 %v3763, 1.442695
    %v3861 = vpow.pop %v3860
    %v3862 = vmul.f32 %v3764, 1.442695
    %v3863 = vpow.pop %v3862
    %v3864 = vmul.f32 %v3765, 1.442695
    %v3865 = vpow.pop %v3864
    %v3866 = vmul.f32 %v3766, 1.442695
    %v3867 = vpow.pop %v3866
    %v3868 = vmul.f32 %v3767, 1.442695
    %v3869 = vpow.pop %v3868
    %v3870 = vmul.f32 %v3768, 1.442695
    %v3871 = vpow.pop %v3870
    %v3872 = vmul.f32 %v3769, 1.442695
    %v3873 = vpow.pop %v3872
    %v3874 = vmul.f32 %v3770, 1.442695
    %v3875 = vpow.pop %v3874
    %v3876 = vmul.f32 %v3771, 1.442695
    %v3877 = vpow.pop %v3876
    %v3878 = vmul.f32 %v3772, 1.442695
    %v3879 = vpow.pop %v3878
    %v3880 = vmul.f32 %v3773, 1.442695
    %v3881 = vpow.pop %v3880
    %v3882 = vmul.f32 %v3774, 1.442695
    %v3883 = vpow.pop %v3882
    %v3884 = vmul.f32 %v3775, 1.442695
    %v3885 = vpow.pop %v3884
    %v3886 = vmul.f32 %v3776, 1.442695
    %v3887 = vpow.pop %v3886
    %v3888 = vmul.f32 %v3777, 1.442695
    %v3889 = vpow.pop %v3888
    %v3890 = vmul.f32 %v3778, 1.442695
    %v3891 = vpow.pop %v3890
    %v3892 = vmul.f32 %v3779, 1.442695
    %v3893 = vpow.pop %v3892
    %v3894 = vmul.f32 %v3780, 1.442695
    %v3895 = vpow.pop %v3894
    %v3896 = vmul.f32 %v3781, 1.442695
    %v3897 = vpow.pop %v3896
    %v3898 = vmul.f32 %v3782, 1.442695
    %v3899 = vpow.pop %v3898
    %v3900 = vmul.f32 %v3783, 1.442695
    %v3901 = vpow.pop %v3900
    %v3902 = vmul.f32 %v3784, 1.442695
    %v3903 = vpow.pop %v3902
    %v3904 = vmul.f32 %v3785, 1.442695
    %v3905 = vpow.pop %v3904
    %v3906 = vmul.f32 %v3786, 1.442695
    %v3907 = vpow.pop %v3906
    %v3908 = vmul.f32 %v3787, 1.442695
    %v3909 = vpow.pop %v3908
    %v3910 = vmul.f32 %v3788, 1.442695
    %v3911 = vpow.pop %v3910
    %v3912 = vmul.f32 %v3789, 1.442695
    %v3913 = vpow.pop %v3912
    %v3914 = vmul.f32 %v3790, 1.442695
    %v3915 = vpow.pop %v3914
    %v3916 = vmul.f32 %v3791, 1.442695
    %v3917 = vpow.pop %v3916
    %v3918 = vmul.f32 %v3792, 1.442695
    %v3919 = vpow.pop %v3918
    %v3920 = vmul.f32 %v3793, 1.442695
    %v3921 = vpow.pop %v3920
    %v3922 = vadd.f32 %v3795, %v3797
    %3923 = vadd.xlane.f32.xlu0 %v3922
    %v3924 = vpop.xlane.xlu0 %3923
    %v3925 = vadd.f32 %v3799, %v3801
    %3926 = vadd.xlane.f32.xlu0 %v3925
    %v3927 = vpop.xlane.xlu0 %3926
    %v3928 = vadd.f32 %v3803, %v3805
    %3929 = vadd.xlane.f32.xlu0 %v3928
    %v3930 = vpop.xlane.xlu0 %3929
    %v3931 = vadd.f32 %v3807, %v3809
    %3932 = vadd.xlane.f32.xlu0 %v3931
    %v3933 = vpop.xlane.xlu0 %3932
    %v3934 = vadd.f32 %v3811, %v3813
    %3935 = vadd.xlane.f32.xlu0 %v3934
    %v3936 = vpop.xlane.xlu0 %3935
    %v3937 = vadd.f32 %v3815, %v3817
    %3938 = vadd.xlane.f32.xlu0 %v3937
    %v3939 = vpop.xlane.xlu0 %3938
    %v3940 = vadd.f32 %v3819, %v3821
    %3941 = vadd.xlane.f32.xlu0 %v3940
    %v3942 = vpop.xlane.xlu0 %3941
    %v3943 = vadd.f32 %v3823, %v3825
    %3944 = vadd.xlane.f32.xlu0 %v3943
    %v3945 = vpop.xlane.xlu0 %3944
    %v3946 = vadd.f32 %v3827, %v3829
    %3947 = vadd.xlane.f32.xlu0 %v3946
    %v3948 = vpop.xlane.xlu0 %3947
    %v3949 = vadd.f32 %v3831, %v3833
    %3950 = vadd.xlane.f32.xlu0 %v3949
    %v3951 = vpop.xlane.xlu0 %3950
    %v3952 = vadd.f32 %v3835, %v3837
    %3953 = vadd.xlane.f32.xlu0 %v3952
    %v3954 = vpop.xlane.xlu0 %3953
    %v3955 = vadd.f32 %v3839, %v3841
    %3956 = vadd.xlane.f32.xlu0 %v3955
    %v3957 = vpop.xlane.xlu0 %3956
    %v3958 = vadd.f32 %v3843, %v3845
    %3959 = vadd.xlane.f32.xlu0 %v3958
    %v3960 = vpop.xlane.xlu0 %3959
    %v3961 = vadd.f32 %v3847, %v3849
    %3962 = vadd.xlane.f32.xlu0 %v3961
    %v3963 = vpop.xlane.xlu0 %3962
    %v3964 = vadd.f32 %v3851, %v3853
    %3965 = vadd.xlane.f32.xlu0 %v3964
    %v3966 = vpop.xlane.xlu0 %3965
    %v3967 = vadd.f32 %v3855, %v3857
    %3968 = vadd.xlane.f32.xlu0 %v3967
    %v3969 = vpop.xlane.xlu0 %3968
    %v3970 = vadd.f32 %v3859, %v3861
    %3971 = vadd.xlane.f32.xlu0 %v3970
    %v3972 = vpop.xlane.xlu0 %3971
    %v3973 = vadd.f32 %v3863, %v3865
    %3974 = vadd.xlane.f32.xlu0 %v3973
    %v3975 = vpop.xlane.xlu0 %3974
    %v3976 = vadd.f32 %v3867, %v3869
    %3977 = vadd.xlane.f32.xlu0 %v3976
    %v3978 = vpop.xlane.xlu0 %3977
    %v3979 = vadd.f32 %v3871, %v3873
    %3980 = vadd.xlane.f32.xlu0 %v3979
    %v3981 = vpop.xlane.xlu0 %3980
    %v3982 = vadd.f32 %v3875, %v3877
    %3983 = vadd.xlane.f32.xlu0 %v3982
    %v3984 = vpop.xlane.xlu0 %3983
    %v3985 = vadd.f32 %v3879, %v3881
    %3986 = vadd.xlane.f32.xlu0 %v3985
    %v3987 = vpop.xlane.xlu0 %3986
    %v3988 = vadd.f32 %v3883, %v3885
    %3989 = vadd.xlane.f32.xlu0 %v3988
    %v3990 = vpop.xlane.xlu0 %3989
    %v3991 = vadd.f32 %v3887, %v3889
    %3992 = vadd.xlane.f32.xlu0 %v3991
    %v3993 = vpop.xlane.xlu0 %3992
    %v3994 = vadd.f32 %v3891, %v3893
    %3995 = vadd.xlane.f32.xlu0 %v3994
    %v3996 = vpop.xlane.xlu0 %3995
    %v3997 = vadd.f32 %v3895, %v3897
    %3998 = vadd.xlane.f32.xlu0 %v3997
    %v3999 = vpop.xlane.xlu0 %3998
    %v4000 = vadd.f32 %v3899, %v3901
    %4001 = vadd.xlane.f32.xlu0 %v4000
    %v4002 = vpop.xlane.xlu0 %4001
    %v4003 = vadd.f32 %v3903, %v3905
    %4004 = vadd.xlane.f32.xlu0 %v4003
    %v4005 = vpop.xlane.xlu0 %4004
    %v4006 = vadd.f32 %v3907, %v3909
    %4007 = vadd.xlane.f32.xlu0 %v4006
    %v4008 = vpop.xlane.xlu0 %4007
    %v4009 = vadd.f32 %v3911, %v3913
    %4010 = vadd.xlane.f32.xlu0 %v4009
    %v4011 = vpop.xlane.xlu0 %4010
    %v4012 = vadd.f32 %v3915, %v3917
    %4013 = vadd.xlane.f32.xlu0 %v4012
    %v4014 = vpop.xlane.xlu0 %4013
    %v4015 = vadd.f32 %v3919, %v3921
    %4016 = vadd.xlane.f32.xlu0 %v4015
    %v4017 = vpop.xlane.xlu0 %4016
    %v4018 = vadd.f32 %v3538, %v3924
    %v4019 = vadd.f32 %v3539, %v3927
    %v4020 = vadd.f32 %v3540, %v3930
    %v4021 = vadd.f32 %v3541, %v3933
    %v4022 = vadd.f32 %v3542, %v3936
    %v4023 = vadd.f32 %v3543, %v3939
    %v4024 = vadd.f32 %v3544, %v3942
    %v4025 = vadd.f32 %v3545, %v3945
    %v4026 = vadd.f32 %v3546, %v3948
    %v4027 = vadd.f32 %v3547, %v3951
    %v4028 = vadd.f32 %v3548, %v3954
    %v4029 = vadd.f32 %v3549, %v3957
    %v4030 = vadd.f32 %v3550, %v3960
    %v4031 = vadd.f32 %v3551, %v3963
    %v4032 = vadd.f32 %v3552, %v3966
    %v4033 = vadd.f32 %v3553, %v3969
    %v4034 = vadd.f32 %v3554, %v3972
    %v4035 = vadd.f32 %v3555, %v3975
    %v4036 = vadd.f32 %v3556, %v3978
    %v4037 = vadd.f32 %v3557, %v3981
    %v4038 = vadd.f32 %v3558, %v3984
    %v4039 = vadd.f32 %v3559, %v3987
    %v4040 = vadd.f32 %v3560, %v3990
    %v4041 = vadd.f32 %v3561, %v3993
    %v4042 = vadd.f32 %v3562, %v3996
    %v4043 = vadd.f32 %v3563, %v3999
    %v4044 = vadd.f32 %v3564, %v4002
    %v4045 = vadd.f32 %v3565, %v4005
    %v4046 = vadd.f32 %v3566, %v4008
    %v4047 = vadd.f32 %v3567, %v4011
    %v4048 = vadd.f32 %v3568, %v4014
    %v4049 = vadd.f32 %v3569, %v4017
    %vm4050 = vcmask 15368
    %4051 = vst.msk [vmem:[#allocation3] sm:$0xff] %vm4050, %v4018
    %4052 = vst.msk [vmem:[#allocation3 + $0x8] sm:$0xff] %vm4050, %v4019
    %4053 = vst.msk [vmem:[#allocation3 + $0x10] sm:$0xff] %vm4050, %v4020
    %4054 = vst.msk [vmem:[#allocation3 + $0x18] sm:$0xff] %vm4050, %v4021
    %4055 = vst.msk [vmem:[#allocation3 + $0x20] sm:$0xff] %vm4050, %v4022
    %4056 = vst.msk [vmem:[#allocation3 + $0x28] sm:$0xff] %vm4050, %v4023
    %4057 = vst.msk [vmem:[#allocation3 + $0x30] sm:$0xff] %vm4050, %v4024
    %4058 = vst.msk [vmem:[#allocation3 + $0x38] sm:$0xff] %vm4050, %v4025
    %4059 = vst.msk [vmem:[#allocation3 + $0x40] sm:$0xff] %vm4050, %v4026
    %4060 = vst.msk [vmem:[#allocation3 + $0x48] sm:$0xff] %vm4050, %v4027
    %4061 = vst.msk [vmem:[#allocation3 + $0x50] sm:$0xff] %vm4050, %v4028
    %4062 = vst.msk [vmem:[#allocation3 + $0x58] sm:$0xff] %vm4050, %v4029
    %4063 = vst.msk [vmem:[#allocation3 + $0x60] sm:$0xff] %vm4050, %v4030
    %4064 = vst.msk [vmem:[#allocation3 + $0x68] sm:$0xff] %vm4050, %v4031
    %4065 = vst.msk [vmem:[#allocation3 + $0x70] sm:$0xff] %vm4050, %v4032
    %4066 = vst.msk [vmem:[#allocation3 + $0x78] sm:$0xff] %vm4050, %v4033
    %4067 = vst.msk [vmem:[#allocation3 + $0x80] sm:$0xff] %vm4050, %v4034
    %4068 = vst.msk [vmem:[#allocation3 + $0x88] sm:$0xff] %vm4050, %v4035
    %4069 = vst.msk [vmem:[#allocation3 + $0x90] sm:$0xff] %vm4050, %v4036
    %4070 = vst.msk [vmem:[#allocation3 + $0x98] sm:$0xff] %vm4050, %v4037
    %4071 = vst.msk [vmem:[#allocation3 + $0xa0] sm:$0xff] %vm4050, %v4038
    %4072 = vst.msk [vmem:[#allocation3 + $0xa8] sm:$0xff] %vm4050, %v4039
    %4073 = vst.msk [vmem:[#allocation3 + $0xb0] sm:$0xff] %vm4050, %v4040
    %4074 = vst.msk [vmem:[#allocation3 + $0xb8] sm:$0xff] %vm4050, %v4041
    %4075 = vst.msk [vmem:[#allocation3 + $0xc0] sm:$0xff] %vm4050, %v4042
    %4076 = vst.msk [vmem:[#allocation3 + $0xc8] sm:$0xff] %vm4050, %v4043
    %4077 = vst.msk [vmem:[#allocation3 + $0xd0] sm:$0xff] %vm4050, %v4044
    %4078 = vst.msk [vmem:[#allocation3 + $0xd8] sm:$0xff] %vm4050, %v4045
    %4079 = vst.msk [vmem:[#allocation3 + $0xe0] sm:$0xff] %vm4050, %v4046
    %4080 = vst.msk [vmem:[#allocation3 + $0xe8] sm:$0xff] %vm4050, %v4047
    %4081 = vst.msk [vmem:[#allocation3 + $0xf0] sm:$0xff] %vm4050, %v4048
    %4082 = vst.msk [vmem:[#allocation3 + $0xf8] sm:$0xff] %vm4050, %v4049
    %vm4083 = vcmp.gt.f32.partialorder %v2067, %v3250
    %vm4084 = vcmp.gt.f32.partialorder %v2070, %v3251
    %vm4085 = vcmp.gt.f32.partialorder %v2073, %v3252
    %vm4086 = vcmp.gt.f32.partialorder %v2076, %v3253
    %vm4087 = vcmp.gt.f32.partialorder %v2079, %v3254
    %vm4088 = vcmp.gt.f32.partialorder %v2082, %v3255
    %vm4089 = vcmp.gt.f32.partialorder %v2085, %v3256
    %vm4090 = vcmp.gt.f32.partialorder %v2088, %v3257
    %vm4091 = vcmp.gt.f32.partialorder %v2091, %v3258
    %vm4092 = vcmp.gt.f32.partialorder %v2094, %v3259
    %vm4093 = vcmp.gt.f32.partialorder %v2097, %v3260
    %vm4094 = vcmp.gt.f32.partialorder %v2100, %v3261
    %vm4095 = vcmp.gt.f32.partialorder %v2103, %v3262
    %vm4096 = vcmp.gt.f32.partialorder %v2106, %v3263
    %vm4097 = vcmp.gt.f32.partialorder %v2109, %v3264
    %vm4098 = vcmp.gt.f32.partialorder %v2112, %v3265
    %vm4099 = vcmp.gt.f32.partialorder %v2115, %v3266
    %vm4100 = vcmp.gt.f32.partialorder %v2118, %v3267
    %vm4101 = vcmp.gt.f32.partialorder %v2121, %v3268
    %vm4102 = vcmp.gt.f32.partialorder %v2124, %v3269
    %vm4103 = vcmp.gt.f32.partialorder %v2127, %v3270
    %vm4104 = vcmp.gt.f32.partialorder %v2130, %v3271
    %vm4105 = vcmp.gt.f32.partialorder %v2133, %v3272
    %vm4106 = vcmp.gt.f32.partialorder %v2136, %v3273
    %vm4107 = vcmp.gt.f32.partialorder %v2139, %v3274
    %vm4108 = vcmp.gt.f32.partialorder %v2142, %v3275
    %vm4109 = vcmp.gt.f32.partialorder %v2145, %v3276
    %vm4110 = vcmp.gt.f32.partialorder %v2148, %v3277
    %vm4111 = vcmp.gt.f32.partialorder %v2151, %v3278
    %vm4112 = vcmp.gt.f32.partialorder %v2154, %v3279
    %vm4113 = vcmp.gt.f32.partialorder %v2157, %v3280
    %vm4114 = vcmp.gt.f32.partialorder %v2160, %v3281
    %v4115 = vld [vmem:[#allocation3] sm:$0xff]
    %v4116 = vld [vmem:[#allocation3 + $0x8] sm:$0xff]
    %v4117 = vld [vmem:[#allocation3 + $0x10] sm:$0xff]
    %v4118 = vld [vmem:[#allocation3 + $0x18] sm:$0xff]
    %v4119 = vld [vmem:[#allocation3 + $0x20] sm:$0xff]
    %v4120 = vld [vmem:[#allocation3 + $0x28] sm:$0xff]
    %v4121 = vld [vmem:[#allocation3 + $0x30] sm:$0xff]
    %v4122 = vld [vmem:[#allocation3 + $0x38] sm:$0xff]
    %v4123 = vld [vmem:[#allocation3 + $0x40] sm:$0xff]
    %v4124 = vld [vmem:[#allocation3 + $0x48] sm:$0xff]
    %v4125 = vld [vmem:[#allocation3 + $0x50] sm:$0xff]
    %v4126 = vld [vmem:[#allocation3 + $0x58] sm:$0xff]
    %v4127 = vld [vmem:[#allocation3 + $0x60] sm:$0xff]
    %v4128 = vld [vmem:[#allocation3 + $0x68] sm:$0xff]
    %v4129 = vld [vmem:[#allocation3 + $0x70] sm:$0xff]
    %v4130 = vld [vmem:[#allocation3 + $0x78] sm:$0xff]
    %v4131 = vld [vmem:[#allocation3 + $0x80] sm:$0xff]
    %v4132 = vld [vmem:[#allocation3 + $0x88] sm:$0xff]
    %v4133 = vld [vmem:[#allocation3 + $0x90] sm:$0xff]
    %v4134 = vld [vmem:[#allocation3 + $0x98] sm:$0xff]
    %v4135 = vld [vmem:[#allocation3 + $0xa0] sm:$0xff]
    %v4136 = vld [vmem:[#allocation3 + $0xa8] sm:$0xff]
    %v4137 = vld [vmem:[#allocation3 + $0xb0] sm:$0xff]
    %v4138 = vld [vmem:[#allocation3 + $0xb8] sm:$0xff]
    %v4139 = vld [vmem:[#allocation3 + $0xc0] sm:$0xff]
    %v4140 = vld [vmem:[#allocation3 + $0xc8] sm:$0xff]
    %v4141 = vld [vmem:[#allocation3 + $0xd0] sm:$0xff]
    %v4142 = vld [vmem:[#allocation3 + $0xd8] sm:$0xff]
    %v4143 = vld [vmem:[#allocation3 + $0xe0] sm:$0xff]
    %v4144 = vld [vmem:[#allocation3 + $0xe8] sm:$0xff]
    %v4145 = vld [vmem:[#allocation3 + $0xf0] sm:$0xff]
    %v4146 = vld [vmem:[#allocation3 + $0xf8] sm:$0xff]
    %4179 = vrot.lane.b32.xlu0 %v4115, 125
    %v4180 = vpop.permute.xlu0 %4179
    %4181 = vrot.lane.b32.xlu0 %v4116, 125
    %v4182 = vpop.permute.xlu0 %4181
    %4183 = vrot.lane.b32.xlu0 %v4117, 125
    %v4184 = vpop.permute.xlu0 %4183
    %4185 = vrot.lane.b32.xlu0 %v4118, 125
    %v4186 = vpop.permute.xlu0 %4185
    %4187 = vrot.lane.b32.xlu0 %v4119, 125
    %v4188 = vpop.permute.xlu0 %4187
    %4189 = vrot.lane.b32.xlu0 %v4120, 125
    %v4190 = vpop.permute.xlu0 %4189
    %4191 = vrot.lane.b32.xlu0 %v4121, 125
    %v4192 = vpop.permute.xlu0 %4191
    %4193 = vrot.lane.b32.xlu0 %v4122, 125
    %v4194 = vpop.permute.xlu0 %4193
    %4195 = vrot.lane.b32.xlu0 %v4123, 125
    %v4196 = vpop.permute.xlu0 %4195
    %4197 = vrot.lane.b32.xlu0 %v4124, 125
    %v4198 = vpop.permute.xlu0 %4197
    %4199 = vrot.lane.b32.xlu0 %v4125, 125
    %v4200 = vpop.permute.xlu0 %4199
    %4201 = vrot.lane.b32.xlu0 %v4126, 125
    %v4202 = vpop.permute.xlu0 %4201
    %4203 = vrot.lane.b32.xlu0 %v4127, 125
    %v4204 = vpop.permute.xlu0 %4203
    %4205 = vrot.lane.b32.xlu0 %v4128, 125
    %v4206 = vpop.permute.xlu0 %4205
    %4207 = vrot.lane.b32.xlu0 %v4129, 125
    %v4208 = vpop.permute.xlu0 %4207
    %4209 = vrot.lane.b32.xlu0 %v4130, 125
    %v4210 = vpop.permute.xlu0 %4209
    %4211 = vrot.lane.b32.xlu0 %v4131, 125
    %v4212 = vpop.permute.xlu0 %4211
    %4213 = vrot.lane.b32.xlu0 %v4132, 125
    %v4214 = vpop.permute.xlu0 %4213
    %4215 = vrot.lane.b32.xlu0 %v4133, 125
    %v4216 = vpop.permute.xlu0 %4215
    %4217 = vrot.lane.b32.xlu0 %v4134, 125
    %v4218 = vpop.permute.xlu0 %4217
    %4219 = vrot.lane.b32.xlu0 %v4135, 125
    %v4220 = vpop.permute.xlu0 %4219
    %4221 = vrot.lane.b32.xlu0 %v4136, 125
    %v4222 = vpop.permute.xlu0 %4221
    %4223 = vrot.lane.b32.xlu0 %v4137, 125
    %v4224 = vpop.permute.xlu0 %4223
    %4225 = vrot.lane.b32.xlu0 %v4138, 125
    %v4226 = vpop.permute.xlu0 %4225
    %4227 = vrot.lane.b32.xlu0 %v4139, 125
    %v4228 = vpop.permute.xlu0 %4227
    %4229 = vrot.lane.b32.xlu0 %v4140, 125
    %v4230 = vpop.permute.xlu0 %4229
    %4231 = vrot.lane.b32.xlu0 %v4141, 125
    %v4232 = vpop.permute.xlu0 %4231
    %4233 = vrot.lane.b32.xlu0 %v4142, 125
    %v4234 = vpop.permute.xlu0 %4233
    %4235 = vrot.lane.b32.xlu0 %v4143, 125
    %v4236 = vpop.permute.xlu0 %4235
    %4237 = vrot.lane.b32.xlu0 %v4144, 125
    %v4238 = vpop.permute.xlu0 %4237
    %4239 = vrot.lane.b32.xlu0 %v4145, 125
    %v4240 = vpop.permute.xlu0 %4239
    %4241 = vrot.lane.b32.xlu0 %v4146, 125
    %v4242 = vpop.permute.xlu0 %4241
    %v4275 = vsel %vm4083, %v2801, %v4180
    %v4276 = vsel %vm4084, %v2802, %v4182
    %v4277 = vsel %vm4085, %v2803, %v4184
    %v4278 = vsel %vm4086, %v2804, %v4186
    %v4279 = vsel %vm4087, %v2805, %v4188
    %v4280 = vsel %vm4088, %v2806, %v4190
    %v4281 = vsel %vm4089, %v2807, %v4192
    %v4282 = vsel %vm4090, %v2808, %v4194
    %v4283 = vsel %vm4091, %v2809, %v4196
    %v4284 = vsel %vm4092, %v2810, %v4198
    %v4285 = vsel %vm4093, %v2811, %v4200
    %v4286 = vsel %vm4094, %v2812, %v4202
    %v4287 = vsel %vm4095, %v2813, %v4204
    %v4288 = vsel %vm4096, %v2814, %v4206
    %v4289 = vsel %vm4097, %v2815, %v4208
    %v4290 = vsel %vm4098, %v2816, %v4210
    %v4291 = vsel %vm4099, %v2817, %v4212
    %v4292 = vsel %vm4100, %v2818, %v4214
    %v4293 = vsel %vm4101, %v2819, %v4216
    %v4294 = vsel %vm4102, %v2820, %v4218
    %v4295 = vsel %vm4103, %v2821, %v4220
    %v4296 = vsel %vm4104, %v2822, %v4222
    %v4297 = vsel %vm4105, %v2823, %v4224
    %v4298 = vsel %vm4106, %v2824, %v4226
    %v4299 = vsel %vm4107, %v2825, %v4228
    %v4300 = vsel %vm4108, %v2826, %v4230
    %v4301 = vsel %vm4109, %v2827, %v4232
    %v4302 = vsel %vm4110, %v2828, %v4234
    %v4303 = vsel %vm4111, %v2829, %v4236
    %v4304 = vsel %vm4112, %v2830, %v4238
    %v4305 = vsel %vm4113, %v2831, %v4240
    %v4306 = vsel %vm4114, %v2832, %v4242
    %4339 = vrot.lane.b32.xlu0 %v4275, 3
    %v4340 = vpop.permute.xlu0 %4339
    %4341 = vrot.lane.b32.xlu0 %v4276, 3
    %v4342 = vpop.permute.xlu0 %4341
    %4343 = vrot.lane.b32.xlu0 %v4277, 3
    %v4344 = vpop.permute.xlu0 %4343
    %4345 = vrot.lane.b32.xlu0 %v4278, 3
    %v4346 = vpop.permute.xlu0 %4345
    %4347 = vrot.lane.b32.xlu0 %v4279, 3
    %v4348 = vpop.permute.xlu0 %4347
    %4349 = vrot.lane.b32.xlu0 %v4280, 3
    %v4350 = vpop.permute.xlu0 %4349
    %4351 = vrot.lane.b32.xlu0 %v4281, 3
    %v4352 = vpop.permute.xlu0 %4351
    %4353 = vrot.lane.b32.xlu0 %v4282, 3
    %v4354 = vpop.permute.xlu0 %4353
    %4355 = vrot.lane.b32.xlu0 %v4283, 3
    %v4356 = vpop.permute.xlu0 %4355
    %4357 = vrot.lane.b32.xlu0 %v4284, 3
    %v4358 = vpop.permute.xlu0 %4357
    %4359 = vrot.lane.b32.xlu0 %v4285, 3
    %v4360 = vpop.permute.xlu0 %4359
    %4361 = vrot.lane.b32.xlu0 %v4286, 3
    %v4362 = vpop.permute.xlu0 %4361
    %4363 = vrot.lane.b32.xlu0 %v4287, 3
    %v4364 = vpop.permute.xlu0 %4363
    %4365 = vrot.lane.b32.xlu0 %v4288, 3
    %v4366 = vpop.permute.xlu0 %4365
    %4367 = vrot.lane.b32.xlu0 %v4289, 3
    %v4368 = vpop.permute.xlu0 %4367
    %4369 = vrot.lane.b32.xlu0 %v4290, 3
    %v4370 = vpop.permute.xlu0 %4369
    %4371 = vrot.lane.b32.xlu0 %v4291, 3
    %v4372 = vpop.permute.xlu0 %4371
    %4373 = vrot.lane.b32.xlu0 %v4292, 3
    %v4374 = vpop.permute.xlu0 %4373
    %4375 = vrot.lane.b32.xlu0 %v4293, 3
    %v4376 = vpop.permute.xlu0 %4375
    %4377 = vrot.lane.b32.xlu0 %v4294, 3
    %v4378 = vpop.permute.xlu0 %4377
    %4379 = vrot.lane.b32.xlu0 %v4295, 3
    %v4380 = vpop.permute.xlu0 %4379
    %4381 = vrot.lane.b32.xlu0 %v4296, 3
    %v4382 = vpop.permute.xlu0 %4381
    %4383 = vrot.lane.b32.xlu0 %v4297, 3
    %v4384 = vpop.permute.xlu0 %4383
    %4385 = vrot.lane.b32.xlu0 %v4298, 3
    %v4386 = vpop.permute.xlu0 %4385
    %4387 = vrot.lane.b32.xlu0 %v4299, 3
    %v4388 = vpop.permute.xlu0 %4387
    %4389 = vrot.lane.b32.xlu0 %v4300, 3
    %v4390 = vpop.permute.xlu0 %4389
    %4391 = vrot.lane.b32.xlu0 %v4301, 3
    %v4392 = vpop.permute.xlu0 %4391
    %4393 = vrot.lane.b32.xlu0 %v4302, 3
    %v4394 = vpop.permute.xlu0 %4393
    %4395 = vrot.lane.b32.xlu0 %v4303, 3
    %v4396 = vpop.permute.xlu0 %4395
    %4397 = vrot.lane.b32.xlu0 %v4304, 3
    %v4398 = vpop.permute.xlu0 %4397
    %4399 = vrot.lane.b32.xlu0 %v4305, 3
    %v4400 = vpop.permute.xlu0 %4399
    %4401 = vrot.lane.b32.xlu0 %v4306, 3
    %v4402 = vpop.permute.xlu0 %4401
    %vm4435 = vcmask 31768
    %4436 = vst.msk [vmem:[#allocation3] sm:$0xff] %vm4435, %v4340
    %4437 = vst.msk [vmem:[#allocation3 + $0x8] sm:$0xff] %vm4435, %v4342
    %4438 = vst.msk [vmem:[#allocation3 + $0x10] sm:$0xff] %vm4435, %v4344
    %4439 = vst.msk [vmem:[#allocation3 + $0x18] sm:$0xff] %vm4435, %v4346
    %4440 = vst.msk [vmem:[#allocation3 + $0x20] sm:$0xff] %vm4435, %v4348
    %4441 = vst.msk [vmem:[#allocation3 + $0x28] sm:$0xff] %vm4435, %v4350
    %4442 = vst.msk [vmem:[#allocation3 + $0x30] sm:$0xff] %vm4435, %v4352
    %4443 = vst.msk [vmem:[#allocation3 + $0x38] sm:$0xff] %vm4435, %v4354
    %4444 = vst.msk [vmem:[#allocation3 + $0x40] sm:$0xff] %vm4435, %v4356
    %4445 = vst.msk [vmem:[#allocation3 + $0x48] sm:$0xff] %vm4435, %v4358
    %4446 = vst.msk [vmem:[#allocation3 + $0x50] sm:$0xff] %vm4435, %v4360
    %4447 = vst.msk [vmem:[#allocation3 + $0x58] sm:$0xff] %vm4435, %v4362
    %4448 = vst.msk [vmem:[#allocation3 + $0x60] sm:$0xff] %vm4435, %v4364
    %4449 = vst.msk [vmem:[#allocation3 + $0x68] sm:$0xff] %vm4435, %v4366
    %4450 = vst.msk [vmem:[#allocation3 + $0x70] sm:$0xff] %vm4435, %v4368
    %4451 = vst.msk [vmem:[#allocation3 + $0x78] sm:$0xff] %vm4435, %v4370
    %4452 = vst.msk [vmem:[#allocation3 + $0x80] sm:$0xff] %vm4435, %v4372
    %4453 = vst.msk [vmem:[#allocation3 + $0x88] sm:$0xff] %vm4435, %v4374
    %4454 = vst.msk [vmem:[#allocation3 + $0x90] sm:$0xff] %vm4435, %v4376
    %4455 = vst.msk [vmem:[#allocation3 + $0x98] sm:$0xff] %vm4435, %v4378
    %4456 = vst.msk [vmem:[#allocation3 + $0xa0] sm:$0xff] %vm4435, %v4380
    %4457 = vst.msk [vmem:[#allocation3 + $0xa8] sm:$0xff] %vm4435, %v4382
    %4458 = vst.msk [vmem:[#allocation3 + $0xb0] sm:$0xff] %vm4435, %v4384
    %4459 = vst.msk [vmem:[#allocation3 + $0xb8] sm:$0xff] %vm4435, %v4386
    %4460 = vst.msk [vmem:[#allocation3 + $0xc0] sm:$0xff] %vm4435, %v4388
    %4461 = vst.msk [vmem:[#allocation3 + $0xc8] sm:$0xff] %vm4435, %v4390
    %4462 = vst.msk [vmem:[#allocation3 + $0xd0] sm:$0xff] %vm4435, %v4392
    %4463 = vst.msk [vmem:[#allocation3 + $0xd8] sm:$0xff] %vm4435, %v4394
    %4464 = vst.msk [vmem:[#allocation3 + $0xe0] sm:$0xff] %vm4435, %v4396
    %4465 = vst.msk [vmem:[#allocation3 + $0xe8] sm:$0xff] %vm4435, %v4398
    %4466 = vst.msk [vmem:[#allocation3 + $0xf0] sm:$0xff] %vm4435, %v4400
    %4467 = vst.msk [vmem:[#allocation3 + $0xf8] sm:$0xff] %vm4435, %v4402
    %vm4468 = vcmask 7168
    %4469 = vst.msk [vmem:[#allocation3] sm:$0xff] %vm4468, %v3282
    %4470 = vst.msk [vmem:[#allocation3 + $0x8] sm:$0xff] %vm4468, %v3283
    %4471 = vst.msk [vmem:[#allocation3 + $0x10] sm:$0xff] %vm4468, %v3284
    %4472 = vst.msk [vmem:[#allocation3 + $0x18] sm:$0xff] %vm4468, %v3285
    %4473 = vst.msk [vmem:[#allocation3 + $0x20] sm:$0xff] %vm4468, %v3286
    %4474 = vst.msk [vmem:[#allocation3 + $0x28] sm:$0xff] %vm4468, %v3287
    %4475 = vst.msk [vmem:[#allocation3 + $0x30] sm:$0xff] %vm4468, %v3288
    %4476 = vst.msk [vmem:[#allocation3 + $0x38] sm:$0xff] %vm4468, %v3289
    %4477 = vst.msk [vmem:[#allocation3 + $0x40] sm:$0xff] %vm4468, %v3290
    %4478 = vst.msk [vmem:[#allocation3 + $0x48] sm:$0xff] %vm4468, %v3291
    %4479 = vst.msk [vmem:[#allocation3 + $0x50] sm:$0xff] %vm4468, %v3292
    %4480 = vst.msk [vmem:[#allocation3 + $0x58] sm:$0xff] %vm4468, %v3293
    %4481 = vst.msk [vmem:[#allocation3 + $0x60] sm:$0xff] %vm4468, %v3294
    %4482 = vst.msk [vmem:[#allocation3 + $0x68] sm:$0xff] %vm4468, %v3295
    %4483 = vst.msk [vmem:[#allocation3 + $0x70] sm:$0xff] %vm4468, %v3296
    %4484 = vst.msk [vmem:[#allocation3 + $0x78] sm:$0xff] %vm4468, %v3297
    %4485 = vst.msk [vmem:[#allocation3 + $0x80] sm:$0xff] %vm4468, %v3298
    %4486 = vst.msk [vmem:[#allocation3 + $0x88] sm:$0xff] %vm4468, %v3299
    %4487 = vst.msk [vmem:[#allocation3 + $0x90] sm:$0xff] %vm4468, %v3300
    %4488 = vst.msk [vmem:[#allocation3 + $0x98] sm:$0xff] %vm4468, %v3301
    %4489 = vst.msk [vmem:[#allocation3 + $0xa0] sm:$0xff] %vm4468, %v3302
    %4490 = vst.msk [vmem:[#allocation3 + $0xa8] sm:$0xff] %vm4468, %v3303
    %4491 = vst.msk [vmem:[#allocation3 + $0xb0] sm:$0xff] %vm4468, %v3304
    %4492 = vst.msk [vmem:[#allocation3 + $0xb8] sm:$0xff] %vm4468, %v3305
    %4493 = vst.msk [vmem:[#allocation3 + $0xc0] sm:$0xff] %vm4468, %v3306
    %4494 = vst.msk [vmem:[#allocation3 + $0xc8] sm:$0xff] %vm4468, %v3307
    %4495 = vst.msk [vmem:[#allocation3 + $0xd0] sm:$0xff] %vm4468, %v3308
    %4496 = vst.msk [vmem:[#allocation3 + $0xd8] sm:$0xff] %vm4468, %v3309
    %4497 = vst.msk [vmem:[#allocation3 + $0xe0] sm:$0xff] %vm4468, %v3310
    %4498 = vst.msk [vmem:[#allocation3 + $0xe8] sm:$0xff] %vm4468, %v3311
    %4499 = vst.msk [vmem:[#allocation3 + $0xf0] sm:$0xff] %vm4468, %v3312
    %4500 = vst.msk [vmem:[#allocation3 + $0xf8] sm:$0xff] %vm4468, %v3313
    // Predicated region
    $region34: #{tpu_custom_call.1} parent=1 // pred_check
      %p4501 = pneg %p106
    $region35: #{tpu_custom_call.1} parent=1 // pred_check_branch
      %4503 = sbr.rel (%p4501) target = $region37
    $region36: #{tpu_custom_call.1} parent=1 // pred_region
      %v4504 = vld [vmem:[#allocation3] sm:$0xff]
      %v4505 = vld [vmem:[#allocation3 + $0x8] sm:$0xff]
      %v4506 = vld [vmem:[#allocation3 + $0x10] sm:$0xff]
      %v4507 = vld [vmem:[#allocation3 + $0x18] sm:$0xff]
      %v4508 = vld [vmem:[#allocation3 + $0x20] sm:$0xff]
      %v4509 = vld [vmem:[#allocation3 + $0x28] sm:$0xff]
      %v4510 = vld [vmem:[#allocation3 + $0x30] sm:$0xff]
      %v4511 = vld [vmem:[#allocation3 + $0x38] sm:$0xff]
      %v4512 = vld [vmem:[#allocation3 + $0x40] sm:$0xff]
      %v4513 = vld [vmem:[#allocation3 + $0x48] sm:$0xff]
      %v4514 = vld [vmem:[#allocation3 + $0x50] sm:$0xff]
      %v4515 = vld [vmem:[#allocation3 + $0x58] sm:$0xff]
      %v4516 = vld [vmem:[#allocation3 + $0x60] sm:$0xff]
      %v4517 = vld [vmem:[#allocation3 + $0x68] sm:$0xff]
      %v4518 = vld [vmem:[#allocation3 + $0x70] sm:$0xff]
      %v4519 = vld [vmem:[#allocation3 + $0x78] sm:$0xff]
      %v4520 = vld [vmem:[#allocation3 + $0x80] sm:$0xff]
      %v4521 = vld [vmem:[#allocation3 + $0x88] sm:$0xff]
      %v4522 = vld [vmem:[#allocation3 + $0x90] sm:$0xff]
      %v4523 = vld [vmem:[#allocation3 + $0x98] sm:$0xff]
      %v4524 = vld [vmem:[#allocation3 + $0xa0] sm:$0xff]
      %v4525 = vld [vmem:[#allocation3 + $0xa8] sm:$0xff]
      %v4526 = vld [vmem:[#allocation3 + $0xb0] sm:$0xff]
      %v4527 = vld [vmem:[#allocation3 + $0xb8] sm:$0xff]
      %v4528 = vld [vmem:[#allocation3 + $0xc0] sm:$0xff]
      %v4529 = vld [vmem:[#allocation3 + $0xc8] sm:$0xff]
      %v4530 = vld [vmem:[#allocation3 + $0xd0] sm:$0xff]
      %v4531 = vld [vmem:[#allocation3 + $0xd8] sm:$0xff]
      %v4532 = vld [vmem:[#allocation3 + $0xe0] sm:$0xff]
      %v4533 = vld [vmem:[#allocation3 + $0xe8] sm:$0xff]
      %v4534 = vld [vmem:[#allocation3 + $0xf0] sm:$0xff]
      %v4535 = vld [vmem:[#allocation3 + $0xf8] sm:$0xff]
      %v4536 = vlog2.pop %v4504
      %v4537 = vmul.f32 %v4536, 0.6931472
      %v4538 = vlog2.pop %v4505
      %v4539 = vmul.f32 %v4538, 0.6931472
      %v4540 = vlog2.pop %v4506
      %v4541 = vmul.f32 %v4540, 0.6931472
      %v4542 = vlog2.pop %v4507
      %v4543 = vmul.f32 %v4542, 0.6931472
      %v4544 = vlog2.pop %v4508
      %v4545 = vmul.f32 %v4544, 0.6931472
      %v4546 = vlog2.pop %v4509
      %v4547 = vmul.f32 %v4546, 0.6931472
      %v4548 = vlog2.pop %v4510
      %v4549 = vmul.f32 %v4548, 0.6931472
      %v4550 = vlog2.pop %v4511
      %v4551 = vmul.f32 %v4550, 0.6931472
      %v4552 = vlog2.pop %v4512
      %v4553 = vmul.f32 %v4552, 0.6931472
      %v4554 = vlog2.pop %v4513
      %v4555 = vmul.f32 %v4554, 0.6931472
      %v4556 = vlog2.pop %v4514
      %v4557 = vmul.f32 %v4556, 0.6931472
      %v4558 = vlog2.pop %v4515
      %v4559 = vmul.f32 %v4558, 0.6931472
      %v4560 = vlog2.pop %v4516
      %v4561 = vmul.f32 %v4560, 0.6931472
      %v4562 = vlog2.pop %v4517
      %v4563 = vmul.f32 %v4562, 0.6931472
      %v4564 = vlog2.pop %v4518
      %v4565 = vmul.f32 %v4564, 0.6931472
      %v4566 = vlog2.pop %v4519
      %v4567 = vmul.f32 %v4566, 0.6931472
      %v4568 = vlog2.pop %v4520
      %v4569 = vmul.f32 %v4568, 0.6931472
      %v4570 = vlog2.pop %v4521
      %v4571 = vmul.f32 %v4570, 0.6931472
      %v4572 = vlog2.pop %v4522
      %v4573 = vmul.f32 %v4572, 0.6931472
      %v4574 = vlog2.pop %v4523
      %v4575 = vmul.f32 %v4574, 0.6931472
      %v4576 = vlog2.pop %v4524
      %v4577 = vmul.f32 %v4576, 0.6931472
      %v4578 = vlog2.pop %v4525
      %v4579 = vmul.f32 %v4578, 0.6931472
      %v4580 = vlog2.pop %v4526
      %v4581 = vmul.f32 %v4580, 0.6931472
      %v4582 = vlog2.pop %v4527
      %v4583 = vmul.f32 %v4582, 0.6931472
      %v4584 = vlog2.pop %v4528
      %v4585 = vmul.f32 %v4584, 0.6931472
      %v4586 = vlog2.pop %v4529
      %v4587 = vmul.f32 %v4586, 0.6931472
      %v4588 = vlog2.pop %v4530
      %v4589 = vmul.f32 %v4588, 0.6931472
      %v4590 = vlog2.pop %v4531
      %v4591 = vmul.f32 %v4590, 0.6931472
      %v4592 = vlog2.pop %v4532
      %v4593 = vmul.f32 %v4592, 0.6931472
      %v4594 = vlog2.pop %v4533
      %v4595 = vmul.f32 %v4594, 0.6931472
      %v4596 = vlog2.pop %v4534
      %v4597 = vmul.f32 %v4596, 0.6931472
      %v4598 = vlog2.pop %v4535
      %v4599 = vmul.f32 %v4598, 0.6931472
      %4632 = vrot.lane.b32.xlu0 %v4537, 127
      %v4633 = vpop.permute.xlu0 %4632
      %4634 = vrot.lane.b32.xlu0 %v4539, 127
      %v4635 = vpop.permute.xlu0 %4634
      %4636 = vrot.lane.b32.xlu0 %v4541, 127
      %v4637 = vpop.permute.xlu0 %4636
      %4638 = vrot.lane.b32.xlu0 %v4543, 127
      %v4639 = vpop.permute.xlu0 %4638
      %4640 = vrot.lane.b32.xlu0 %v4545, 127
      %v4641 = vpop.permute.xlu0 %4640
      %4642 = vrot.lane.b32.xlu0 %v4547, 127
      %v4643 = vpop.permute.xlu0 %4642
      %4644 = vrot.lane.b32.xlu0 %v4549, 127
      %v4645 = vpop.permute.xlu0 %4644
      %4646 = vrot.lane.b32.xlu0 %v4551, 127
      %v4647 = vpop.permute.xlu0 %4646
      %4648 = vrot.lane.b32.xlu0 %v4553, 127
      %v4649 = vpop.permute.xlu0 %4648
      %4650 = vrot.lane.b32.xlu0 %v4555, 127
      %v4651 = vpop.permute.xlu0 %4650
      %4652 = vrot.lane.b32.xlu0 %v4557, 127
      %v4653 = vpop.permute.xlu0 %4652
      %4654 = vrot.lane.b32.xlu0 %v4559, 127
      %v4655 = vpop.permute.xlu0 %4654
      %4656 = vrot.lane.b32.xlu0 %v4561, 127
      %v4657 = vpop.permute.xlu0 %4656
      %4658 = vrot.lane.b32.xlu0 %v4563, 127
      %v4659 = vpop.permute.xlu0 %4658
      %4660 = vrot.lane.b32.xlu0 %v4565, 127
      %v4661 = vpop.permute.xlu0 %4660
      %4662 = vrot.lane.b32.xlu0 %v4567, 127
      %v4663 = vpop.permute.xlu0 %4662
      %4664 = vrot.lane.b32.xlu0 %v4569, 127
      %v4665 = vpop.permute.xlu0 %4664
      %4666 = vrot.lane.b32.xlu0 %v4571, 127
      %v4667 = vpop.permute.xlu0 %4666
      %4668 = vrot.lane.b32.xlu0 %v4573, 127
      %v4669 = vpop.permute.xlu0 %4668
      %4670 = vrot.lane.b32.xlu0 %v4575, 127
      %v4671 = vpop.permute.xlu0 %4670
      %4672 = vrot.lane.b32.xlu0 %v4577, 127
      %v4673 = vpop.permute.xlu0 %4672
      %4674 = vrot.lane.b32.xlu0 %v4579, 127
      %v4675 = vpop.permute.xlu0 %4674
      %4676 = vrot.lane.b32.xlu0 %v4581, 127
      %v4677 = vpop.permute.xlu0 %4676
      %4678 = vrot.lane.b32.xlu0 %v4583, 127
      %v4679 = vpop.permute.xlu0 %4678
      %4680 = vrot.lane.b32.xlu0 %v4585, 127
      %v4681 = vpop.permute.xlu0 %4680
      %4682 = vrot.lane.b32.xlu0 %v4587, 127
      %v4683 = vpop.permute.xlu0 %4682
      %4684 = vrot.lane.b32.xlu0 %v4589, 127
      %v4685 = vpop.permute.xlu0 %4684
      %4686 = vrot.lane.b32.xlu0 %v4591, 127
      %v4687 = vpop.permute.xlu0 %4686
      %4688 = vrot.lane.b32.xlu0 %v4593, 127
      %v4689 = vpop.permute.xlu0 %4688
      %4690 = vrot.lane.b32.xlu0 %v4595, 127
      %v4691 = vpop.permute.xlu0 %4690
      %4692 = vrot.lane.b32.xlu0 %v4597, 127
      %v4693 = vpop.permute.xlu0 %4692
      %4694 = vrot.lane.b32.xlu0 %v4599, 127
      %v4695 = vpop.permute.xlu0 %4694
      %v4728 = vadd.f32 %v4504, %v4633
      %v4729 = vadd.f32 %v4505, %v4635
      %v4730 = vadd.f32 %v4506, %v4637
      %v4731 = vadd.f32 %v4507, %v4639
      %v4732 = vadd.f32 %v4508, %v4641
      %v4733 = vadd.f32 %v4509, %v4643
      %v4734 = vadd.f32 %v4510, %v4645
      %v4735 = vadd.f32 %v4511, %v4647
      %v4736 = vadd.f32 %v4512, %v4649
      %v4737 = vadd.f32 %v4513, %v4651
      %v4738 = vadd.f32 %v4514, %v4653
      %v4739 = vadd.f32 %v4515, %v4655
      %v4740 = vadd.f32 %v4516, %v4657
      %v4741 = vadd.f32 %v4517, %v4659
      %v4742 = vadd.f32 %v4518, %v4661
      %v4743 = vadd.f32 %v4519, %v4663
      %v4744 = vadd.f32 %v4520, %v4665
      %v4745 = vadd.f32 %v4521, %v4667
      %v4746 = vadd.f32 %v4522, %v4669
      %v4747 = vadd.f32 %v4523, %v4671
      %v4748 = vadd.f32 %v4524, %v4673
      %v4749 = vadd.f32 %v4525, %v4675
      %v4750 = vadd.f32 %v4526, %v4677
      %v4751 = vadd.f32 %v4527, %v4679
      %v4752 = vadd.f32 %v4528, %v4681
      %v4753 = vadd.f32 %v4529, %v4683
      %v4754 = vadd.f32 %v4530, %v4685
      %v4755 = vadd.f32 %v4531, %v4687
      %v4756 = vadd.f32 %v4532, %v4689
      %v4757 = vadd.f32 %v4533, %v4691
      %v4758 = vadd.f32 %v4534, %v4693
      %v4759 = vadd.f32 %v4535, %v4695
      %4792 = vrot.lane.b32.xlu0 %v4504, 126
      %v4793 = vpop.permute.xlu0 %4792
      %4794 = vrot.lane.b32.xlu0 %v4505, 126
      %v4795 = vpop.permute.xlu0 %4794
      %4796 = vrot.lane.b32.xlu0 %v4506, 126
      %v4797 = vpop.permute.xlu0 %4796
      %4798 = vrot.lane.b32.xlu0 %v4507, 126
      %v4799 = vpop.permute.xlu0 %4798
      %4800 = vrot.lane.b32.xlu0 %v4508, 126
      %v4801 = vpop.permute.xlu0 %4800
      %4802 = vrot.lane.b32.xlu0 %v4509, 126
      %v4803 = vpop.permute.xlu0 %4802
      %4804 = vrot.lane.b32.xlu0 %v4510, 126
      %v4805 = vpop.permute.xlu0 %4804
      %4806 = vrot.lane.b32.xlu0 %v4511, 126
      %v4807 = vpop.permute.xlu0 %4806
      %4808 = vrot.lane.b32.xlu0 %v4512, 126
      %v4809 = vpop.permute.xlu0 %4808
      %4810 = vrot.lane.b32.xlu0 %v4513, 126
      %v4811 = vpop.permute.xlu0 %4810
      %4812 = vrot.lane.b32.xlu0 %v4514, 126
      %v4813 = vpop.permute.xlu0 %4812
      %4814 = vrot.lane.b32.xlu0 %v4515, 126
      %v4815 = vpop.permute.xlu0 %4814
      %4816 = vrot.lane.b32.xlu0 %v4516, 126
      %v4817 = vpop.permute.xlu0 %4816
      %4818 = vrot.lane.b32.xlu0 %v4517, 126
      %v4819 = vpop.permute.xlu0 %4818
      %4820 = vrot.lane.b32.xlu0 %v4518, 126
      %v4821 = vpop.permute.xlu0 %4820
      %4822 = vrot.lane.b32.xlu0 %v4519, 126
      %v4823 = vpop.permute.xlu0 %4822
      %4824 = vrot.lane.b32.xlu0 %v4520, 126
      %v4825 = vpop.permute.xlu0 %4824
      %4826 = vrot.lane.b32.xlu0 %v4521, 126
      %v4827 = vpop.permute.xlu0 %4826
      %4828 = vrot.lane.b32.xlu0 %v4522, 126
      %v4829 = vpop.permute.xlu0 %4828
      %4830 = vrot.lane.b32.xlu0 %v4523, 126
      %v4831 = vpop.permute.xlu0 %4830
      %4832 = vrot.lane.b32.xlu0 %v4524, 126
      %v4833 = vpop.permute.xlu0 %4832
      %4834 = vrot.lane.b32.xlu0 %v4525, 126
      %v4835 = vpop.permute.xlu0 %4834
      %4836 = vrot.lane.b32.xlu0 %v4526, 126
      %v4837 = vpop.permute.xlu0 %4836
      %4838 = vrot.lane.b32.xlu0 %v4527, 126
      %v4839 = vpop.permute.xlu0 %4838
      %4840 = vrot.lane.b32.xlu0 %v4528, 126
      %v4841 = vpop.permute.xlu0 %4840
      %4842 = vrot.lane.b32.xlu0 %v4529, 126
      %v4843 = vpop.permute.xlu0 %4842
      %4844 = vrot.lane.b32.xlu0 %v4530, 126
      %v4845 = vpop.permute.xlu0 %4844
      %4846 = vrot.lane.b32.xlu0 %v4531, 126
      %v4847 = vpop.permute.xlu0 %4846
      %4848 = vrot.lane.b32.xlu0 %v4532, 126
      %v4849 = vpop.permute.xlu0 %4848
      %4850 = vrot.lane.b32.xlu0 %v4533, 126
      %v4851 = vpop.permute.xlu0 %4850
      %4852 = vrot.lane.b32.xlu0 %v4534, 126
      %v4853 = vpop.permute.xlu0 %4852
      %4854 = vrot.lane.b32.xlu0 %v4535, 126
      %v4855 = vpop.permute.xlu0 %4854
      %v4888 = vsub.f32 %v4728, %v4793
      %v4889 = vsub.f32 %v4729, %v4795
      %v4890 = vsub.f32 %v4730, %v4797
      %v4891 = vsub.f32 %v4731, %v4799
      %v4892 = vsub.f32 %v4732, %v4801
      %v4893 = vsub.f32 %v4733, %v4803
      %v4894 = vsub.f32 %v4734, %v4805
      %v4895 = vsub.f32 %v4735, %v4807
      %v4896 = vsub.f32 %v4736, %v4809
      %v4897 = vsub.f32 %v4737, %v4811
      %v4898 = vsub.f32 %v4738, %v4813
      %v4899 = vsub.f32 %v4739, %v4815
      %v4900 = vsub.f32 %v4740, %v4817
      %v4901 = vsub.f32 %v4741, %v4819
      %v4902 = vsub.f32 %v4742, %v4821
      %v4903 = vsub.f32 %v4743, %v4823
      %v4904 = vsub.f32 %v4744, %v4825
      %v4905 = vsub.f32 %v4745, %v4827
      %v4906 = vsub.f32 %v4746, %v4829
      %v4907 = vsub.f32 %v4747, %v4831
      %v4908 = vsub.f32 %v4748, %v4833
      %v4909 = vsub.f32 %v4749, %v4835
      %v4910 = vsub.f32 %v4750, %v4837
      %v4911 = vsub.f32 %v4751, %v4839
      %v4912 = vsub.f32 %v4752, %v4841
      %v4913 = vsub.f32 %v4753, %v4843
      %v4914 = vsub.f32 %v4754, %v4845
      %v4915 = vsub.f32 %v4755, %v4847
      %v4916 = vsub.f32 %v4756, %v4849
      %v4917 = vsub.f32 %v4757, %v4851
      %v4918 = vsub.f32 %v4758, %v4853
      %v4919 = vsub.f32 %v4759, %v4855
      %4952 = vrot.lane.b32.xlu0 %v42, 3
      %v4953 = vpop.permute.xlu0 %4952
      %4954 = vrot.lane.b32.xlu0 %v43, 3
      %v4955 = vpop.permute.xlu0 %4954
      %4956 = vrot.lane.b32.xlu0 %v44, 3
      %v4957 = vpop.permute.xlu0 %4956
      %4958 = vrot.lane.b32.xlu0 %v45, 3
      %v4959 = vpop.permute.xlu0 %4958
      %4960 = vrot.lane.b32.xlu0 %v46, 3
      %v4961 = vpop.permute.xlu0 %4960
      %4962 = vrot.lane.b32.xlu0 %v47, 3
      %v4963 = vpop.permute.xlu0 %4962
      %4964 = vrot.lane.b32.xlu0 %v48, 3
      %v4965 = vpop.permute.xlu0 %4964
      %4966 = vrot.lane.b32.xlu0 %v49, 3
      %v4967 = vpop.permute.xlu0 %4966
      %4968 = vrot.lane.b32.xlu0 %v50, 3
      %v4969 = vpop.permute.xlu0 %4968
      %4970 = vrot.lane.b32.xlu0 %v51, 3
      %v4971 = vpop.permute.xlu0 %4970
      %4972 = vrot.lane.b32.xlu0 %v52, 3
      %v4973 = vpop.permute.xlu0 %4972
      %4974 = vrot.lane.b32.xlu0 %v53, 3
      %v4975 = vpop.permute.xlu0 %4974
      %4976 = vrot.lane.b32.xlu0 %v54, 3
      %v4977 = vpop.permute.xlu0 %4976
      %4978 = vrot.lane.b32.xlu0 %v55, 3
      %v4979 = vpop.permute.xlu0 %4978
      %4980 = vrot.lane.b32.xlu0 %v56, 3
      %v4981 = vpop.permute.xlu0 %4980
      %4982 = vrot.lane.b32.xlu0 %v57, 3
      %v4983 = vpop.permute.xlu0 %4982
      %4984 = vrot.lane.b32.xlu0 %v58, 3
      %v4985 = vpop.permute.xlu0 %4984
      %4986 = vrot.lane.b32.xlu0 %v59, 3
      %v4987 = vpop.permute.xlu0 %4986
      %4988 = vrot.lane.b32.xlu0 %v60, 3
      %v4989 = vpop.permute.xlu0 %4988
      %4990 = vrot.lane.b32.xlu0 %v61, 3
      %v4991 = vpop.permute.xlu0 %4990
      %4992 = vrot.lane.b32.xlu0 %v62, 3
      %v4993 = vpop.permute.xlu0 %4992
      %4994 = vrot.lane.b32.xlu0 %v63, 3
      %v4995 = vpop.permute.xlu0 %4994
      %4996 = vrot.lane.b32.xlu0 %v64, 3
      %v4997 = vpop.permute.xlu0 %4996
      %4998 = vrot.lane.b32.xlu0 %v65, 3
      %v4999 = vpop.permute.xlu0 %4998
      %5000 = vrot.lane.b32.xlu0 %v66, 3
      %v5001 = vpop.permute.xlu0 %5000
      %5002 = vrot.lane.b32.xlu0 %v67, 3
      %v5003 = vpop.permute.xlu0 %5002
      %5004 = vrot.lane.b32.xlu0 %v68, 3
      %v5005 = vpop.permute.xlu0 %5004
      %5006 = vrot.lane.b32.xlu0 %v69, 3
      %v5007 = vpop.permute.xlu0 %5006
      %5008 = vrot.lane.b32.xlu0 %v70, 3
      %v5009 = vpop.permute.xlu0 %5008
      %5010 = vrot.lane.b32.xlu0 %v71, 3
      %v5011 = vpop.permute.xlu0 %5010
      %5012 = vrot.lane.b32.xlu0 %v72, 3
      %v5013 = vpop.permute.xlu0 %5012
      %5014 = vrot.lane.b32.xlu0 %v73, 3
      %v5015 = vpop.permute.xlu0 %5014
      %vm5048 = vcmp.eq.f32.partialorder %v4504, %v4953
      %vm5049 = vcmp.eq.f32.partialorder %v4505, %v4955
      %vm5050 = vcmp.eq.f32.partialorder %v4506, %v4957
      %vm5051 = vcmp.eq.f32.partialorder %v4507, %v4959
      %vm5052 = vcmp.eq.f32.partialorder %v4508, %v4961
      %vm5053 = vcmp.eq.f32.partialorder %v4509, %v4963
      %vm5054 = vcmp.eq.f32.partialorder %v4510, %v4965
      %vm5055 = vcmp.eq.f32.partialorder %v4511, %v4967
      %vm5056 = vcmp.eq.f32.partialorder %v4512, %v4969
      %vm5057 = vcmp.eq.f32.partialorder %v4513, %v4971
      %vm5058 = vcmp.eq.f32.partialorder %v4514, %v4973
      %vm5059 = vcmp.eq.f32.partialorder %v4515, %v4975
      %vm5060 = vcmp.eq.f32.partialorder %v4516, %v4977
      %vm5061 = vcmp.eq.f32.partialorder %v4517, %v4979
      %vm5062 = vcmp.eq.f32.partialorder %v4518, %v4981
      %vm5063 = vcmp.eq.f32.partialorder %v4519, %v4983
      %vm5064 = vcmp.eq.f32.partialorder %v4520, %v4985
      %vm5065 = vcmp.eq.f32.partialorder %v4521, %v4987
      %vm5066 = vcmp.eq.f32.partialorder %v4522, %v4989
      %vm5067 = vcmp.eq.f32.partialorder %v4523, %v4991
      %vm5068 = vcmp.eq.f32.partialorder %v4524, %v4993
      %vm5069 = vcmp.eq.f32.partialorder %v4525, %v4995
      %vm5070 = vcmp.eq.f32.partialorder %v4526, %v4997
      %vm5071 = vcmp.eq.f32.partialorder %v4527, %v4999
      %vm5072 = vcmp.eq.f32.partialorder %v4528, %v5001
      %vm5073 = vcmp.eq.f32.partialorder %v4529, %v5003
      %vm5074 = vcmp.eq.f32.partialorder %v4530, %v5005
      %vm5075 = vcmp.eq.f32.partialorder %v4531, %v5007
      %vm5076 = vcmp.eq.f32.partialorder %v4532, %v5009
      %vm5077 = vcmp.eq.f32.partialorder %v4533, %v5011
      %vm5078 = vcmp.eq.f32.partialorder %v4534, %v5013
      %vm5079 = vcmp.eq.f32.partialorder %v4535, %v5015
      %v5080 = vsel %vm5048, 1, 0
      %v5081 = vsel %vm5049, 1, 0
      %v5082 = vsel %vm5050, 1, 0
      %v5083 = vsel %vm5051, 1, 0
      %v5084 = vsel %vm5052, 1, 0
      %v5085 = vsel %vm5053, 1, 0
      %v5086 = vsel %vm5054, 1, 0
      %v5087 = vsel %vm5055, 1, 0
      %v5088 = vsel %vm5056, 1, 0
      %v5089 = vsel %vm5057, 1, 0
      %v5090 = vsel %vm5058, 1, 0
      %v5091 = vsel %vm5059, 1, 0
      %v5092 = vsel %vm5060, 1, 0
      %v5093 = vsel %vm5061, 1, 0
      %v5094 = vsel %vm5062, 1, 0
      %v5095 = vsel %vm5063, 1, 0
      %v5096 = vsel %vm5064, 1, 0
      %v5097 = vsel %vm5065, 1, 0
      %v5098 = vsel %vm5066, 1, 0
      %v5099 = vsel %vm5067, 1, 0
      %v5100 = vsel %vm5068, 1, 0
      %v5101 = vsel %vm5069, 1, 0
      %v5102 = vsel %vm5070, 1, 0
      %v5103 = vsel %vm5071, 1, 0
      %v5104 = vsel %vm5072, 1, 0
      %v5105 = vsel %vm5073, 1, 0
      %v5106 = vsel %vm5074, 1, 0
      %v5107 = vsel %vm5075, 1, 0
      %v5108 = vsel %vm5076, 1, 0
      %v5109 = vsel %vm5077, 1, 0
      %v5110 = vsel %vm5078, 1, 0
      %v5111 = vsel %vm5079, 1, 0
      %v5112 = vcvt.s32.f32 %v5080
      %v5113 = vcvt.s32.f32 %v5081
      %v5114 = vcvt.s32.f32 %v5082
      %v5115 = vcvt.s32.f32 %v5083
      %v5116 = vcvt.s32.f32 %v5084
      %v5117 = vcvt.s32.f32 %v5085
      %v5118 = vcvt.s32.f32 %v5086
      %v5119 = vcvt.s32.f32 %v5087
      %v5120 = vcvt.s32.f32 %v5088
      %v5121 = vcvt.s32.f32 %v5089
      %v5122 = vcvt.s32.f32 %v5090
      %v5123 = vcvt.s32.f32 %v5091
      %v5124 = vcvt.s32.f32 %v5092
      %v5125 = vcvt.s32.f32 %v5093
      %v5126 = vcvt.s32.f32 %v5094
      %v5127 = vcvt.s32.f32 %v5095
      %v5128 = vcvt.s32.f32 %v5096
      %v5129 = vcvt.s32.f32 %v5097
      %v5130 = vcvt.s32.f32 %v5098
      %v5131 = vcvt.s32.f32 %v5099
      %v5132 = vcvt.s32.f32 %v5100
      %v5133 = vcvt.s32.f32 %v5101
      %v5134 = vcvt.s32.f32 %v5102
      %v5135 = vcvt.s32.f32 %v5103
      %v5136 = vcvt.s32.f32 %v5104
      %v5137 = vcvt.s32.f32 %v5105
      %v5138 = vcvt.s32.f32 %v5106
      %v5139 = vcvt.s32.f32 %v5107
      %v5140 = vcvt.s32.f32 %v5108
      %v5141 = vcvt.s32.f32 %v5109
      %v5142 = vcvt.s32.f32 %v5110
      %v5143 = vcvt.s32.f32 %v5111
      %5144 = vrot.lane.b32.xlu0 %v42, 2
      %v5145 = vpop.permute.xlu0 %5144
      %5146 = vrot.lane.b32.xlu0 %v43, 2
      %v5147 = vpop.permute.xlu0 %5146
      %5148 = vrot.lane.b32.xlu0 %v44, 2
      %v5149 = vpop.permute.xlu0 %5148
      %5150 = vrot.lane.b32.xlu0 %v45, 2
      %v5151 = vpop.permute.xlu0 %5150
      %5152 = vrot.lane.b32.xlu0 %v46, 2
      %v5153 = vpop.permute.xlu0 %5152
      %5154 = vrot.lane.b32.xlu0 %v47, 2
      %v5155 = vpop.permute.xlu0 %5154
      %5156 = vrot.lane.b32.xlu0 %v48, 2
      %v5157 = vpop.permute.xlu0 %5156
      %5158 = vrot.lane.b32.xlu0 %v49, 2
      %v5159 = vpop.permute.xlu0 %5158
      %5160 = vrot.lane.b32.xlu0 %v50, 2
      %v5161 = vpop.permute.xlu0 %5160
      %5162 = vrot.lane.b32.xlu0 %v51, 2
      %v5163 = vpop.permute.xlu0 %5162
      %5164 = vrot.lane.b32.xlu0 %v52, 2
      %v5165 = vpop.permute.xlu0 %5164
      %5166 = vrot.lane.b32.xlu0 %v53, 2
      %v5167 = vpop.permute.xlu0 %5166
      %5168 = vrot.lane.b32.xlu0 %v54, 2
      %v5169 = vpop.permute.xlu0 %5168
      %5170 = vrot.lane.b32.xlu0 %v55, 2
      %v5171 = vpop.permute.xlu0 %5170
      %5172 = vrot.lane.b32.xlu0 %v56, 2
      %v5173 = vpop.permute.xlu0 %5172
      %5174 = vrot.lane.b32.xlu0 %v57, 2
      %v5175 = vpop.permute.xlu0 %5174
      %5176 = vrot.lane.b32.xlu0 %v58, 2
      %v5177 = vpop.permute.xlu0 %5176
      %5178 = vrot.lane.b32.xlu0 %v59, 2
      %v5179 = vpop.permute.xlu0 %5178
      %5180 = vrot.lane.b32.xlu0 %v60, 2
      %v5181 = vpop.permute.xlu0 %5180
      %5182 = vrot.lane.b32.xlu0 %v61, 2
      %v5183 = vpop.permute.xlu0 %5182
      %5184 = vrot.lane.b32.xlu0 %v62, 2
      %v5185 = vpop.permute.xlu0 %5184
      %5186 = vrot.lane.b32.xlu0 %v63, 2
      %v5187 = vpop.permute.xlu0 %5186
      %5188 = vrot.lane.b32.xlu0 %v64, 2
      %v5189 = vpop.permute.xlu0 %5188
      %5190 = vrot.lane.b32.xlu0 %v65, 2
      %v5191 = vpop.permute.xlu0 %5190
      %5192 = vrot.lane.b32.xlu0 %v66, 2
      %v5193 = vpop.permute.xlu0 %5192
      %5194 = vrot.lane.b32.xlu0 %v67, 2
      %v5195 = vpop.permute.xlu0 %5194
      %5196 = vrot.lane.b32.xlu0 %v68, 2
      %v5197 = vpop.permute.xlu0 %5196
      %5198 = vrot.lane.b32.xlu0 %v69, 2
      %v5199 = vpop.permute.xlu0 %5198
      %5200 = vrot.lane.b32.xlu0 %v70, 2
      %v5201 = vpop.permute.xlu0 %5200
      %5202 = vrot.lane.b32.xlu0 %v71, 2
      %v5203 = vpop.permute.xlu0 %5202
      %5204 = vrot.lane.b32.xlu0 %v72, 2
      %v5205 = vpop.permute.xlu0 %5204
      %5206 = vrot.lane.b32.xlu0 %v73, 2
      %v5207 = vpop.permute.xlu0 %5206
      %v5240 = vmul.f32 %v5112, %v5145
      %v5241 = vmul.f32 %v5113, %v5147
      %v5242 = vmul.f32 %v5114, %v5149
      %v5243 = vmul.f32 %v5115, %v5151
      %v5244 = vmul.f32 %v5116, %v5153
      %v5245 = vmul.f32 %v5117, %v5155
      %v5246 = vmul.f32 %v5118, %v5157
      %v5247 = vmul.f32 %v5119, %v5159
      %v5248 = vmul.f32 %v5120, %v5161
      %v5249 = vmul.f32 %v5121, %v5163
      %v5250 = vmul.f32 %v5122, %v5165
      %v5251 = vmul.f32 %v5123, %v5167
      %v5252 = vmul.f32 %v5124, %v5169
      %v5253 = vmul.f32 %v5125, %v5171
      %v5254 = vmul.f32 %v5126, %v5173
      %v5255 = vmul.f32 %v5127, %v5175
      %v5256 = vmul.f32 %v5128, %v5177
      %v5257 = vmul.f32 %v5129, %v5179
      %v5258 = vmul.f32 %v5130, %v5181
      %v5259 = vmul.f32 %v5131, %v5183
      %v5260 = vmul.f32 %v5132, %v5185
      %v5261 = vmul.f32 %v5133, %v5187
      %v5262 = vmul.f32 %v5134, %v5189
      %v5263 = vmul.f32 %v5135, %v5191
      %v5264 = vmul.f32 %v5136, %v5193
      %v5265 = vmul.f32 %v5137, %v5195
      %v5266 = vmul.f32 %v5138, %v5197
      %v5267 = vmul.f32 %v5139, %v5199
      %v5268 = vmul.f32 %v5140, %v5201
      %v5269 = vmul.f32 %v5141, %v5203
      %v5270 = vmul.f32 %v5142, %v5205
      %v5271 = vmul.f32 %v5143, %v5207
      %vm5272 = vcmp.eq.s32.totalorder %v2059, 0
      %5273 = vrot.lane.b32.xlu0 %v42, 1
      %v5274 = vpop.permute.xlu0 %5273
      %5275 = vrot.lane.b32.xlu0 %v43, 1
      %v5276 = vpop.permute.xlu0 %5275
      %5277 = vrot.lane.b32.xlu0 %v44, 1
      %v5278 = vpop.permute.xlu0 %5277
      %5279 = vrot.lane.b32.xlu0 %v45, 1
      %v5280 = vpop.permute.xlu0 %5279
      %5281 = vrot.lane.b32.xlu0 %v46, 1
      %v5282 = vpop.permute.xlu0 %5281
      %5283 = vrot.lane.b32.xlu0 %v47, 1
      %v5284 = vpop.permute.xlu0 %5283
      %5285 = vrot.lane.b32.xlu0 %v48, 1
      %v5286 = vpop.permute.xlu0 %5285
      %5287 = vrot.lane.b32.xlu0 %v49, 1
      %v5288 = vpop.permute.xlu0 %5287
      %5289 = vrot.lane.b32.xlu0 %v50, 1
      %v5290 = vpop.permute.xlu0 %5289
      %5291 = vrot.lane.b32.xlu0 %v51, 1
      %v5292 = vpop.permute.xlu0 %5291
      %5293 = vrot.lane.b32.xlu0 %v52, 1
      %v5294 = vpop.permute.xlu0 %5293
      %5295 = vrot.lane.b32.xlu0 %v53, 1
      %v5296 = vpop.permute.xlu0 %5295
      %5297 = vrot.lane.b32.xlu0 %v54, 1
      %v5298 = vpop.permute.xlu0 %5297
      %5299 = vrot.lane.b32.xlu0 %v55, 1
      %v5300 = vpop.permute.xlu0 %5299
      %5301 = vrot.lane.b32.xlu0 %v56, 1
      %v5302 = vpop.permute.xlu0 %5301
      %5303 = vrot.lane.b32.xlu0 %v57, 1
      %v5304 = vpop.permute.xlu0 %5303
      %5305 = vrot.lane.b32.xlu0 %v58, 1
      %v5306 = vpop.permute.xlu0 %5305
      %5307 = vrot.lane.b32.xlu0 %v59, 1
      %v5308 = vpop.permute.xlu0 %5307
      %5309 = vrot.lane.b32.xlu0 %v60, 1
      %v5310 = vpop.permute.xlu0 %5309
      %5311 = vrot.lane.b32.xlu0 %v61, 1
      %v5312 = vpop.permute.xlu0 %5311
      %5313 = vrot.lane.b32.xlu0 %v62, 1
      %v5314 = vpop.permute.xlu0 %5313
      %5315 = vrot.lane.b32.xlu0 %v63, 1
      %v5316 = vpop.permute.xlu0 %5315
      %5317 = vrot.lane.b32.xlu0 %v64, 1
      %v5318 = vpop.permute.xlu0 %5317
      %5319 = vrot.lane.b32.xlu0 %v65, 1
      %v5320 = vpop.permute.xlu0 %5319
      %5321 = vrot.lane.b32.xlu0 %v66, 1
      %v5322 = vpop.permute.xlu0 %5321
      %5323 = vrot.lane.b32.xlu0 %v67, 1
      %v5324 = vpop.permute.xlu0 %5323
      %5325 = vrot.lane.b32.xlu0 %v68, 1
      %v5326 = vpop.permute.xlu0 %5325
      %5327 = vrot.lane.b32.xlu0 %v69, 1
      %v5328 = vpop.permute.xlu0 %5327
      %5329 = vrot.lane.b32.xlu0 %v70, 1
      %v5330 = vpop.permute.xlu0 %5329
      %5331 = vrot.lane.b32.xlu0 %v71, 1
      %v5332 = vpop.permute.xlu0 %5331
      %5333 = vrot.lane.b32.xlu0 %v72, 1
      %v5334 = vpop.permute.xlu0 %5333
      %5335 = vrot.lane.b32.xlu0 %v73, 1
      %v5336 = vpop.permute.xlu0 %5335
      %v5369 = vmul.f32 %v42, %v5274
      %v5370 = vmul.f32 %v43, %v5276
      %v5371 = vmul.f32 %v44, %v5278
      %v5372 = vmul.f32 %v45, %v5280
      %v5373 = vmul.f32 %v46, %v5282
      %v5374 = vmul.f32 %v47, %v5284
      %v5375 = vmul.f32 %v48, %v5286
      %v5376 = vmul.f32 %v49, %v5288
      %v5377 = vmul.f32 %v50, %v5290
      %v5378 = vmul.f32 %v51, %v5292
      %v5379 = vmul.f32 %v52, %v5294
      %v5380 = vmul.f32 %v53, %v5296
      %v5381 = vmul.f32 %v54, %v5298
      %v5382 = vmul.f32 %v55, %v5300
      %v5383 = vmul.f32 %v56, %v5302
      %v5384 = vmul.f32 %v57, %v5304
      %v5385 = vmul.f32 %v58, %v5306
      %v5386 = vmul.f32 %v59, %v5308
      %v5387 = vmul.f32 %v60, %v5310
      %v5388 = vmul.f32 %v61, %v5312
      %v5389 = vmul.f32 %v62, %v5314
      %v5390 = vmul.f32 %v63, %v5316
      %v5391 = vmul.f32 %v64, %v5318
      %v5392 = vmul.f32 %v65, %v5320
      %v5393 = vmul.f32 %v66, %v5322
      %v5394 = vmul.f32 %v67, %v5324
      %v5395 = vmul.f32 %v68, %v5326
      %v5396 = vmul.f32 %v69, %v5328
      %v5397 = vmul.f32 %v70, %v5330
      %v5398 = vmul.f32 %v71, %v5332
      %v5399 = vmul.f32 %v72, %v5334
      %v5400 = vmul.f32 %v73, %v5336
      %5433 = vrot.lane.b32.xlu0 %v4888, 2
      %v5434 = vpop.permute.xlu0 %5433
      %5435 = vrot.lane.b32.xlu0 %v4889, 2
      %v5436 = vpop.permute.xlu0 %5435
      %5437 = vrot.lane.b32.xlu0 %v4890, 2
      %v5438 = vpop.permute.xlu0 %5437
      %5439 = vrot.lane.b32.xlu0 %v4891, 2
      %v5440 = vpop.permute.xlu0 %5439
      %5441 = vrot.lane.b32.xlu0 %v4892, 2
      %v5442 = vpop.permute.xlu0 %5441
      %5443 = vrot.lane.b32.xlu0 %v4893, 2
      %v5444 = vpop.permute.xlu0 %5443
      %5445 = vrot.lane.b32.xlu0 %v4894, 2
      %v5446 = vpop.permute.xlu0 %5445
      %5447 = vrot.lane.b32.xlu0 %v4895, 2
      %v5448 = vpop.permute.xlu0 %5447
      %5449 = vrot.lane.b32.xlu0 %v4896, 2
      %v5450 = vpop.permute.xlu0 %5449
      %5451 = vrot.lane.b32.xlu0 %v4897, 2
      %v5452 = vpop.permute.xlu0 %5451
      %5453 = vrot.lane.b32.xlu0 %v4898, 2
      %v5454 = vpop.permute.xlu0 %5453
      %5455 = vrot.lane.b32.xlu0 %v4899, 2
      %v5456 = vpop.permute.xlu0 %5455
      %5457 = vrot.lane.b32.xlu0 %v4900, 2
      %v5458 = vpop.permute.xlu0 %5457
      %5459 = vrot.lane.b32.xlu0 %v4901, 2
      %v5460 = vpop.permute.xlu0 %5459
      %5461 = vrot.lane.b32.xlu0 %v4902, 2
      %v5462 = vpop.permute.xlu0 %5461
      %5463 = vrot.lane.b32.xlu0 %v4903, 2
      %v5464 = vpop.permute.xlu0 %5463
      %5465 = vrot.lane.b32.xlu0 %v4904, 2
      %v5466 = vpop.permute.xlu0 %5465
      %5467 = vrot.lane.b32.xlu0 %v4905, 2
      %v5468 = vpop.permute.xlu0 %5467
      %5469 = vrot.lane.b32.xlu0 %v4906, 2
      %v5470 = vpop.permute.xlu0 %5469
      %5471 = vrot.lane.b32.xlu0 %v4907, 2
      %v5472 = vpop.permute.xlu0 %5471
      %5473 = vrot.lane.b32.xlu0 %v4908, 2
      %v5474 = vpop.permute.xlu0 %5473
      %5475 = vrot.lane.b32.xlu0 %v4909, 2
      %v5476 = vpop.permute.xlu0 %5475
      %5477 = vrot.lane.b32.xlu0 %v4910, 2
      %v5478 = vpop.permute.xlu0 %5477
      %5479 = vrot.lane.b32.xlu0 %v4911, 2
      %v5480 = vpop.permute.xlu0 %5479
      %5481 = vrot.lane.b32.xlu0 %v4912, 2
      %v5482 = vpop.permute.xlu0 %5481
      %5483 = vrot.lane.b32.xlu0 %v4913, 2
      %v5484 = vpop.permute.xlu0 %5483
      %5485 = vrot.lane.b32.xlu0 %v4914, 2
      %v5486 = vpop.permute.xlu0 %5485
      %5487 = vrot.lane.b32.xlu0 %v4915, 2
      %v5488 = vpop.permute.xlu0 %5487
      %5489 = vrot.lane.b32.xlu0 %v4916, 2
      %v5490 = vpop.permute.xlu0 %5489
      %5491 = vrot.lane.b32.xlu0 %v4917, 2
      %v5492 = vpop.permute.xlu0 %5491
      %5493 = vrot.lane.b32.xlu0 %v4918, 2
      %v5494 = vpop.permute.xlu0 %5493
      %5495 = vrot.lane.b32.xlu0 %v4919, 2
      %v5496 = vpop.permute.xlu0 %5495
      %v5529 = vmul.f32 %v5369, %v5434
      %v5530 = vmul.f32 %v5370, %v5436
      %v5531 = vmul.f32 %v5371, %v5438
      %v5532 = vmul.f32 %v5372, %v5440
      %v5533 = vmul.f32 %v5373, %v5442
      %v5534 = vmul.f32 %v5374, %v5444
      %v5535 = vmul.f32 %v5375, %v5446
      %v5536 = vmul.f32 %v5376, %v5448
      %v5537 = vmul.f32 %v5377, %v5450
      %v5538 = vmul.f32 %v5378, %v5452
      %v5539 = vmul.f32 %v5379, %v5454
      %v5540 = vmul.f32 %v5380, %v5456
      %v5541 = vmul.f32 %v5381, %v5458
      %v5542 = vmul.f32 %v5382, %v5460
      %v5543 = vmul.f32 %v5383, %v5462
      %v5544 = vmul.f32 %v5384, %v5464
      %v5545 = vmul.f32 %v5385, %v5466
      %v5546 = vmul.f32 %v5386, %v5468
      %v5547 = vmul.f32 %v5387, %v5470
      %v5548 = vmul.f32 %v5388, %v5472
      %v5549 = vmul.f32 %v5389, %v5474
      %v5550 = vmul.f32 %v5390, %v5476
      %v5551 = vmul.f32 %v5391, %v5478
      %v5552 = vmul.f32 %v5392, %v5480
      %v5553 = vmul.f32 %v5393, %v5482
      %v5554 = vmul.f32 %v5394, %v5484
      %v5555 = vmul.f32 %v5395, %v5486
      %v5556 = vmul.f32 %v5396, %v5488
      %v5557 = vmul.f32 %v5397, %v5490
      %v5558 = vmul.f32 %v5398, %v5492
      %v5559 = vmul.f32 %v5399, %v5494
      %v5560 = vmul.f32 %v5400, %v5496
      %5562 = vset.pattern.permute.xlu0 2
      %5563 = vperm.xlu0 %5562, %v5529
      %v5564 = vpop.permute.xlu0 %5563
      %5567 = vset.pattern.permute.xlu0 2
      %5568 = vperm.xlu0 %5567, %v5530
      %v5569 = vpop.permute.xlu0 %5568
      %5572 = vset.pattern.permute.xlu0 2
      %5573 = vperm.xlu0 %5572, %v5531
      %v5574 = vpop.permute.xlu0 %5573
      %5577 = vset.pattern.permute.xlu0 2
      %5578 = vperm.xlu0 %5577, %v5532
      %v5579 = vpop.permute.xlu0 %5578
      %5582 = vset.pattern.permute.xlu0 2
      %5583 = vperm.xlu0 %5582, %v5533
      %v5584 = vpop.permute.xlu0 %5583
      %5587 = vset.pattern.permute.xlu0 2
      %5588 = vperm.xlu0 %5587, %v5534
      %v5589 = vpop.permute.xlu0 %5588
      %5592 = vset.pattern.permute.xlu0 2
      %5593 = vperm.xlu0 %5592, %v5535
      %v5594 = vpop.permute.xlu0 %5593
      %5597 = vset.pattern.permute.xlu0 2
      %5598 = vperm.xlu0 %5597, %v5536
      %v5599 = vpop.permute.xlu0 %5598
      %5602 = vset.pattern.permute.xlu0 2
      %5603 = vperm.xlu0 %5602, %v5537
      %v5604 = vpop.permute.xlu0 %5603
      %5607 = vset.pattern.permute.xlu0 2
      %5608 = vperm.xlu0 %5607, %v5538
      %v5609 = vpop.permute.xlu0 %5608
      %5612 = vset.pattern.permute.xlu0 2
      %5613 = vperm.xlu0 %5612, %v5539
      %v5614 = vpop.permute.xlu0 %5613
      %5617 = vset.pattern.permute.xlu0 2
      %5618 = vperm.xlu0 %5617, %v5540
      %v5619 = vpop.permute.xlu0 %5618
      %5622 = vset.pattern.permute.xlu0 2
      %5623 = vperm.xlu0 %5622, %v5541
      %v5624 = vpop.permute.xlu0 %5623
      %5627 = vset.pattern.permute.xlu0 2
      %5628 = vperm.xlu0 %5627, %v5542
      %v5629 = vpop.permute.xlu0 %5628
      %5632 = vset.pattern.permute.xlu0 2
      %5633 = vperm.xlu0 %5632, %v5543
      %v5634 = vpop.permute.xlu0 %5633
      %5637 = vset.pattern.permute.xlu0 2
      %5638 = vperm.xlu0 %5637, %v5544
      %v5639 = vpop.permute.xlu0 %5638
      %5642 = vset.pattern.permute.xlu0 2
      %5643 = vperm.xlu0 %5642, %v5545
      %v5644 = vpop.permute.xlu0 %5643
      %5647 = vset.pattern.permute.xlu0 2
      %5648 = vperm.xlu0 %5647, %v5546
      %v5649 = vpop.permute.xlu0 %5648
      %5652 = vset.pattern.permute.xlu0 2
      %5653 = vperm.xlu0 %5652, %v5547
      %v5654 = vpop.permute.xlu0 %5653
      %5657 = vset.pattern.permute.xlu0 2
      %5658 = vperm.xlu0 %5657, %v5548
      %v5659 = vpop.permute.xlu0 %5658
      %5662 = vset.pattern.permute.xlu0 2
      %5663 = vperm.xlu0 %5662, %v5549
      %v5664 = vpop.permute.xlu0 %5663
      %5667 = vset.pattern.permute.xlu0 2
      %5668 = vperm.xlu0 %5667, %v5550
      %v5669 = vpop.permute.xlu0 %5668
      %5672 = vset.pattern.permute.xlu0 2
      %5673 = vperm.xlu0 %5672, %v5551
      %v5674 = vpop.permute.xlu0 %5673
      %5677 = vset.pattern.permute.xlu0 2
      %5678 = vperm.xlu0 %5677, %v5552
      %v5679 = vpop.permute.xlu0 %5678
      %5682 = vset.pattern.permute.xlu0 2
      %5683 = vperm.xlu0 %5682, %v5553
      %v5684 = vpop.permute.xlu0 %5683
      %5687 = vset.pattern.permute.xlu0 2
      %5688 = vperm.xlu0 %5687, %v5554
      %v5689 = vpop.permute.xlu0 %5688
      %5692 = vset.pattern.permute.xlu0 2
      %5693 = vperm.xlu0 %5692, %v5555
      %v5694 = vpop.permute.xlu0 %5693
      %5697 = vset.pattern.permute.xlu0 2
      %5698 = vperm.xlu0 %5697, %v5556
      %v5699 = vpop.permute.xlu0 %5698
      %5702 = vset.pattern.permute.xlu0 2
      %5703 = vperm.xlu0 %5702, %v5557
      %v5704 = vpop.permute.xlu0 %5703
      %5707 = vset.pattern.permute.xlu0 2
      %5708 = vperm.xlu0 %5707, %v5558
      %v5709 = vpop.permute.xlu0 %5708
      %5712 = vset.pattern.permute.xlu0 2
      %5713 = vperm.xlu0 %5712, %v5559
      %v5714 = vpop.permute.xlu0 %5713
      %5717 = vset.pattern.permute.xlu0 2
      %5718 = vperm.xlu0 %5717, %v5560
      %v5719 = vpop.permute.xlu0 %5718
      %v5721 = vsel %vm5272, %v5564, 0.0
      %v5722 = vsel %vm5272, %v5569, 0.0
      %v5723 = vsel %vm5272, %v5574, 0.0
      %v5724 = vsel %vm5272, %v5579, 0.0
      %v5725 = vsel %vm5272, %v5584, 0.0
      %v5726 = vsel %vm5272, %v5589, 0.0
      %v5727 = vsel %vm5272, %v5594, 0.0
      %v5728 = vsel %vm5272, %v5599, 0.0
      %v5729 = vsel %vm5272, %v5604, 0.0
      %v5730 = vsel %vm5272, %v5609, 0.0
      %v5731 = vsel %vm5272, %v5614, 0.0
      %v5732 = vsel %vm5272, %v5619, 0.0
      %v5733 = vsel %vm5272, %v5624, 0.0
      %v5734 = vsel %vm5272, %v5629, 0.0
      %v5735 = vsel %vm5272, %v5634, 0.0
      %v5736 = vsel %vm5272, %v5639, 0.0
      %v5737 = vsel %vm5272, %v5644, 0.0
      %v5738 = vsel %vm5272, %v5649, 0.0
      %v5739 = vsel %vm5272, %v5654, 0.0
      %v5740 = vsel %vm5272, %v5659, 0.0
      %v5741 = vsel %vm5272, %v5664, 0.0
      %v5742 = vsel %vm5272, %v5669, 0.0
      %v5743 = vsel %vm5272, %v5674, 0.0
      %v5744 = vsel %vm5272, %v5679, 0.0
      %v5745 = vsel %vm5272, %v5684, 0.0
      %v5746 = vsel %vm5272, %v5689, 0.0
      %v5747 = vsel %vm5272, %v5694, 0.0
      %v5748 = vsel %vm5272, %v5699, 0.0
      %v5749 = vsel %vm5272, %v5704, 0.0
      %v5750 = vsel %vm5272, %v5709, 0.0
      %v5751 = vsel %vm5272, %v5714, 0.0
      %v5752 = vsel %vm5272, %v5719, 0.0
      %vm5753 = vcmp.eq.s32.totalorder %v2059, 1
      %5754 = vrot.lane.b32.xlu0 %v4888, 1
      %v5755 = vpop.permute.xlu0 %5754
      %5756 = vrot.lane.b32.xlu0 %v4889, 1
      %v5757 = vpop.permute.xlu0 %5756
      %5758 = vrot.lane.b32.xlu0 %v4890, 1
      %v5759 = vpop.permute.xlu0 %5758
      %5760 = vrot.lane.b32.xlu0 %v4891, 1
      %v5761 = vpop.permute.xlu0 %5760
      %5762 = vrot.lane.b32.xlu0 %v4892, 1
      %v5763 = vpop.permute.xlu0 %5762
      %5764 = vrot.lane.b32.xlu0 %v4893, 1
      %v5765 = vpop.permute.xlu0 %5764
      %5766 = vrot.lane.b32.xlu0 %v4894, 1
      %v5767 = vpop.permute.xlu0 %5766
      %5768 = vrot.lane.b32.xlu0 %v4895, 1
      %v5769 = vpop.permute.xlu0 %5768
      %5770 = vrot.lane.b32.xlu0 %v4896, 1
      %v5771 = vpop.permute.xlu0 %5770
      %5772 = vrot.lane.b32.xlu0 %v4897, 1
      %v5773 = vpop.permute.xlu0 %5772
      %5774 = vrot.lane.b32.xlu0 %v4898, 1
      %v5775 = vpop.permute.xlu0 %5774
      %5776 = vrot.lane.b32.xlu0 %v4899, 1
      %v5777 = vpop.permute.xlu0 %5776
      %5778 = vrot.lane.b32.xlu0 %v4900, 1
      %v5779 = vpop.permute.xlu0 %5778
      %5780 = vrot.lane.b32.xlu0 %v4901, 1
      %v5781 = vpop.permute.xlu0 %5780
      %5782 = vrot.lane.b32.xlu0 %v4902, 1
      %v5783 = vpop.permute.xlu0 %5782
      %5784 = vrot.lane.b32.xlu0 %v4903, 1
      %v5785 = vpop.permute.xlu0 %5784
      %5786 = vrot.lane.b32.xlu0 %v4904, 1
      %v5787 = vpop.permute.xlu0 %5786
      %5788 = vrot.lane.b32.xlu0 %v4905, 1
      %v5789 = vpop.permute.xlu0 %5788
      %5790 = vrot.lane.b32.xlu0 %v4906, 1
      %v5791 = vpop.permute.xlu0 %5790
      %5792 = vrot.lane.b32.xlu0 %v4907, 1
      %v5793 = vpop.permute.xlu0 %5792
      %5794 = vrot.lane.b32.xlu0 %v4908, 1
      %v5795 = vpop.permute.xlu0 %5794
      %5796 = vrot.lane.b32.xlu0 %v4909, 1
      %v5797 = vpop.permute.xlu0 %5796
      %5798 = vrot.lane.b32.xlu0 %v4910, 1
      %v5799 = vpop.permute.xlu0 %5798
      %5800 = vrot.lane.b32.xlu0 %v4911, 1
      %v5801 = vpop.permute.xlu0 %5800
      %5802 = vrot.lane.b32.xlu0 %v4912, 1
      %v5803 = vpop.permute.xlu0 %5802
      %5804 = vrot.lane.b32.xlu0 %v4913, 1
      %v5805 = vpop.permute.xlu0 %5804
      %5806 = vrot.lane.b32.xlu0 %v4914, 1
      %v5807 = vpop.permute.xlu0 %5806
      %5808 = vrot.lane.b32.xlu0 %v4915, 1
      %v5809 = vpop.permute.xlu0 %5808
      %5810 = vrot.lane.b32.xlu0 %v4916, 1
      %v5811 = vpop.permute.xlu0 %5810
      %5812 = vrot.lane.b32.xlu0 %v4917, 1
      %v5813 = vpop.permute.xlu0 %5812
      %5814 = vrot.lane.b32.xlu0 %v4918, 1
      %v5815 = vpop.permute.xlu0 %5814
      %5816 = vrot.lane.b32.xlu0 %v4919, 1
      %v5817 = vpop.permute.xlu0 %5816
      %v5850 = vmul.f32 %v42, %v5755
      %v5851 = vmul.f32 %v43, %v5757
      %v5852 = vmul.f32 %v44, %v5759
      %v5853 = vmul.f32 %v45, %v5761
      %v5854 = vmul.f32 %v46, %v5763
      %v5855 = vmul.f32 %v47, %v5765
      %v5856 = vmul.f32 %v48, %v5767
      %v5857 = vmul.f32 %v49, %v5769
      %v5858 = vmul.f32 %v50, %v5771
      %v5859 = vmul.f32 %v51, %v5773
      %v5860 = vmul.f32 %v52, %v5775
      %v5861 = vmul.f32 %v53, %v5777
      %v5862 = vmul.f32 %v54, %v5779
      %v5863 = vmul.f32 %v55, %v5781
      %v5864 = vmul.f32 %v56, %v5783
      %v5865 = vmul.f32 %v57, %v5785
      %v5866 = vmul.f32 %v58, %v5787
      %v5867 = vmul.f32 %v59, %v5789
      %v5868 = vmul.f32 %v60, %v5791
      %v5869 = vmul.f32 %v61, %v5793
      %v5870 = vmul.f32 %v62, %v5795
      %v5871 = vmul.f32 %v63, %v5797
      %v5872 = vmul.f32 %v64, %v5799
      %v5873 = vmul.f32 %v65, %v5801
      %v5874 = vmul.f32 %v66, %v5803
      %v5875 = vmul.f32 %v67, %v5805
      %v5876 = vmul.f32 %v68, %v5807
      %v5877 = vmul.f32 %v69, %v5809
      %v5878 = vmul.f32 %v70, %v5811
      %v5879 = vmul.f32 %v71, %v5813
      %v5880 = vmul.f32 %v72, %v5815
      %v5881 = vmul.f32 %v73, %v5817
      %5883 = vset.pattern.permute.xlu0 1
      %5884 = vperm.xlu0 %5883, %v5850
      %v5885 = vpop.permute.xlu0 %5884
      %5888 = vset.pattern.permute.xlu0 1
      %5889 = vperm.xlu0 %5888, %v5851
      %v5890 = vpop.permute.xlu0 %5889
      %5893 = vset.pattern.permute.xlu0 1
      %5894 = vperm.xlu0 %5893, %v5852
      %v5895 = vpop.permute.xlu0 %5894
      %5898 = vset.pattern.permute.xlu0 1
      %5899 = vperm.xlu0 %5898, %v5853
      %v5900 = vpop.permute.xlu0 %5899
      %5903 = vset.pattern.permute.xlu0 1
      %5904 = vperm.xlu0 %5903, %v5854
      %v5905 = vpop.permute.xlu0 %5904
      %5908 = vset.pattern.permute.xlu0 1
      %5909 = vperm.xlu0 %5908, %v5855
      %v5910 = vpop.permute.xlu0 %5909
      %5913 = vset.pattern.permute.xlu0 1
      %5914 = vperm.xlu0 %5913, %v5856
      %v5915 = vpop.permute.xlu0 %5914
      %5918 = vset.pattern.permute.xlu0 1
      %5919 = vperm.xlu0 %5918, %v5857
      %v5920 = vpop.permute.xlu0 %5919
      %5923 = vset.pattern.permute.xlu0 1
      %5924 = vperm.xlu0 %5923, %v5858
      %v5925 = vpop.permute.xlu0 %5924
      %5928 = vset.pattern.permute.xlu0 1
      %5929 = vperm.xlu0 %5928, %v5859
      %v5930 = vpop.permute.xlu0 %5929
      %5933 = vset.pattern.permute.xlu0 1
      %5934 = vperm.xlu0 %5933, %v5860
      %v5935 = vpop.permute.xlu0 %5934
      %5938 = vset.pattern.permute.xlu0 1
      %5939 = vperm.xlu0 %5938, %v5861
      %v5940 = vpop.permute.xlu0 %5939
      %5943 = vset.pattern.permute.xlu0 1
      %5944 = vperm.xlu0 %5943, %v5862
      %v5945 = vpop.permute.xlu0 %5944
      %5948 = vset.pattern.permute.xlu0 1
      %5949 = vperm.xlu0 %5948, %v5863
      %v5950 = vpop.permute.xlu0 %5949
      %5953 = vset.pattern.permute.xlu0 1
      %5954 = vperm.xlu0 %5953, %v5864
      %v5955 = vpop.permute.xlu0 %5954
      %5958 = vset.pattern.permute.xlu0 1
      %5959 = vperm.xlu0 %5958, %v5865
      %v5960 = vpop.permute.xlu0 %5959
      %5963 = vset.pattern.permute.xlu0 1
      %5964 = vperm.xlu0 %5963, %v5866
      %v5965 = vpop.permute.xlu0 %5964
      %5968 = vset.pattern.permute.xlu0 1
      %5969 = vperm.xlu0 %5968, %v5867
      %v5970 = vpop.permute.xlu0 %5969
      %5973 = vset.pattern.permute.xlu0 1
      %5974 = vperm.xlu0 %5973, %v5868
      %v5975 = vpop.permute.xlu0 %5974
      %5978 = vset.pattern.permute.xlu0 1
      %5979 = vperm.xlu0 %5978, %v5869
      %v5980 = vpop.permute.xlu0 %5979
      %5983 = vset.pattern.permute.xlu0 1
      %5984 = vperm.xlu0 %5983, %v5870
      %v5985 = vpop.permute.xlu0 %5984
      %5988 = vset.pattern.permute.xlu0 1
      %5989 = vperm.xlu0 %5988, %v5871
      %v5990 = vpop.permute.xlu0 %5989
      %5993 = vset.pattern.permute.xlu0 1
      %5994 = vperm.xlu0 %5993, %v5872
      %v5995 = vpop.permute.xlu0 %5994
      %5998 = vset.pattern.permute.xlu0 1
      %5999 = vperm.xlu0 %5998, %v5873
      %v6000 = vpop.permute.xlu0 %5999
      %6003 = vset.pattern.permute.xlu0 1
      %6004 = vperm.xlu0 %6003, %v5874
      %v6005 = vpop.permute.xlu0 %6004
      %6008 = vset.pattern.permute.xlu0 1
      %6009 = vperm.xlu0 %6008, %v5875
      %v6010 = vpop.permute.xlu0 %6009
      %6013 = vset.pattern.permute.xlu0 1
      %6014 = vperm.xlu0 %6013, %v5876
      %v6015 = vpop.permute.xlu0 %6014
      %6018 = vset.pattern.permute.xlu0 1
      %6019 = vperm.xlu0 %6018, %v5877
      %v6020 = vpop.permute.xlu0 %6019
      %6023 = vset.pattern.permute.xlu0 1
      %6024 = vperm.xlu0 %6023, %v5878
      %v6025 = vpop.permute.xlu0 %6024
      %6028 = vset.pattern.permute.xlu0 1
      %6029 = vperm.xlu0 %6028, %v5879
      %v6030 = vpop.permute.xlu0 %6029
      %6033 = vset.pattern.permute.xlu0 1
      %6034 = vperm.xlu0 %6033, %v5880
      %v6035 = vpop.permute.xlu0 %6034
      %6038 = vset.pattern.permute.xlu0 1
      %6039 = vperm.xlu0 %6038, %v5881
      %v6040 = vpop.permute.xlu0 %6039
      %v6042 = vsel %vm5753, %v5885, 0.0
      %v6043 = vsel %vm5753, %v5890, 0.0
      %v6044 = vsel %vm5753, %v5895, 0.0
      %v6045 = vsel %vm5753, %v5900, 0.0
      %v6046 = vsel %vm5753, %v5905, 0.0
      %v6047 = vsel %vm5753, %v5910, 0.0
      %v6048 = vsel %vm5753, %v5915, 0.0
      %v6049 = vsel %vm5753, %v5920, 0.0
      %v6050 = vsel %vm5753, %v5925, 0.0
      %v6051 = vsel %vm5753, %v5930, 0.0
      %v6052 = vsel %vm5753, %v5935, 0.0
      %v6053 = vsel %vm5753, %v5940, 0.0
      %v6054 = vsel %vm5753, %v5945, 0.0
      %v6055 = vsel %vm5753, %v5950, 0.0
      %v6056 = vsel %vm5753, %v5955, 0.0
      %v6057 = vsel %vm5753, %v5960, 0.0
      %v6058 = vsel %vm5753, %v5965, 0.0
      %v6059 = vsel %vm5753, %v5970, 0.0
      %v6060 = vsel %vm5753, %v5975, 0.0
      %v6061 = vsel %vm5753, %v5980, 0.0
      %v6062 = vsel %vm5753, %v5985, 0.0
      %v6063 = vsel %vm5753, %v5990, 0.0
      %v6064 = vsel %vm5753, %v5995, 0.0
      %v6065 = vsel %vm5753, %v6000, 0.0
      %v6066 = vsel %vm5753, %v6005, 0.0
      %v6067 = vsel %vm5753, %v6010, 0.0
      %v6068 = vsel %vm5753, %v6015, 0.0
      %v6069 = vsel %vm5753, %v6020, 0.0
      %v6070 = vsel %vm5753, %v6025, 0.0
      %v6071 = vsel %vm5753, %v6030, 0.0
      %v6072 = vsel %vm5753, %v6035, 0.0
      %v6073 = vsel %vm5753, %v6040, 0.0
      %v6074 = vadd.f32 %v5721, %v6042
      %v6075 = vadd.f32 %v5722, %v6043
      %v6076 = vadd.f32 %v5723, %v6044
      %v6077 = vadd.f32 %v5724, %v6045
      %v6078 = vadd.f32 %v5725, %v6046
      %v6079 = vadd.f32 %v5726, %v6047
      %v6080 = vadd.f32 %v5727, %v6048
      %v6081 = vadd.f32 %v5728, %v6049
      %v6082 = vadd.f32 %v5729, %v6050
      %v6083 = vadd.f32 %v5730, %v6051
      %v6084 = vadd.f32 %v5731, %v6052
      %v6085 = vadd.f32 %v5732, %v6053
      %v6086 = vadd.f32 %v5733, %v6054
      %v6087 = vadd.f32 %v5734, %v6055
      %v6088 = vadd.f32 %v5735, %v6056
      %v6089 = vadd.f32 %v5736, %v6057
      %v6090 = vadd.f32 %v5737, %v6058
      %v6091 = vadd.f32 %v5738, %v6059
      %v6092 = vadd.f32 %v5739, %v6060
      %v6093 = vadd.f32 %v5740, %v6061
      %v6094 = vadd.f32 %v5741, %v6062
      %v6095 = vadd.f32 %v5742, %v6063
      %v6096 = vadd.f32 %v5743, %v6064
      %v6097 = vadd.f32 %v5744, %v6065
      %v6098 = vadd.f32 %v5745, %v6066
      %v6099 = vadd.f32 %v5746, %v6067
      %v6100 = vadd.f32 %v5747, %v6068
      %v6101 = vadd.f32 %v5748, %v6069
      %v6102 = vadd.f32 %v5749, %v6070
      %v6103 = vadd.f32 %v5750, %v6071
      %v6104 = vadd.f32 %v5751, %v6072
      %v6105 = vadd.f32 %v5752, %v6073
      %vm6106 = vcmp.eq.s32.totalorder %v2059, 2
      %6108 = vset.pattern.permute.xlu0 3
      %6109 = vperm.xlu0 %6108, %v5240
      %v6110 = vpop.permute.xlu0 %6109
      %6113 = vset.pattern.permute.xlu0 3
      %6114 = vperm.xlu0 %6113, %v5241
      %v6115 = vpop.permute.xlu0 %6114
      %6118 = vset.pattern.permute.xlu0 3
      %6119 = vperm.xlu0 %6118, %v5242
      %v6120 = vpop.permute.xlu0 %6119
      %6123 = vset.pattern.permute.xlu0 3
      %6124 = vperm.xlu0 %6123, %v5243
      %v6125 = vpop.permute.xlu0 %6124
      %6128 = vset.pattern.permute.xlu0 3
      %6129 = vperm.xlu0 %6128, %v5244
      %v6130 = vpop.permute.xlu0 %6129
      %6133 = vset.pattern.permute.xlu0 3
      %6134 = vperm.xlu0 %6133, %v5245
      %v6135 = vpop.permute.xlu0 %6134
      %6138 = vset.pattern.permute.xlu0 3
      %6139 = vperm.xlu0 %6138, %v5246
      %v6140 = vpop.permute.xlu0 %6139
      %6143 = vset.pattern.permute.xlu0 3
      %6144 = vperm.xlu0 %6143, %v5247
      %v6145 = vpop.permute.xlu0 %6144
      %6148 = vset.pattern.permute.xlu0 3
      %6149 = vperm.xlu0 %6148, %v5248
      %v6150 = vpop.permute.xlu0 %6149
      %6153 = vset.pattern.permute.xlu0 3
      %6154 = vperm.xlu0 %6153, %v5249
      %v6155 = vpop.permute.xlu0 %6154
      %6158 = vset.pattern.permute.xlu0 3
      %6159 = vperm.xlu0 %6158, %v5250
      %v6160 = vpop.permute.xlu0 %6159
      %6163 = vset.pattern.permute.xlu0 3
      %6164 = vperm.xlu0 %6163, %v5251
      %v6165 = vpop.permute.xlu0 %6164
      %6168 = vset.pattern.permute.xlu0 3
      %6169 = vperm.xlu0 %6168, %v5252
      %v6170 = vpop.permute.xlu0 %6169
      %6173 = vset.pattern.permute.xlu0 3
      %6174 = vperm.xlu0 %6173, %v5253
      %v6175 = vpop.permute.xlu0 %6174
      %6178 = vset.pattern.permute.xlu0 3
      %6179 = vperm.xlu0 %6178, %v5254
      %v6180 = vpop.permute.xlu0 %6179
      %6183 = vset.pattern.permute.xlu0 3
      %6184 = vperm.xlu0 %6183, %v5255
      %v6185 = vpop.permute.xlu0 %6184
      %6188 = vset.pattern.permute.xlu0 3
      %6189 = vperm.xlu0 %6188, %v5256
      %v6190 = vpop.permute.xlu0 %6189
      %6193 = vset.pattern.permute.xlu0 3
      %6194 = vperm.xlu0 %6193, %v5257
      %v6195 = vpop.permute.xlu0 %6194
      %6198 = vset.pattern.permute.xlu0 3
      %6199 = vperm.xlu0 %6198, %v5258
      %v6200 = vpop.permute.xlu0 %6199
      %6203 = vset.pattern.permute.xlu0 3
      %6204 = vperm.xlu0 %6203, %v5259
      %v6205 = vpop.permute.xlu0 %6204
      %6208 = vset.pattern.permute.xlu0 3
      %6209 = vperm.xlu0 %6208, %v5260
      %v6210 = vpop.permute.xlu0 %6209
      %6213 = vset.pattern.permute.xlu0 3
      %6214 = vperm.xlu0 %6213, %v5261
      %v6215 = vpop.permute.xlu0 %6214
      %6218 = vset.pattern.permute.xlu0 3
      %6219 = vperm.xlu0 %6218, %v5262
      %v6220 = vpop.permute.xlu0 %6219
      %6223 = vset.pattern.permute.xlu0 3
      %6224 = vperm.xlu0 %6223, %v5263
      %v6225 = vpop.permute.xlu0 %6224
      %6228 = vset.pattern.permute.xlu0 3
      %6229 = vperm.xlu0 %6228, %v5264
      %v6230 = vpop.permute.xlu0 %6229
      %6233 = vset.pattern.permute.xlu0 3
      %6234 = vperm.xlu0 %6233, %v5265
      %v6235 = vpop.permute.xlu0 %6234
      %6238 = vset.pattern.permute.xlu0 3
      %6239 = vperm.xlu0 %6238, %v5266
      %v6240 = vpop.permute.xlu0 %6239
      %6243 = vset.pattern.permute.xlu0 3
      %6244 = vperm.xlu0 %6243, %v5267
      %v6245 = vpop.permute.xlu0 %6244
      %6248 = vset.pattern.permute.xlu0 3
      %6249 = vperm.xlu0 %6248, %v5268
      %v6250 = vpop.permute.xlu0 %6249
      %6253 = vset.pattern.permute.xlu0 3
      %6254 = vperm.xlu0 %6253, %v5269
      %v6255 = vpop.permute.xlu0 %6254
      %6258 = vset.pattern.permute.xlu0 3
      %6259 = vperm.xlu0 %6258, %v5270
      %v6260 = vpop.permute.xlu0 %6259
      %6263 = vset.pattern.permute.xlu0 3
      %6264 = vperm.xlu0 %6263, %v5271
      %v6265 = vpop.permute.xlu0 %6264
      %v6267 = vsel %vm6106, %v6110, 0.0
      %v6268 = vsel %vm6106, %v6115, 0.0
      %v6269 = vsel %vm6106, %v6120, 0.0
      %v6270 = vsel %vm6106, %v6125, 0.0
      %v6271 = vsel %vm6106, %v6130, 0.0
      %v6272 = vsel %vm6106, %v6135, 0.0
      %v6273 = vsel %vm6106, %v6140, 0.0
      %v6274 = vsel %vm6106, %v6145, 0.0
      %v6275 = vsel %vm6106, %v6150, 0.0
      %v6276 = vsel %vm6106, %v6155, 0.0
      %v6277 = vsel %vm6106, %v6160, 0.0
      %v6278 = vsel %vm6106, %v6165, 0.0
      %v6279 = vsel %vm6106, %v6170, 0.0
      %v6280 = vsel %vm6106, %v6175, 0.0
      %v6281 = vsel %vm6106, %v6180, 0.0
      %v6282 = vsel %vm6106, %v6185, 0.0
      %v6283 = vsel %vm6106, %v6190, 0.0
      %v6284 = vsel %vm6106, %v6195, 0.0
      %v6285 = vsel %vm6106, %v6200, 0.0
      %v6286 = vsel %vm6106, %v6205, 0.0
      %v6287 = vsel %vm6106, %v6210, 0.0
      %v6288 = vsel %vm6106, %v6215, 0.0
      %v6289 = vsel %vm6106, %v6220, 0.0
      %v6290 = vsel %vm6106, %v6225, 0.0
      %v6291 = vsel %vm6106, %v6230, 0.0
      %v6292 = vsel %vm6106, %v6235, 0.0
      %v6293 = vsel %vm6106, %v6240, 0.0
      %v6294 = vsel %vm6106, %v6245, 0.0
      %v6295 = vsel %vm6106, %v6250, 0.0
      %v6296 = vsel %vm6106, %v6255, 0.0
      %v6297 = vsel %vm6106, %v6260, 0.0
      %v6298 = vsel %vm6106, %v6265, 0.0
      %v6299 = vadd.f32 %v6074, %v6267
      %v6300 = vadd.f32 %v6075, %v6268
      %v6301 = vadd.f32 %v6076, %v6269
      %v6302 = vadd.f32 %v6077, %v6270
      %v6303 = vadd.f32 %v6078, %v6271
      %v6304 = vadd.f32 %v6079, %v6272
      %v6305 = vadd.f32 %v6080, %v6273
      %v6306 = vadd.f32 %v6081, %v6274
      %v6307 = vadd.f32 %v6082, %v6275
      %v6308 = vadd.f32 %v6083, %v6276
      %v6309 = vadd.f32 %v6084, %v6277
      %v6310 = vadd.f32 %v6085, %v6278
      %v6311 = vadd.f32 %v6086, %v6279
      %v6312 = vadd.f32 %v6087, %v6280
      %v6313 = vadd.f32 %v6088, %v6281
      %v6314 = vadd.f32 %v6089, %v6282
      %v6315 = vadd.f32 %v6090, %v6283
      %v6316 = vadd.f32 %v6091, %v6284
      %v6317 = vadd.f32 %v6092, %v6285
      %v6318 = vadd.f32 %v6093, %v6286
      %v6319 = vadd.f32 %v6094, %v6287
      %v6320 = vadd.f32 %v6095, %v6288
      %v6321 = vadd.f32 %v6096, %v6289
      %v6322 = vadd.f32 %v6097, %v6290
      %v6323 = vadd.f32 %v6098, %v6291
      %v6324 = vadd.f32 %v6099, %v6292
      %v6325 = vadd.f32 %v6100, %v6293
      %v6326 = vadd.f32 %v6101, %v6294
      %v6327 = vadd.f32 %v6102, %v6295
      %v6328 = vadd.f32 %v6103, %v6296
      %v6329 = vadd.f32 %v6104, %v6297
      %v6330 = vadd.f32 %v6105, %v6298
      %vm6331 = vcmp.eq.s32.totalorder %v2059, 3
      %6332 = vset.pattern.permute.xlu0 1
      %6333 = vperm.xlu0 %6332, %v42
      %v6334 = vpop.permute.xlu0 %6333
      %6336 = vset.pattern.permute.xlu0 1
      %6337 = vperm.xlu0 %6336, %v43
      %v6338 = vpop.permute.xlu0 %6337
      %6340 = vset.pattern.permute.xlu0 1
      %6341 = vperm.xlu0 %6340, %v44
      %v6342 = vpop.permute.xlu0 %6341
      %6344 = vset.pattern.permute.xlu0 1
      %6345 = vperm.xlu0 %6344, %v45
      %v6346 = vpop.permute.xlu0 %6345
      %6348 = vset.pattern.permute.xlu0 1
      %6349 = vperm.xlu0 %6348, %v46
      %v6350 = vpop.permute.xlu0 %6349
      %6352 = vset.pattern.permute.xlu0 1
      %6353 = vperm.xlu0 %6352, %v47
      %v6354 = vpop.permute.xlu0 %6353
      %6356 = vset.pattern.permute.xlu0 1
      %6357 = vperm.xlu0 %6356, %v48
      %v6358 = vpop.permute.xlu0 %6357
      %6360 = vset.pattern.permute.xlu0 1
      %6361 = vperm.xlu0 %6360, %v49
      %v6362 = vpop.permute.xlu0 %6361
      %6364 = vset.pattern.permute.xlu0 1
      %6365 = vperm.xlu0 %6364, %v50
      %v6366 = vpop.permute.xlu0 %6365
      %6368 = vset.pattern.permute.xlu0 1
      %6369 = vperm.xlu0 %6368, %v51
      %v6370 = vpop.permute.xlu0 %6369
      %6372 = vset.pattern.permute.xlu0 1
      %6373 = vperm.xlu0 %6372, %v52
      %v6374 = vpop.permute.xlu0 %6373
      %6376 = vset.pattern.permute.xlu0 1
      %6377 = vperm.xlu0 %6376, %v53
      %v6378 = vpop.permute.xlu0 %6377
      %6380 = vset.pattern.permute.xlu0 1
      %6381 = vperm.xlu0 %6380, %v54
      %v6382 = vpop.permute.xlu0 %6381
      %6384 = vset.pattern.permute.xlu0 1
      %6385 = vperm.xlu0 %6384, %v55
      %v6386 = vpop.permute.xlu0 %6385
      %6388 = vset.pattern.permute.xlu0 1
      %6389 = vperm.xlu0 %6388, %v56
      %v6390 = vpop.permute.xlu0 %6389
      %6392 = vset.pattern.permute.xlu0 1
      %6393 = vperm.xlu0 %6392, %v57
      %v6394 = vpop.permute.xlu0 %6393
      %6396 = vset.pattern.permute.xlu0 1
      %6397 = vperm.xlu0 %6396, %v58
      %v6398 = vpop.permute.xlu0 %6397
      %6400 = vset.pattern.permute.xlu0 1
      %6401 = vperm.xlu0 %6400, %v59
      %v6402 = vpop.permute.xlu0 %6401
      %6404 = vset.pattern.permute.xlu0 1
      %6405 = vperm.xlu0 %6404, %v60
      %v6406 = vpop.permute.xlu0 %6405
      %6408 = vset.pattern.permute.xlu0 1
      %6409 = vperm.xlu0 %6408, %v61
      %v6410 = vpop.permute.xlu0 %6409
      %6412 = vset.pattern.permute.xlu0 1
      %6413 = vperm.xlu0 %6412, %v62
      %v6414 = vpop.permute.xlu0 %6413
      %6416 = vset.pattern.permute.xlu0 1
      %6417 = vperm.xlu0 %6416, %v63
      %v6418 = vpop.permute.xlu0 %6417
      %6420 = vset.pattern.permute.xlu0 1
      %6421 = vperm.xlu0 %6420, %v64
      %v6422 = vpop.permute.xlu0 %6421
      %6424 = vset.pattern.permute.xlu0 1
      %6425 = vperm.xlu0 %6424, %v65
      %v6426 = vpop.permute.xlu0 %6425
      %6428 = vset.pattern.permute.xlu0 1
      %6429 = vperm.xlu0 %6428, %v66
      %v6430 = vpop.permute.xlu0 %6429
      %6432 = vset.pattern.permute.xlu0 1
      %6433 = vperm.xlu0 %6432, %v67
      %v6434 = vpop.permute.xlu0 %6433
      %6436 = vset.pattern.permute.xlu0 1
      %6437 = vperm.xlu0 %6436, %v68
      %v6438 = vpop.permute.xlu0 %6437
      %6440 = vset.pattern.permute.xlu0 1
      %6441 = vperm.xlu0 %6440, %v69
      %v6442 = vpop.permute.xlu0 %6441
      %6444 = vset.pattern.permute.xlu0 1
      %6445 = vperm.xlu0 %6444, %v70
      %v6446 = vpop.permute.xlu0 %6445
      %6448 = vset.pattern.permute.xlu0 1
      %6449 = vperm.xlu0 %6448, %v71
      %v6450 = vpop.permute.xlu0 %6449
      %6452 = vset.pattern.permute.xlu0 1
      %6453 = vperm.xlu0 %6452, %v72
      %v6454 = vpop.permute.xlu0 %6453
      %6456 = vset.pattern.permute.xlu0 1
      %6457 = vperm.xlu0 %6456, %v73
      %v6458 = vpop.permute.xlu0 %6457
      %v6460 = vsel %vm6331, %v6334, 0.0
      %v6461 = vsel %vm6331, %v6338, 0.0
      %v6462 = vsel %vm6331, %v6342, 0.0
      %v6463 = vsel %vm6331, %v6346, 0.0
      %v6464 = vsel %vm6331, %v6350, 0.0
      %v6465 = vsel %vm6331, %v6354, 0.0
      %v6466 = vsel %vm6331, %v6358, 0.0
      %v6467 = vsel %vm6331, %v6362, 0.0
      %v6468 = vsel %vm6331, %v6366, 0.0
      %v6469 = vsel %vm6331, %v6370, 0.0
      %v6470 = vsel %vm6331, %v6374, 0.0
      %v6471 = vsel %vm6331, %v6378, 0.0
      %v6472 = vsel %vm6331, %v6382, 0.0
      %v6473 = vsel %vm6331, %v6386, 0.0
      %v6474 = vsel %vm6331, %v6390, 0.0
      %v6475 = vsel %vm6331, %v6394, 0.0
      %v6476 = vsel %vm6331, %v6398, 0.0
      %v6477 = vsel %vm6331, %v6402, 0.0
      %v6478 = vsel %vm6331, %v6406, 0.0
      %v6479 = vsel %vm6331, %v6410, 0.0
      %v6480 = vsel %vm6331, %v6414, 0.0
      %v6481 = vsel %vm6331, %v6418, 0.0
      %v6482 = vsel %vm6331, %v6422, 0.0
      %v6483 = vsel %vm6331, %v6426, 0.0
      %v6484 = vsel %vm6331, %v6430, 0.0
      %v6485 = vsel %vm6331, %v6434, 0.0
      %v6486 = vsel %vm6331, %v6438, 0.0
      %v6487 = vsel %vm6331, %v6442, 0.0
      %v6488 = vsel %vm6331, %v6446, 0.0
      %v6489 = vsel %vm6331, %v6450, 0.0
      %v6490 = vsel %vm6331, %v6454, 0.0
      %v6491 = vsel %vm6331, %v6458, 0.0
      %v6492 = vadd.f32 %v6299, %v6460
      %v6493 = vadd.f32 %v6300, %v6461
      %v6494 = vadd.f32 %v6301, %v6462
      %v6495 = vadd.f32 %v6302, %v6463
      %v6496 = vadd.f32 %v6303, %v6464
      %v6497 = vadd.f32 %v6304, %v6465
      %v6498 = vadd.f32 %v6305, %v6466
      %v6499 = vadd.f32 %v6306, %v6467
      %v6500 = vadd.f32 %v6307, %v6468
      %v6501 = vadd.f32 %v6308, %v6469
      %v6502 = vadd.f32 %v6309, %v6470
      %v6503 = vadd.f32 %v6310, %v6471
      %v6504 = vadd.f32 %v6311, %v6472
      %v6505 = vadd.f32 %v6312, %v6473
      %v6506 = vadd.f32 %v6313, %v6474
      %v6507 = vadd.f32 %v6314, %v6475
      %v6508 = vadd.f32 %v6315, %v6476
      %v6509 = vadd.f32 %v6316, %v6477
      %v6510 = vadd.f32 %v6317, %v6478
      %v6511 = vadd.f32 %v6318, %v6479
      %v6512 = vadd.f32 %v6319, %v6480
      %v6513 = vadd.f32 %v6320, %v6481
      %v6514 = vadd.f32 %v6321, %v6482
      %v6515 = vadd.f32 %v6322, %v6483
      %v6516 = vadd.f32 %v6323, %v6484
      %v6517 = vadd.f32 %v6324, %v6485
      %v6518 = vadd.f32 %v6325, %v6486
      %v6519 = vadd.f32 %v6326, %v6487
      %v6520 = vadd.f32 %v6327, %v6488
      %v6521 = vadd.f32 %v6328, %v6489
      %v6522 = vadd.f32 %v6329, %v6490
      %v6523 = vadd.f32 %v6330, %v6491
      %vm6524 = vcmp.eq.s32.totalorder %v2059, 4
      %6525 = vset.pattern.permute.xlu0 3
      %6526 = vperm.xlu0 %6525, %v42
      %v6527 = vpop.permute.xlu0 %6526
      %6529 = vset.pattern.permute.xlu0 3
      %6530 = vperm.xlu0 %6529, %v43
      %v6531 = vpop.permute.xlu0 %6530
      %6533 = vset.pattern.permute.xlu0 3
      %6534 = vperm.xlu0 %6533, %v44
      %v6535 = vpop.permute.xlu0 %6534
      %6537 = vset.pattern.permute.xlu0 3
      %6538 = vperm.xlu0 %6537, %v45
      %v6539 = vpop.permute.xlu0 %6538
      %6541 = vset.pattern.permute.xlu0 3
      %6542 = vperm.xlu0 %6541, %v46
      %v6543 = vpop.permute.xlu0 %6542
      %6545 = vset.pattern.permute.xlu0 3
      %6546 = vperm.xlu0 %6545, %v47
      %v6547 = vpop.permute.xlu0 %6546
      %6549 = vset.pattern.permute.xlu0 3
      %6550 = vperm.xlu0 %6549, %v48
      %v6551 = vpop.permute.xlu0 %6550
      %6553 = vset.pattern.permute.xlu0 3
      %6554 = vperm.xlu0 %6553, %v49
      %v6555 = vpop.permute.xlu0 %6554
      %6557 = vset.pattern.permute.xlu0 3
      %6558 = vperm.xlu0 %6557, %v50
      %v6559 = vpop.permute.xlu0 %6558
      %6561 = vset.pattern.permute.xlu0 3
      %6562 = vperm.xlu0 %6561, %v51
      %v6563 = vpop.permute.xlu0 %6562
      %6565 = vset.pattern.permute.xlu0 3
      %6566 = vperm.xlu0 %6565, %v52
      %v6567 = vpop.permute.xlu0 %6566
      %6569 = vset.pattern.permute.xlu0 3
      %6570 = vperm.xlu0 %6569, %v53
      %v6571 = vpop.permute.xlu0 %6570
      %6573 = vset.pattern.permute.xlu0 3
      %6574 = vperm.xlu0 %6573, %v54
      %v6575 = vpop.permute.xlu0 %6574
      %6577 = vset.pattern.permute.xlu0 3
      %6578 = vperm.xlu0 %6577, %v55
      %v6579 = vpop.permute.xlu0 %6578
      %6581 = vset.pattern.permute.xlu0 3
      %6582 = vperm.xlu0 %6581, %v56
      %v6583 = vpop.permute.xlu0 %6582
      %6585 = vset.pattern.permute.xlu0 3
      %6586 = vperm.xlu0 %6585, %v57
      %v6587 = vpop.permute.xlu0 %6586
      %6589 = vset.pattern.permute.xlu0 3
      %6590 = vperm.xlu0 %6589, %v58
      %v6591 = vpop.permute.xlu0 %6590
      %6593 = vset.pattern.permute.xlu0 3
      %6594 = vperm.xlu0 %6593, %v59
      %v6595 = vpop.permute.xlu0 %6594
      %6597 = vset.pattern.permute.xlu0 3
      %6598 = vperm.xlu0 %6597, %v60
      %v6599 = vpop.permute.xlu0 %6598
      %6601 = vset.pattern.permute.xlu0 3
      %6602 = vperm.xlu0 %6601, %v61
      %v6603 = vpop.permute.xlu0 %6602
      %6605 = vset.pattern.permute.xlu0 3
      %6606 = vperm.xlu0 %6605, %v62
      %v6607 = vpop.permute.xlu0 %6606
      %6609 = vset.pattern.permute.xlu0 3
      %6610 = vperm.xlu0 %6609, %v63
      %v6611 = vpop.permute.xlu0 %6610
      %6613 = vset.pattern.permute.xlu0 3
      %6614 = vperm.xlu0 %6613, %v64
      %v6615 = vpop.permute.xlu0 %6614
      %6617 = vset.pattern.permute.xlu0 3
      %6618 = vperm.xlu0 %6617, %v65
      %v6619 = vpop.permute.xlu0 %6618
      %6621 = vset.pattern.permute.xlu0 3
      %6622 = vperm.xlu0 %6621, %v66
      %v6623 = vpop.permute.xlu0 %6622
      %6625 = vset.pattern.permute.xlu0 3
      %6626 = vperm.xlu0 %6625, %v67
      %v6627 = vpop.permute.xlu0 %6626
      %6629 = vset.pattern.permute.xlu0 3
      %6630 = vperm.xlu0 %6629, %v68
      %v6631 = vpop.permute.xlu0 %6630
      %6633 = vset.pattern.permute.xlu0 3
      %6634 = vperm.xlu0 %6633, %v69
      %v6635 = vpop.permute.xlu0 %6634
      %6637 = vset.pattern.permute.xlu0 3
      %6638 = vperm.xlu0 %6637, %v70
      %v6639 = vpop.permute.xlu0 %6638
      %6641 = vset.pattern.permute.xlu0 3
      %6642 = vperm.xlu0 %6641, %v71
      %v6643 = vpop.permute.xlu0 %6642
      %6645 = vset.pattern.permute.xlu0 3
      %6646 = vperm.xlu0 %6645, %v72
      %v6647 = vpop.permute.xlu0 %6646
      %6649 = vset.pattern.permute.xlu0 3
      %6650 = vperm.xlu0 %6649, %v73
      %v6651 = vpop.permute.xlu0 %6650
      %v6653 = vsel %vm6524, %v6527, 0.0
      %v6654 = vsel %vm6524, %v6531, 0.0
      %v6655 = vsel %vm6524, %v6535, 0.0
      %v6656 = vsel %vm6524, %v6539, 0.0
      %v6657 = vsel %vm6524, %v6543, 0.0
      %v6658 = vsel %vm6524, %v6547, 0.0
      %v6659 = vsel %vm6524, %v6551, 0.0
      %v6660 = vsel %vm6524, %v6555, 0.0
      %v6661 = vsel %vm6524, %v6559, 0.0
      %v6662 = vsel %vm6524, %v6563, 0.0
      %v6663 = vsel %vm6524, %v6567, 0.0
      %v6664 = vsel %vm6524, %v6571, 0.0
      %v6665 = vsel %vm6524, %v6575, 0.0
      %v6666 = vsel %vm6524, %v6579, 0.0
      %v6667 = vsel %vm6524, %v6583, 0.0
      %v6668 = vsel %vm6524, %v6587, 0.0
      %v6669 = vsel %vm6524, %v6591, 0.0
      %v6670 = vsel %vm6524, %v6595, 0.0
      %v6671 = vsel %vm6524, %v6599, 0.0
      %v6672 = vsel %vm6524, %v6603, 0.0
      %v6673 = vsel %vm6524, %v6607, 0.0
      %v6674 = vsel %vm6524, %v6611, 0.0
      %v6675 = vsel %vm6524, %v6615, 0.0
      %v6676 = vsel %vm6524, %v6619, 0.0
      %v6677 = vsel %vm6524, %v6623, 0.0
      %v6678 = vsel %vm6524, %v6627, 0.0
      %v6679 = vsel %vm6524, %v6631, 0.0
      %v6680 = vsel %vm6524, %v6635, 0.0
      %v6681 = vsel %vm6524, %v6639, 0.0
      %v6682 = vsel %vm6524, %v6643, 0.0
      %v6683 = vsel %vm6524, %v6647, 0.0
      %v6684 = vsel %vm6524, %v6651, 0.0
      %v6685 = vadd.f32 %v6492, %v6653
      %v6686 = vadd.f32 %v6493, %v6654
      %v6687 = vadd.f32 %v6494, %v6655
      %v6688 = vadd.f32 %v6495, %v6656
      %v6689 = vadd.f32 %v6496, %v6657
      %v6690 = vadd.f32 %v6497, %v6658
      %v6691 = vadd.f32 %v6498, %v6659
      %v6692 = vadd.f32 %v6499, %v6660
      %v6693 = vadd.f32 %v6500, %v6661
      %v6694 = vadd.f32 %v6501, %v6662
      %v6695 = vadd.f32 %v6502, %v6663
      %v6696 = vadd.f32 %v6503, %v6664
      %v6697 = vadd.f32 %v6504, %v6665
      %v6698 = vadd.f32 %v6505, %v6666
      %v6699 = vadd.f32 %v6506, %v6667
      %v6700 = vadd.f32 %v6507, %v6668
      %v6701 = vadd.f32 %v6508, %v6669
      %v6702 = vadd.f32 %v6509, %v6670
      %v6703 = vadd.f32 %v6510, %v6671
      %v6704 = vadd.f32 %v6511, %v6672
      %v6705 = vadd.f32 %v6512, %v6673
      %v6706 = vadd.f32 %v6513, %v6674
      %v6707 = vadd.f32 %v6514, %v6675
      %v6708 = vadd.f32 %v6515, %v6676
      %v6709 = vadd.f32 %v6516, %v6677
      %v6710 = vadd.f32 %v6517, %v6678
      %v6711 = vadd.f32 %v6518, %v6679
      %v6712 = vadd.f32 %v6519, %v6680
      %v6713 = vadd.f32 %v6520, %v6681
      %v6714 = vadd.f32 %v6521, %v6682
      %v6715 = vadd.f32 %v6522, %v6683
      %v6716 = vadd.f32 %v6523, %v6684
      %v6717 = vadd.f32 %v6685, %v6686
      %v6718 = vadd.f32 %v6717, %v6687
      %v6719 = vadd.f32 %v6718, %v6688
      %v6720 = vadd.f32 %v6719, %v6689
      %v6721 = vadd.f32 %v6720, %v6690
      %v6722 = vadd.f32 %v6721, %v6691
      %v6723 = vadd.f32 %v6722, %v6692
      %v6724 = vadd.f32 %v6723, %v6693
      %v6725 = vadd.f32 %v6724, %v6694
      %v6726 = vadd.f32 %v6725, %v6695
      %v6727 = vadd.f32 %v6726, %v6696
      %v6728 = vadd.f32 %v6727, %v6697
      %v6729 = vadd.f32 %v6728, %v6698
      %v6730 = vadd.f32 %v6729, %v6699
      %v6731 = vadd.f32 %v6730, %v6700
      %v6732 = vadd.f32 %v6731, %v6701
      %v6733 = vadd.f32 %v6732, %v6702
      %v6734 = vadd.f32 %v6733, %v6703
      %v6735 = vadd.f32 %v6734, %v6704
      %v6736 = vadd.f32 %v6735, %v6705
      %v6737 = vadd.f32 %v6736, %v6706
      %v6738 = vadd.f32 %v6737, %v6707
      %v6739 = vadd.f32 %v6738, %v6708
      %v6740 = vadd.f32 %v6739, %v6709
      %v6741 = vadd.f32 %v6740, %v6710
      %v6742 = vadd.f32 %v6741, %v6711
      %v6743 = vadd.f32 %v6742, %v6712
      %v6744 = vadd.f32 %v6743, %v6713
      %v6745 = vadd.f32 %v6744, %v6714
      %v6746 = vadd.f32 %v6745, %v6715
      %v6747 = vadd.f32 %v6746, %v6716
      %v6748 = vrot.slane %v6747, 4
      %v6749 = vadd.f32 %v6747, %v6748
      %v6750 = vrot.slane %v6749, 2
      %v6751 = vadd.f32 %v6749, %v6750
      %v6752 = vrot.slane %v6751, 1
      %v6753 = vadd.f32 %v6751, %v6752
      %6754 = vst [vmem:[#allocation8] sm:$0x1] %v6753
    $region37: #{tpu_custom_call.1} parent=1 // pred_fallthru
      _
    // Predicated region
    $region38: #{tpu_custom_call.1} parent=1 // pred_check
      _
    $region39: #{tpu_custom_call.1} parent=1 // pred_check_branch
      %6756 = sbr.rel (0) target = $region41
    $region40: #{tpu_custom_call.1} parent=1 // pred_region
      %s6758 = ssub.s32 4096, 4096
      %6759 = vsyncadd [#allocation6], %s6758
      %s6760 = sshll.u32 [#allocation7], 4
      %s6761 = int_to_ptr.vmem [resolvable:$true] %s6760
      %6766 = dma.vmem_to_hbm [thread:$0]  %s6761, 4096, %s6, [#allocation6], 128, 128, 8
    $region41: #{tpu_custom_call.1} parent=1 // pred_fallthru
      _
    // Predicated region
    $region42: #{tpu_custom_call.1} parent=1 // pred_check
      _
    $region43: #{tpu_custom_call.1} parent=1 // pred_check_branch
      %6768 = sbr.rel (0) target = $region45
    $region44: #{tpu_custom_call.1} parent=1 // pred_region
      %s6770 = ssub.s32 16, 16
      %6771 = vsyncadd [#allocation9], %s6770
      %s6773 = sshll.u32 [#allocation8], 4
      %s6774 = int_to_ptr.vmem [resolvable:$true] %s6773
      %6776 = dma.vmem_to_hbm [thread:$0]  %s6774, 16, %s7, [#allocation9]
    $region45: #{tpu_custom_call.1} parent=1 // pred_fallthru
      _
    // Predicated region
    $region46: #{tpu_custom_call.1} parent=1 // pred_check
      _
    $region47: #{tpu_custom_call.1} parent=1 // pred_check_branch
      %6778 = sbr.rel (0) target = $region49
    $region48: #{tpu_custom_call.1} parent=1 // pred_region
      %6779 = dma.done [#allocation6], 4096
    $region49: #{tpu_custom_call.1} parent=1 // pred_fallthru
      _
    // Predicated region
    $region50: #{tpu_custom_call.1} parent=1 // pred_check
      _
    $region51: #{tpu_custom_call.1} parent=1 // pred_check_branch
      %6781 = sbr.rel (0) target = $region53
    $region52: #{tpu_custom_call.1} parent=1 // pred_region
      %6782 = dma.done [#allocation9], 16
    $region53: #{tpu_custom_call.1} parent=1 // pred_fallthru
      _
    %6783 = vsyncpa [#allocation5], 1
    %6784 = vsyncpa [#allocation6], 1
    %6785 = vsyncpa [#allocation9], 1

</llo_original>
